<compile_context>
chip_gen: v5e
topology: v5e:2x2
jax: 0.10.0
libtpu: 0.0.40
codegen_flags: <defaults>
</compile_context>

<pallas_src>
import functools
import numpy as np

import jax
import jax.numpy as jnp
from jax.experimental import pallas as pl
from jax.experimental.pallas import tpu as pltpu


# ----------------------- static configuration (InitLayer.__init__) ----------------
NUM_TYPES = 4            # num_types
N_BASIS = 8              # n_radial_basis
R_MAX = 5.0              # r_max (float -> r_max_dict is None branch)
POLY_P = 6.0             # PolynomialCutoff_p, cutoff_type='polynomial'
AVG_NUM_NEIGHBORS = 10.0
MULT = 8                 # env_embed_multiplicity
DEGREES = (0, 1, 2)      # irreps_sh = 1x0e + 1x1o + 1x2e
N_DEG = len(DEGREES)
SH_DIM = sum(2 * l + 1 for l in DEGREES)    # 9
FEAT_DIM = MULT * SH_DIM                    # 72 (= irreps_out.dim)
W_NUMEL = MULT * N_DEG                      # 24 (= _env_weighter.weight_numel)
H1, H2 = 64, 64                             # two_body_latent_channels
LATENT = 64                                 # latent_dim
LN_EPS = 1e-5
NORM_CONST = float(1.0 / np.sqrt(AVG_NUM_NEIGHBORS))

N_NODES = 16
N_EDGES = 64

OUTPAD = 128            # every feature output padded to one full vreg lane width
COL_CUT = LATENT        # cutoff coefficient rides in lane 64 of the latent slab


# ----------------------- shared in-kernel SeperableLayerNorm ----------------------
def _seperable_ln(x, gamma, beta, comp_w, smask):
    """SeperableLayerNorm: normalization='component', std_balance_degrees=True.

    All vectors are 128-lane padded; pad lanes of comp_w / smask / gamma / beta are
    exactly zero, so the normalization over the 72 real components stays exact and
    pad lanes of the output are exactly zero.
    """
    s_mean = jnp.sum(x * smask, axis=-1, keepdims=True) * (1.0 / MULT)
    xc = x - s_mean * smask
    var = jnp.sum(xc * xc * comp_w, axis=-1, keepdims=True)
    inv = jax.lax.rsqrt(var + LN_EPS)
    return xc * inv * gamma + beta


# ----------------------- single fused kernel ---------------------------------------
def init_layer_kernel(ec_ref, en_ref, ecr_ref, r_ref, sh_ref, noh_ref,
                      w1c_ref, w1n_ref, w1b_ref, w2_ref, w3_ref,
                      wexp_ref, gs_ref, pvec_ref,
                      latcut_ref, ef_ref, hf_ref, nf_ref):
    f32 = jnp.float32
    dot = functools.partial(jnp.dot, preferred_element_type=jnp.float32)

    pv = pvec_ref[...]                               # [8, 128] packed per-feature params
    gamma_h = pv[0:1, :]
    beta_h = pv[1:2, :]
    gamma_n = pv[2:3, :]
    beta_n = pv[3:4, :]
    comp_w = pv[4:5, :]
    smask = pv[5:6, :]
    bfreq = pv[6:7, 0:N_BASIS]                       # n*pi/r_max (1/r_max pre-folded)
    e64row = pv[7:8, :]                              # 1.0 at lane COL_CUT, else 0

    # ---- in-kernel one-hot construction from int32 indices (VPU compares) ----------
    ec_col = ec_ref[...]                             # [E, 1] int32 edge_center
    en_col = en_ref[...]                             # [E, 1] int32 edge_neighbor
    ec_row = ecr_ref[...]                            # [1, E] int32 edge_center (row)
    iota_en = jax.lax.broadcasted_iota(jnp.int32, (N_EDGES, N_NODES), 1)
    ohc = (iota_en == ec_col).astype(f32)            # [E, N] one_hot(edge_center)
    ohn = (iota_en == en_col).astype(f32)            # [E, N] one_hot(edge_neighbor)
    iota_ne = jax.lax.broadcasted_iota(jnp.int32, (N_NODES, N_EDGES), 0)
    scat = (iota_ne == ec_row).astype(f32)           # [N, E] scatter matrix

    # ---- BesselBasis: (2/r_max)*sin(n*pi*r/r_max)/r, prefactor folded into w1b ------
    r = r_ref[...]                                   # [E, 1]
    r_inv = pl.reciprocal(jnp.maximum(r, 1e-9), approx=True)   # guarded, EUP slot
    bess = jnp.sin(r * bfreq) * r_inv                # [E, N_BASIS]

    # ---- polynomial cutoff (p = 6) as a multiply chain (VPU only) -------------------
    xr = r * (1.0 / R_MAX)
    xr2 = xr * xr
    xr3 = xr2 * xr
    xr6 = xr3 * xr3
    xr7 = xr6 * xr
    xr8 = xr7 * xr
    p = POLY_P
    cut = (1.0
           - ((p + 1.0) * (p + 2.0) / 2.0) * xr6
           + (p * (p + 2.0)) * xr7
           - (p * (p + 1.0) / 2.0) * xr8)
    cut = cut * (xr < 1.0).astype(f32)               # [E, 1]
    mask = (cut > 0.0).astype(f32)                   # prev_mask (dense form)

    # ---- two_body_latent MLP: cat([oh_c, oh_n, bessel]) -> H1 -> H2 -> LATENT ------
    # oh_c @ w1c == one_hot(edge_center) @ (node_one_hot @ w1c); all K<=16 pushes.
    w1c_node = dot(noh_ref[...], w1c_ref[...])       # [N, H1]
    w1n_node = dot(noh_ref[...], w1n_ref[...])       # [N, H1]
    h = dot(ohc, w1c_node) + dot(ohn, w1n_node) + dot(bess, w1b_ref[...])
    h = jax.nn.silu(h)
    h = jax.nn.silu(dot(h, w2_ref[...]))
    new_lat = dot(h, w3_ref[...])                    # [E, 128], lanes >= LATENT are 0

    # latents = cutoff * new_latents; cutoff folded into lane 64 of the same slab.
    latcut_ref[...] = cut * (new_lat + e64row)       # single full-width store

    # env_embed_mlp + e3nn weight expansion folded into wexp (exact); sh expansion via
    # the zero-padded gs matrix.  FEAT padded to 128 lanes -> full vregs everywhere.
    sh_exp = dot(sh_ref[...], gs_ref[...])           # [E, 128]
    hidden = dot(new_lat, wexp_ref[...]) * sh_exp    # hidden_features (pre-LN)

    # weights_e = cutoff * weights_h  =>  edge_features = cutoff * hidden (exact)
    edge_f = cut * hidden
    ef_ref[...] = edge_f                             # full-width store
    hf_ref[...] = _seperable_ln(hidden, gamma_h, beta_h, comp_w, smask) * mask

    # fused scatter-sum onto nodes + node LayerNorm
    nf = dot(scat, edge_f) * NORM_CONST              # * rsqrt(avg_num_neighbors)
    nf_ref[...] = _seperable_ln(nf, gamma_n, beta_n, comp_w, smask)


# ----------------------- pallas_call wrapper ----------------------------------------
def run_init_layer_kernel(ec_col, en_col, ec_row, r_col, sh, node_oh, params):
    full = lambda shape: pl.BlockSpec(shape, lambda i: (0, 0))
    in_specs = [
        full((N_EDGES, 1)),             # edge_center (column)   int32
        full((N_EDGES, 1)),             # edge_neighbor (column) int32
        full((1, N_EDGES)),             # edge_center (row)      int32
        full((N_EDGES, 1)),             # edge_length
        full((N_EDGES, SH_DIM)),        # edge_sh
        full((N_NODES, NUM_TYPES)),     # node one-hot table
        full((NUM_TYPES, H1)),          # w1c (center one-hot part of first layer)
        full((NUM_TYPES, H1)),          # w1n (neighbor one-hot part of first layer)
        full((N_BASIS, H1)),            # w1b (bessel part, 2/r_max pre-folded)
        full((H1, H2)),                 # w2
        full((H2, OUTPAD)),             # w3 padded to 128 output lanes
        full((OUTPAD, OUTPAD)),         # wexp = wenv @ gw, padded to 128x128
        full((SH_DIM, OUTPAD)),         # gs (sh expansion), padded to 128 lanes
        full((8, 128)),                 # packed LN params + bessel freqs + e64 row
    ]
    out_specs = [
        full((N_EDGES, OUTPAD)),        # latents (0..63) + cutoff (lane 64)
        full((N_EDGES, OUTPAD)),        # edge_features (0..71)
        full((N_EDGES, OUTPAD)),        # hidden_features (0..71)
        full((N_NODES, OUTPAD)),        # node_features (0..71)
    ]
    out_shapes = (
        jax.ShapeDtypeStruct((N_EDGES, OUTPAD), jnp.float32),
        jax.ShapeDtypeStruct((N_EDGES, OUTPAD), jnp.float32),
        jax.ShapeDtypeStruct((N_EDGES, OUTPAD), jnp.float32),
        jax.ShapeDtypeStruct((N_NODES, OUTPAD), jnp.float32),
    )
    fn = pl.pallas_call(
        init_layer_kernel,
        out_shape=out_shapes,
        grid_spec=pltpu.PrefetchScalarGridSpec(
            num_scalar_prefetch=0, grid=(1,),
            in_specs=in_specs, out_specs=out_specs),
        compiler_params=pltpu.CompilerParams(dimension_semantics=("arbitrary",)),
    )
    return fn(ec_col, en_col, ec_row, r_col, sh, node_oh,
              params["w1c"], params["w1n"], params["w1b"], params["w2"],
              params["w3p"], params["wexp"], params["gs"], params["pvec"])


# ----------------------- full InitLayer.forward --------------------------------------
def init_layer_forward(edge_index, atom_type, bond_type, edge_sh, edge_length,
                       node_one_hot, params):
    # (atom_type / bond_type unused: r_max is a scalar and env_sum_normalizations is 0-dim)
    del atom_type, bond_type
    ec = edge_index[0].astype(jnp.int32)
    en = edge_index[1].astype(jnp.int32)

    # only trivial reshapes here; all gathers / one-hots / packing happen in-kernel
    ec_col = ec[:, None]
    en_col = en[:, None]
    ec_row = ec[None, :]
    r_col = edge_length.reshape(N_EDGES, 1).astype(jnp.float32)
    sh = edge_sh.astype(jnp.float32)
    node_oh = node_one_hot.astype(jnp.float32)

    latcut, ef, hf, nf = run_init_layer_kernel(ec_col, en_col, ec_row, r_col,
                                               sh, node_oh, params)

    latents = latcut[:, :LATENT]
    cutoff_coeffs = latcut[:, COL_CUT]
    edge_features = ef[:, :FEAT_DIM]
    hidden_features = hf[:, :FEAT_DIM]
    node_features = nf[:, :FEAT_DIM]

    # TODO(synk): torch's active_edges / compacted rows have a data-dependent length;
    # represented densely here (inactive rows zeroed) + padded index list below.
    active_edges = jnp.nonzero(cutoff_coeffs > 0, size=N_EDGES, fill_value=-1)[0]
    return latents, node_features, edge_features, hidden_features, cutoff_coeffs, active_edges


# ----------------------- deterministic parameter construction ------------------------
def make_params(key):
    ks = jax.random.split(key, 8)

    def unif(k, shape, fan_in):
        # ScalarMLPFunction 'uniform' init folded with its 1/sqrt(fan_in) scaling.
        return (jax.random.uniform(k, shape, jnp.float32, -1.0, 1.0)
                * (1.0 / np.sqrt(float(fan_in))))

    d_in = 2 * NUM_TYPES + N_BASIS
    w1 = np.asarray(unif(ks[0], (d_in, H1), d_in))
    w1c = w1[0:NUM_TYPES]                             # center one-hot part
    w1n = w1[NUM_TYPES:2 * NUM_TYPES]                 # neighbor one-hot part
    w1b = (2.0 / R_MAX) * w1[2 * NUM_TYPES:]          # bessel part, prefactor folded
    w2 = np.asarray(unif(ks[1], (H1, H2), H1))
    w3 = np.asarray(unif(ks[2], (H2, LATENT), H2))
    wenv = np.asarray(unif(ks[3], (LATENT, W_NUMEL), LATENT))

    # bessel frequencies n*pi, pre-scaled by 1/r_max
    bessel_w = (np.linspace(1.0, N_BASIS, N_BASIS) * np.pi / R_MAX).astype(np.float32)

    # SeperableLayerNorm affine params, perturbed from (ones, zeros)
    ln_w_h = 1.0 + 0.1 * jax.random.uniform(ks[4], (W_NUMEL,), jnp.float32, -1.0, 1.0)
    ln_b_h = 0.01 * jax.random.uniform(ks[5], (MULT,), jnp.float32, -1.0, 1.0)
    ln_w_n = 1.0 + 0.1 * jax.random.uniform(ks[6], (W_NUMEL,), jnp.float32, -1.0, 1.0)
    ln_b_n = 0.01 * jax.random.uniform(ks[7], (MULT,), jnp.float32, -1.0, 1.0)

    # static expansion matrices / per-component constants (built at FEAT_DIM width,
    # then zero-padded to 128 lanes so all downstream vregs are full-width)
    gw = np.zeros((W_NUMEL, FEAT_DIM), np.float32)   # weight (l,m) -> components (l,m,c)
    gs = np.zeros((SH_DIM, FEAT_DIM), np.float32)    # sh (l,c)     -> components (l,m,c)
    comp_w = np.zeros((FEAT_DIM,), np.float32)
    smask = np.zeros((FEAT_DIM,), np.float32)
    off, sh_off = 0, 0
    for li, l in enumerate(DEGREES):
        d = 2 * l + 1
        for m in range(MULT):
            cols = slice(off + m * d, off + (m + 1) * d)
            gw[li * MULT + m, cols] = 1.0
            gs[sh_off:sh_off + d, cols] += np.eye(d, dtype=np.float32)
        comp_w[off:off + MULT * d] = 1.0 / (d * N_DEG * MULT)
        if l == 0:
            smask[off:off + MULT] = 1.0
        off += MULT * d
        sh_off += d

    # env_embed_mlp + weight expansion folded (each gw column has a single 1 -> exact)
    wexp_small = wenv @ gw                            # [LATENT, FEAT_DIM]
    wexp = np.zeros((OUTPAD, OUTPAD), np.float32)
    wexp[:LATENT, :FEAT_DIM] = wexp_small             # zero rows/cols keep pads inert

    gs128 = np.zeros((SH_DIM, OUTPAD), np.float32)
    gs128[:, :FEAT_DIM] = gs

    w3p = np.zeros((H2, OUTPAD), np.float32)
    w3p[:, :LATENT] = w3

    def expand_affine(w, b):
        gamma = np.zeros((FEAT_DIM,), np.float32)
        beta = np.zeros((FEAT_DIM,), np.float32)
        w = np.asarray(w)
        b = np.asarray(b)
        o = 0
        for li, l in enumerate(DEGREES):
            d = 2 * l + 1
            for m in range(MULT):
                gamma[o + m * d:o + (m + 1) * d] = w[li * MULT + m]
            o += MULT * d
        beta[:MULT] = b
        return gamma, beta

    gamma_h, beta_h = expand_affine(ln_w_h, ln_b_h)
    gamma_n, beta_n = expand_affine(ln_w_n, ln_b_n)

    # pack all per-feature vectors + bessel freqs + e64 marker into one [8, 128] slab;
    # pad lanes (>= FEAT_DIM) of gamma/beta/comp_w/smask are exactly zero (LN exactness).
    pvec = np.zeros((8, 128), np.float32)
    pvec[0, :FEAT_DIM] = gamma_h
    pvec[1, :FEAT_DIM] = beta_h
    pvec[2, :FEAT_DIM] = gamma_n
    pvec[3, :FEAT_DIM] = beta_n
    pvec[4, :FEAT_DIM] = comp_w
    pvec[5, :FEAT_DIM] = smask
    pvec[6, :N_BASIS] = bessel_w
    pvec[7, COL_CUT] = 1.0                            # routes cutoff into lane 64

    to_j = lambda a: jnp.asarray(np.asarray(a, np.float32))
    return dict(
        w1c=to_j(w1c), w1n=to_j(w1n), w1b=to_j(w1b), w2=to_j(w2),
        w3p=to_j(w3p), wexp=to_j(wexp), gs=to_j(gs128), pvec=to_j(pvec),
    )


# ----------------------- main --------------------------------------------------------
if __name__ == "__main__":
    key = jax.random.PRNGKey(0)
    k_par, k_ei, k_len, k_sh, k_ty = jax.random.split(key, 5)

    params = make_params(k_par)

    edge_index = jax.random.randint(k_ei, (2, N_EDGES), 0, N_NODES)
    # edge lengths well inside r_max so every edge is active (matches torch compaction)
    edge_length = jax.random.uniform(k_len, (N_EDGES,), jnp.float32, 0.5, 4.5)
    # edge_sh stands in for spherical harmonics of the edge vectors (l=0,1,2 -> 9 comps)
    edge_sh = jax.random.normal(k_sh, (N_EDGES, SH_DIM), jnp.float32)
    atom_type = jax.random.randint(k_ty, (N_NODES,), 0, NUM_TYPES)
    bond_type = jnp.zeros((N_EDGES,), jnp.int32)
    node_one_hot = jax.nn.one_hot(atom_type, NUM_TYPES, dtype=jnp.float32)

    outs = init_layer_forward(edge_index, atom_type, bond_type, edge_sh,
                              edge_length, node_one_hot, params)
    outs = jax.block_until_ready(outs)

    latents, node_features, edge_features, hidden_features, cutoff_coeffs, active_edges = outs
    assert latents.shape == (N_EDGES, LATENT)
    assert node_features.shape == (N_NODES, FEAT_DIM)
    assert edge_features.shape == (N_EDGES, FEAT_DIM)
    assert hidden_features.shape == (N_EDGES, FEAT_DIM)
    assert cutoff_coeffs.shape == (N_EDGES,)
    assert all(np.isfinite(np.asarray(o)).all() for o in
               (latents, node_features, edge_features, hidden_features, cutoff_coeffs))
    print("KERNEL_OK")
</pallas_src>

<mosaic_0001>
module attributes {stable_mosaic.version = 11 : i64} {
  func.func @init_layer_kernel(%arg0: i32, %arg1: memref<64x1xi32, #tpu.memory_space<vmem>>, %arg2: memref<64x1xi32, #tpu.memory_space<vmem>>, %arg3: memref<1x64xi32, #tpu.memory_space<vmem>>, %arg4: memref<64x1xf32, #tpu.memory_space<vmem>>, %arg5: memref<64x9xf32, #tpu.memory_space<vmem>>, %arg6: memref<16x4xf32, #tpu.memory_space<vmem>>, %arg7: memref<4x64xf32, #tpu.memory_space<vmem>>, %arg8: memref<4x64xf32, #tpu.memory_space<vmem>>, %arg9: memref<8x64xf32, #tpu.memory_space<vmem>>, %arg10: memref<64x64xf32, #tpu.memory_space<vmem>>, %arg11: memref<64x128xf32, #tpu.memory_space<vmem>>, %arg12: memref<128x128xf32, #tpu.memory_space<vmem>>, %arg13: memref<9x128xf32, #tpu.memory_space<vmem>>, %arg14: memref<8x128xf32, #tpu.memory_space<vmem>>, %arg15: memref<64x128xf32, #tpu.memory_space<vmem>>, %arg16: memref<64x128xf32, #tpu.memory_space<vmem>>, %arg17: memref<64x128xf32, #tpu.memory_space<vmem>>, %arg18: memref<16x128xf32, #tpu.memory_space<vmem>>) attributes {dimension_semantics = [#tpu.dimension_semantics<arbitrary>], iteration_bounds = array<i64: 1>, scalar_prefetch = 0 : i64, scratch_operands = 0 : i64, tpu.core_type = #tpu.core_type<tc>, window_params = [{pipeline_mode = #tpu.pipeline_mode<synchronous>, transform_indices = @transform_0, window_bounds = array<i64: 64, 1>}, {pipeline_mode = #tpu.pipeline_mode<synchronous>, transform_indices = @transform_1, window_bounds = array<i64: 64, 1>}, {pipeline_mode = #tpu.pipeline_mode<synchronous>, transform_indices = @transform_2, window_bounds = array<i64: 1, 64>}, {pipeline_mode = #tpu.pipeline_mode<synchronous>, transform_indices = @transform_3, window_bounds = array<i64: 64, 1>}, {pipeline_mode = #tpu.pipeline_mode<synchronous>, transform_indices = @transform_4, window_bounds = array<i64: 64, 9>}, {pipeline_mode = #tpu.pipeline_mode<synchronous>, transform_indices = @transform_5, window_bounds = array<i64: 16, 4>}, {pipeline_mode = #tpu.pipeline_mode<synchronous>, transform_indices = @transform_6, window_bounds = array<i64: 4, 64>}, {pipeline_mode = #tpu.pipeline_mode<synchronous>, transform_indices = @transform_7, window_bounds = array<i64: 4, 64>}, {pipeline_mode = #tpu.pipeline_mode<synchronous>, transform_indices = @transform_8, window_bounds = array<i64: 8, 64>}, {pipeline_mode = #tpu.pipeline_mode<synchronous>, transform_indices = @transform_9, window_bounds = array<i64: 64, 64>}, {pipeline_mode = #tpu.pipeline_mode<synchronous>, transform_indices = @transform_10, window_bounds = array<i64: 64, 128>}, {pipeline_mode = #tpu.pipeline_mode<synchronous>, transform_indices = @transform_11, window_bounds = array<i64: 128, 128>}, {pipeline_mode = #tpu.pipeline_mode<synchronous>, transform_indices = @transform_12, window_bounds = array<i64: 9, 128>}, {pipeline_mode = #tpu.pipeline_mode<synchronous>, transform_indices = @transform_13, window_bounds = array<i64: 8, 128>}, {pipeline_mode = #tpu.pipeline_mode<synchronous>, transform_indices = @transform_14, window_bounds = array<i64: 64, 128>}, {pipeline_mode = #tpu.pipeline_mode<synchronous>, transform_indices = @transform_15, window_bounds = array<i64: 64, 128>}, {pipeline_mode = #tpu.pipeline_mode<synchronous>, transform_indices = @transform_16, window_bounds = array<i64: 64, 128>}, {pipeline_mode = #tpu.pipeline_mode<synchronous>, transform_indices = @transform_17, window_bounds = array<i64: 16, 128>}]} {
    %c0 = arith.constant 0 : index
    %c0_0 = arith.constant 0 : index
    %0 = vector.load %arg14[%c0, %c0_0] : memref<8x128xf32, #tpu.memory_space<vmem>>, vector<8x128xf32>
    %1 = vector.extract_strided_slice %0 {offsets = [0, 0], sizes = [1, 128], strides = [1, 1]} : vector<8x128xf32> to vector<1x128xf32>
    %2 = vector.extract_strided_slice %0 {offsets = [1, 0], sizes = [1, 128], strides = [1, 1]} : vector<8x128xf32> to vector<1x128xf32>
    %3 = vector.extract_strided_slice %0 {offsets = [2, 0], sizes = [1, 128], strides = [1, 1]} : vector<8x128xf32> to vector<1x128xf32>
    %4 = vector.extract_strided_slice %0 {offsets = [3, 0], sizes = [1, 128], strides = [1, 1]} : vector<8x128xf32> to vector<1x128xf32>
    %5 = vector.extract_strided_slice %0 {offsets = [4, 0], sizes = [1, 128], strides = [1, 1]} : vector<8x128xf32> to vector<1x128xf32>
    %6 = vector.extract_strided_slice %0 {offsets = [5, 0], sizes = [1, 128], strides = [1, 1]} : vector<8x128xf32> to vector<1x128xf32>
    %7 = vector.extract_strided_slice %0 {offsets = [6, 0], sizes = [1, 8], strides = [1, 1]} : vector<8x128xf32> to vector<1x8xf32>
    %8 = vector.extract_strided_slice %0 {offsets = [7, 0], sizes = [1, 128], strides = [1, 1]} : vector<8x128xf32> to vector<1x128xf32>
    %c0_1 = arith.constant 0 : index
    %c0_2 = arith.constant 0 : index
    %9 = vector.load %arg1[%c0_1, %c0_2] : memref<64x1xi32, #tpu.memory_space<vmem>>, vector<64x1xi32>
    %c0_3 = arith.constant 0 : index
    %c0_4 = arith.constant 0 : index
    %10 = vector.load %arg2[%c0_3, %c0_4] : memref<64x1xi32, #tpu.memory_space<vmem>>, vector<64x1xi32>
    %c0_5 = arith.constant 0 : index
    %c0_6 = arith.constant 0 : index
    %11 = vector.load %arg3[%c0_5, %c0_6] : memref<1x64xi32, #tpu.memory_space<vmem>>, vector<1x64xi32>
    %12 = tpu.iota {dimensions = array<i32: 1>} : vector<64x16xi32>
    %13 = vector.broadcast %9 : vector<64x1xi32> to vector<64x16xi32>
    %14 = arith.cmpi eq, %12, %13 : vector<64x16xi32>
    %15 = arith.extui %14 : vector<64x16xi1> to vector<64x16xi32>
    %16 = arith.sitofp %15 : vector<64x16xi32> to vector<64x16xf32>
    %17 = vector.broadcast %10 : vector<64x1xi32> to vector<64x16xi32>
    %18 = arith.cmpi eq, %12, %17 : vector<64x16xi32>
    %19 = arith.extui %18 : vector<64x16xi1> to vector<64x16xi32>
    %20 = arith.sitofp %19 : vector<64x16xi32> to vector<64x16xf32>
    %21 = tpu.iota {dimensions = array<i32: 0>} : vector<16x64xi32>
    %22 = vector.broadcast %11 : vector<1x64xi32> to vector<16x64xi32>
    %23 = arith.cmpi eq, %21, %22 : vector<16x64xi32>
    %24 = arith.extui %23 : vector<16x64xi1> to vector<16x64xi32>
    %25 = arith.sitofp %24 : vector<16x64xi32> to vector<16x64xf32>
    %c0_7 = arith.constant 0 : index
    %c0_8 = arith.constant 0 : index
    %26 = vector.load %arg4[%c0_7, %c0_8] : memref<64x1xf32, #tpu.memory_space<vmem>>, vector<64x1xf32>
    %cst = arith.constant 9.99999971E-10 : f32
    %27 = vector.broadcast %cst : f32 to vector<64x1xf32>
    %28 = arith.maximumf %26, %27 : vector<64x1xf32>
    %29 = tpu.reciprocal %28 {approx = true} : vector<64x1xf32> -> vector<64x1xf32>
    %30 = vector.broadcast %26 : vector<64x1xf32> to vector<64x8xf32>
    %31 = vector.broadcast %7 : vector<1x8xf32> to vector<64x8xf32>
    %32 = arith.mulf %30, %31 : vector<64x8xf32>
    %33 = math.sin %32 : vector<64x8xf32>
    %34 = vector.broadcast %29 : vector<64x1xf32> to vector<64x8xf32>
    %35 = arith.mulf %33, %34 : vector<64x8xf32>
    %cst_9 = arith.constant 2.000000e-01 : f32
    %36 = vector.broadcast %cst_9 : f32 to vector<64x1xf32>
    %37 = arith.mulf %26, %36 : vector<64x1xf32>
    %38 = arith.mulf %37, %37 : vector<64x1xf32>
    %39 = arith.mulf %38, %37 : vector<64x1xf32>
    %40 = arith.mulf %39, %39 : vector<64x1xf32>
    %41 = arith.mulf %40, %37 : vector<64x1xf32>
    %42 = arith.mulf %41, %37 : vector<64x1xf32>
    %cst_10 = arith.constant 2.800000e+01 : f32
    %43 = vector.broadcast %cst_10 : f32 to vector<64x1xf32>
    %44 = arith.mulf %43, %40 : vector<64x1xf32>
    %cst_11 = arith.constant 1.000000e+00 : f32
    %45 = vector.broadcast %cst_11 : f32 to vector<64x1xf32>
    %46 = arith.subf %45, %44 : vector<64x1xf32>
    %cst_12 = arith.constant 4.800000e+01 : f32
    %47 = vector.broadcast %cst_12 : f32 to vector<64x1xf32>
    %48 = arith.mulf %47, %41 : vector<64x1xf32>
    %49 = arith.addf %46, %48 : vector<64x1xf32>
    %cst_13 = arith.constant 2.100000e+01 : f32
    %50 = vector.broadcast %cst_13 : f32 to vector<64x1xf32>
    %51 = arith.mulf %50, %42 : vector<64x1xf32>
    %52 = arith.subf %49, %51 : vector<64x1xf32>
    %cst_14 = arith.constant 1.000000e+00 : f32
    %53 = vector.broadcast %cst_14 : f32 to vector<64x1xf32>
    %54 = arith.cmpf olt, %37, %53 : vector<64x1xf32>
    %55 = arith.extui %54 : vector<64x1xi1> to vector<64x1xi32>
    %56 = arith.sitofp %55 : vector<64x1xi32> to vector<64x1xf32>
    %57 = arith.mulf %52, %56 : vector<64x1xf32>
    %cst_15 = arith.constant 0.000000e+00 : f32
    %58 = vector.broadcast %cst_15 : f32 to vector<64x1xf32>
    %59 = arith.cmpf ogt, %57, %58 : vector<64x1xf32>
    %60 = arith.extui %59 : vector<64x1xi1> to vector<64x1xi32>
    %61 = arith.sitofp %60 : vector<64x1xi32> to vector<64x1xf32>
    %c0_16 = arith.constant 0 : index
    %c0_17 = arith.constant 0 : index
    %62 = vector.load %arg6[%c0_16, %c0_17] : memref<16x4xf32, #tpu.memory_space<vmem>>, vector<16x4xf32>
    %c0_18 = arith.constant 0 : index
    %c0_19 = arith.constant 0 : index
    %63 = vector.load %arg7[%c0_18, %c0_19] : memref<4x64xf32, #tpu.memory_space<vmem>>, vector<4x64xf32>
    %cst_20 = arith.constant dense<0.000000e+00> : vector<16x64xf32>
    %64 = tpu.matmul %62, %63, %cst_20 {dimension_numbers = #tpu.dot_dimension_numbers<[1], [0], [0], [1], [0, 0, 1, 1], [], []>} : vector<16x4xf32>, vector<4x64xf32>, vector<16x64xf32> -> vector<16x64xf32>
    %c0_21 = arith.constant 0 : index
    %c0_22 = arith.constant 0 : index
    %65 = vector.load %arg6[%c0_21, %c0_22] : memref<16x4xf32, #tpu.memory_space<vmem>>, vector<16x4xf32>
    %c0_23 = arith.constant 0 : index
    %c0_24 = arith.constant 0 : index
    %66 = vector.load %arg8[%c0_23, %c0_24] : memref<4x64xf32, #tpu.memory_space<vmem>>, vector<4x64xf32>
    %cst_25 = arith.constant dense<0.000000e+00> : vector<16x64xf32>
    %67 = tpu.matmul %65, %66, %cst_25 {dimension_numbers = #tpu.dot_dimension_numbers<[1], [0], [0], [1], [0, 0, 1, 1], [], []>} : vector<16x4xf32>, vector<4x64xf32>, vector<16x64xf32> -> vector<16x64xf32>
    %cst_26 = arith.constant dense<0.000000e+00> : vector<64x64xf32>
    %68 = tpu.matmul %16, %64, %cst_26 {dimension_numbers = #tpu.dot_dimension_numbers<[1], [0], [0], [1], [0, 0, 1, 1], [], []>} : vector<64x16xf32>, vector<16x64xf32>, vector<64x64xf32> -> vector<64x64xf32>
    %cst_27 = arith.constant dense<0.000000e+00> : vector<64x64xf32>
    %69 = tpu.matmul %20, %67, %cst_27 {dimension_numbers = #tpu.dot_dimension_numbers<[1], [0], [0], [1], [0, 0, 1, 1], [], []>} : vector<64x16xf32>, vector<16x64xf32>, vector<64x64xf32> -> vector<64x64xf32>
    %70 = arith.addf %68, %69 : vector<64x64xf32>
    %c0_28 = arith.constant 0 : index
    %c0_29 = arith.constant 0 : index
    %71 = vector.load %arg9[%c0_28, %c0_29] : memref<8x64xf32, #tpu.memory_space<vmem>>, vector<8x64xf32>
    %cst_30 = arith.constant dense<0.000000e+00> : vector<64x64xf32>
    %72 = tpu.matmul %35, %71, %cst_30 {dimension_numbers = #tpu.dot_dimension_numbers<[1], [0], [0], [1], [0, 0, 1, 1], [], []>} : vector<64x8xf32>, vector<8x64xf32>, vector<64x64xf32> -> vector<64x64xf32>
    %73 = arith.addf %70, %72 : vector<64x64xf32>
    %74 = arith.negf %73 : vector<64x64xf32>
    %75 = math.exp %74 : vector<64x64xf32>
    %cst_31 = arith.constant 1.000000e+00 : f32
    %76 = vector.broadcast %cst_31 : f32 to vector<64x64xf32>
    %77 = arith.addf %76, %75 : vector<64x64xf32>
    %78 = arith.divf %76, %77 : vector<64x64xf32>
    %79 = arith.mulf %73, %78 : vector<64x64xf32>
    %c0_32 = arith.constant 0 : index
    %c0_33 = arith.constant 0 : index
    %80 = vector.load %arg10[%c0_32, %c0_33] : memref<64x64xf32, #tpu.memory_space<vmem>>, vector<64x64xf32>
    %cst_34 = arith.constant dense<0.000000e+00> : vector<64x64xf32>
    %81 = tpu.matmul %79, %80, %cst_34 {dimension_numbers = #tpu.dot_dimension_numbers<[1], [0], [0], [1], [0, 0, 1, 1], [], []>} : vector<64x64xf32>, vector<64x64xf32>, vector<64x64xf32> -> vector<64x64xf32>
    %82 = arith.negf %81 : vector<64x64xf32>
    %83 = math.exp %82 : vector<64x64xf32>
    %cst_35 = arith.constant 1.000000e+00 : f32
    %84 = vector.broadcast %cst_35 : f32 to vector<64x64xf32>
    %85 = arith.addf %84, %83 : vector<64x64xf32>
    %86 = arith.divf %84, %85 : vector<64x64xf32>
    %87 = arith.mulf %81, %86 : vector<64x64xf32>
    %c0_36 = arith.constant 0 : index
    %c0_37 = arith.constant 0 : index
    %88 = vector.load %arg11[%c0_36, %c0_37] : memref<64x128xf32, #tpu.memory_space<vmem>>, vector<64x128xf32>
    %cst_38 = arith.constant dense<0.000000e+00> : vector<64x128xf32>
    %89 = tpu.matmul %87, %88, %cst_38 {dimension_numbers = #tpu.dot_dimension_numbers<[1], [0], [0], [1], [0, 0, 1, 1], [], []>} : vector<64x64xf32>, vector<64x128xf32>, vector<64x128xf32> -> vector<64x128xf32>
    %90 = vector.broadcast %8 : vector<1x128xf32> to vector<64x128xf32>
    %91 = arith.addf %89, %90 : vector<64x128xf32>
    %92 = vector.broadcast %57 : vector<64x1xf32> to vector<64x128xf32>
    %93 = arith.mulf %92, %91 : vector<64x128xf32>
    %c0_39 = arith.constant 0 : index
    %c0_40 = arith.constant 0 : index
    %94 = vector.load %arg15[%c0_39, %c0_40] : memref<64x128xf32, #tpu.memory_space<vmem>>, vector<64x128xf32>
    tpu.vector_store %arg15[%c0_39, %c0_40], %93 {strides = array<i32>} : memref<64x128xf32, #tpu.memory_space<vmem>>, vector<64x128xf32>,
    %c0_41 = arith.constant 0 : index
    %c0_42 = arith.constant 0 : index
    %95 = vector.load %arg5[%c0_41, %c0_42] : memref<64x9xf32, #tpu.memory_space<vmem>>, vector<64x9xf32>
    %c0_43 = arith.constant 0 : index
    %c0_44 = arith.constant 0 : index
    %96 = vector.load %arg13[%c0_43, %c0_44] : memref<9x128xf32, #tpu.memory_space<vmem>>, vector<9x128xf32>
    %cst_45 = arith.constant dense<0.000000e+00> : vector<64x128xf32>
    %97 = tpu.matmul %95, %96, %cst_45 {dimension_numbers = #tpu.dot_dimension_numbers<[1], [0], [0], [1], [0, 0, 1, 1], [], []>} : vector<64x9xf32>, vector<9x128xf32>, vector<64x128xf32> -> vector<64x128xf32>
    %c0_46 = arith.constant 0 : index
    %c0_47 = arith.constant 0 : index
    %98 = vector.load %arg12[%c0_46, %c0_47] : memref<128x128xf32, #tpu.memory_space<vmem>>, vector<128x128xf32>
    %cst_48 = arith.constant dense<0.000000e+00> : vector<64x128xf32>
    %99 = tpu.matmul %89, %98, %cst_48 {dimension_numbers = #tpu.dot_dimension_numbers<[1], [0], [0], [1], [0, 0, 1, 1], [], []>} : vector<64x128xf32>, vector<128x128xf32>, vector<64x128xf32> -> vector<64x128xf32>
    %100 = arith.mulf %99, %97 : vector<64x128xf32>
    %101 = vector.broadcast %57 : vector<64x1xf32> to vector<64x128xf32>
    %102 = arith.mulf %101, %100 : vector<64x128xf32>
    %c0_49 = arith.constant 0 : index
    %c0_50 = arith.constant 0 : index
    %103 = vector.load %arg16[%c0_49, %c0_50] : memref<64x128xf32, #tpu.memory_space<vmem>>, vector<64x128xf32>
    tpu.vector_store %arg16[%c0_49, %c0_50], %102 {strides = array<i32>} : memref<64x128xf32, #tpu.memory_space<vmem>>, vector<64x128xf32>,
    %104 = vector.broadcast %6 : vector<1x128xf32> to vector<64x128xf32>
    %105 = arith.mulf %100, %104 : vector<64x128xf32>
    %cst_51 = arith.constant dense<0.000000e+00> : vector<64xf32>
    %106 = vector.multi_reduction <add>, %105, %cst_51 [1] : vector<64x128xf32> to vector<64xf32>
    %107 = vector.shape_cast %106 : vector<64xf32> to vector<64x1xf32>
    %cst_52 = arith.constant 1.250000e-01 : f32
    %108 = vector.broadcast %cst_52 : f32 to vector<64x1xf32>
    %109 = arith.mulf %107, %108 : vector<64x1xf32>
    %110 = vector.broadcast %109 : vector<64x1xf32> to vector<64x128xf32>
    %111 = vector.broadcast %6 : vector<1x128xf32> to vector<64x128xf32>
    %112 = arith.mulf %110, %111 : vector<64x128xf32>
    %113 = arith.subf %100, %112 : vector<64x128xf32>
    %114 = arith.mulf %113, %113 : vector<64x128xf32>
    %115 = vector.broadcast %5 : vector<1x128xf32> to vector<64x128xf32>
    %116 = arith.mulf %114, %115 : vector<64x128xf32>
    %cst_53 = arith.constant dense<0.000000e+00> : vector<64xf32>
    %117 = vector.multi_reduction <add>, %116, %cst_53 [1] : vector<64x128xf32> to vector<64xf32>
    %118 = vector.shape_cast %117 : vector<64xf32> to vector<64x1xf32>
    %cst_54 = arith.constant 9.99999974E-6 : f32
    %119 = vector.broadcast %cst_54 : f32 to vector<64x1xf32>
    %120 = arith.addf %118, %119 : vector<64x1xf32>
    %121 = math.rsqrt %120 : vector<64x1xf32>
    %122 = vector.broadcast %121 : vector<64x1xf32> to vector<64x128xf32>
    %123 = arith.mulf %113, %122 : vector<64x128xf32>
    %124 = vector.broadcast %1 : vector<1x128xf32> to vector<64x128xf32>
    %125 = arith.mulf %123, %124 : vector<64x128xf32>
    %126 = vector.broadcast %2 : vector<1x128xf32> to vector<64x128xf32>
    %127 = arith.addf %125, %126 : vector<64x128xf32>
    %128 = vector.broadcast %61 : vector<64x1xf32> to vector<64x128xf32>
    %129 = arith.mulf %127, %128 : vector<64x128xf32>
    %c0_55 = arith.constant 0 : index
    %c0_56 = arith.constant 0 : index
    %130 = vector.load %arg17[%c0_55, %c0_56] : memref<64x128xf32, #tpu.memory_space<vmem>>, vector<64x128xf32>
    tpu.vector_store %arg17[%c0_55, %c0_56], %129 {strides = array<i32>} : memref<64x128xf32, #tpu.memory_space<vmem>>, vector<64x128xf32>,
    %cst_57 = arith.constant dense<0.000000e+00> : vector<16x128xf32>
    %131 = tpu.matmul %25, %102, %cst_57 {dimension_numbers = #tpu.dot_dimension_numbers<[1], [0], [0], [1], [0, 0, 1, 1], [], []>} : vector<16x64xf32>, vector<64x128xf32>, vector<16x128xf32> -> vector<16x128xf32>
    %cst_58 = arith.constant 0.316227764 : f32
    %132 = vector.broadcast %cst_58 : f32 to vector<16x128xf32>
    %133 = arith.mulf %131, %132 : vector<16x128xf32>
    %134 = vector.broadcast %6 : vector<1x128xf32> to vector<16x128xf32>
    %135 = arith.mulf %133, %134 : vector<16x128xf32>
    %cst_59 = arith.constant dense<0.000000e+00> : vector<16xf32>
    %136 = vector.multi_reduction <add>, %135, %cst_59 [1] : vector<16x128xf32> to vector<16xf32>
    %137 = vector.shape_cast %136 : vector<16xf32> to vector<16x1xf32>
    %cst_60 = arith.constant 1.250000e-01 : f32
    %138 = vector.broadcast %cst_60 : f32 to vector<16x1xf32>
    %139 = arith.mulf %137, %138 : vector<16x1xf32>
    %140 = vector.broadcast %139 : vector<16x1xf32> to vector<16x128xf32>
    %141 = vector.broadcast %6 : vector<1x128xf32> to vector<16x128xf32>
    %142 = arith.mulf %140, %141 : vector<16x128xf32>
    %143 = arith.subf %133, %142 : vector<16x128xf32>
    %144 = arith.mulf %143, %143 : vector<16x128xf32>
    %145 = vector.broadcast %5 : vector<1x128xf32> to vector<16x128xf32>
    %146 = arith.mulf %144, %145 : vector<16x128xf32>
    %cst_61 = arith.constant dense<0.000000e+00> : vector<16xf32>
    %147 = vector.multi_reduction <add>, %146, %cst_61 [1] : vector<16x128xf32> to vector<16xf32>
    %148 = vector.shape_cast %147 : vector<16xf32> to vector<16x1xf32>
    %cst_62 = arith.constant 9.99999974E-6 : f32
    %149 = vector.broadcast %cst_62 : f32 to vector<16x1xf32>
    %150 = arith.addf %148, %149 : vector<16x1xf32>
    %151 = math.rsqrt %150 : vector<16x1xf32>
    %152 = vector.broadcast %151 : vector<16x1xf32> to vector<16x128xf32>
    %153 = arith.mulf %143, %152 : vector<16x128xf32>
    %154 = vector.broadcast %3 : vector<1x128xf32> to vector<16x128xf32>
    %155 = arith.mulf %153, %154 : vector<16x128xf32>
    %156 = vector.broadcast %4 : vector<1x128xf32> to vector<16x128xf32>
    %157 = arith.addf %155, %156 : vector<16x128xf32>
    %c0_63 = arith.constant 0 : index
    %c0_64 = arith.constant 0 : index
    %158 = vector.load %arg18[%c0_63, %c0_64] : memref<16x128xf32, #tpu.memory_space<vmem>>, vector<16x128xf32>
    tpu.vector_store %arg18[%c0_63, %c0_64], %157 {strides = array<i32>} : memref<16x128xf32, #tpu.memory_space<vmem>>, vector<16x128xf32>,
    return
  }
  func.func @transform_0(%arg0: i32) -> (i32, i32) {
    %c0_i32 = arith.constant 0 : i32
    %c0_i32_0 = arith.constant 0 : i32
    %c0_i32_1 = arith.constant 0 : i32
    return %c0_i32, %c0_i32_0 : i32, i32
  }
  func.func @transform_1(%arg0: i32) -> (i32, i32) {
    %c0_i32 = arith.constant 0 : i32
    %c0_i32_0 = arith.constant 0 : i32
    %c0_i32_1 = arith.constant 0 : i32
    return %c0_i32, %c0_i32_0 : i32, i32
  }
  func.func @transform_2(%arg0: i32) -> (i32, i32) {
    %c0_i32 = arith.constant 0 : i32
    %c0_i32_0 = arith.constant 0 : i32
    %c0_i32_1 = arith.constant 0 : i32
    return %c0_i32, %c0_i32_0 : i32, i32
  }
  func.func @transform_3(%arg0: i32) -> (i32, i32) {
    %c0_i32 = arith.constant 0 : i32
    %c0_i32_0 = arith.constant 0 : i32
    %c0_i32_1 = arith.constant 0 : i32
    return %c0_i32, %c0_i32_0 : i32, i32
  }
  func.func @transform_4(%arg0: i32) -> (i32, i32) {
    %c0_i32 = arith.constant 0 : i32
    %c0_i32_0 = arith.constant 0 : i32
    %c0_i32_1 = arith.constant 0 : i32
    return %c0_i32, %c0_i32_0 : i32, i32
  }
  func.func @transform_5(%arg0: i32) -> (i32, i32) {
    %c0_i32 = arith.constant 0 : i32
    %c0_i32_0 = arith.constant 0 : i32
    %c0_i32_1 = arith.constant 0 : i32
    return %c0_i32, %c0_i32_0 : i32, i32
  }
  func.func @transform_6(%arg0: i32) -> (i32, i32) {
    %c0_i32 = arith.constant 0 : i32
    %c0_i32_0 = arith.constant 0 : i32
    %c0_i32_1 = arith.constant 0 : i32
    return %c0_i32, %c0_i32_0 : i32, i32
  }
  func.func @transform_7(%arg0: i32) -> (i32, i32) {
    %c0_i32 = arith.constant 0 : i32
    %c0_i32_0 = arith.constant 0 : i32
    %c0_i32_1 = arith.constant 0 : i32
    return %c0_i32, %c0_i32_0 : i32, i32
  }
  func.func @transform_8(%arg0: i32) -> (i32, i32) {
    %c0_i32 = arith.constant 0 : i32
    %c0_i32_0 = arith.constant 0 : i32
    %c0_i32_1 = arith.constant 0 : i32
    return %c0_i32, %c0_i32_0 : i32, i32
  }
  func.func @transform_9(%arg0: i32) -> (i32, i32) {
    %c0_i32 = arith.constant 0 : i32
    %c0_i32_0 = arith.constant 0 : i32
    %c0_i32_1 = arith.constant 0 : i32
    return %c0_i32, %c0_i32_0 : i32, i32
  }
  func.func @transform_10(%arg0: i32) -> (i32, i32) {
    %c0_i32 = arith.constant 0 : i32
    %c0_i32_0 = arith.constant 0 : i32
    %c0_i32_1 = arith.constant 0 : i32
    return %c0_i32, %c0_i32_0 : i32, i32
  }
  func.func @transform_11(%arg0: i32) -> (i32, i32) {
    %c0_i32 = arith.constant 0 : i32
    %c0_i32_0 = arith.constant 0 : i32
    %c0_i32_1 = arith.constant 0 : i32
    return %c0_i32, %c0_i32_0 : i32, i32
  }
  func.func @transform_12(%arg0: i32) -> (i32, i32) {
    %c0_i32 = arith.constant 0 : i32
    %c0_i32_0 = arith.constant 0 : i32
    %c0_i32_1 = arith.constant 0 : i32
    return %c0_i32, %c0_i32_0 : i32, i32
  }
  func.func @transform_13(%arg0: i32) -> (i32, i32) {
    %c0_i32 = arith.constant 0 : i32
    %c0_i32_0 = arith.constant 0 : i32
    %c0_i32_1 = arith.constant 0 : i32
    return %c0_i32, %c0_i32_0 : i32, i32
  }
  func.func @transform_14(%arg0: i32) -> (i32, i32) {
    %c0_i32 = arith.constant 0 : i32
    %c0_i32_0 = arith.constant 0 : i32
    %c0_i32_1 = arith.constant 0 : i32
    return %c0_i32, %c0_i32_0 : i32, i32
  }
  func.func @transform_15(%arg0: i32) -> (i32, i32) {
    %c0_i32 = arith.constant 0 : i32
    %c0_i32_0 = arith.constant 0 : i32
    %c0_i32_1 = arith.constant 0 : i32
    return %c0_i32, %c0_i32_0 : i32, i32
  }
  func.func @transform_16(%arg0: i32) -> (i32, i32) {
    %c0_i32 = arith.constant 0 : i32
    %c0_i32_0 = arith.constant 0 : i32
    %c0_i32_1 = arith.constant 0 : i32
    return %c0_i32, %c0_i32_0 : i32, i32
  }
  func.func @transform_17(%arg0: i32) -> (i32, i32) {
    %c0_i32 = arith.constant 0 : i32
    %c0_i32_0 = arith.constant 0 : i32
    %c0_i32_1 = arith.constant 0 : i32
    return %c0_i32, %c0_i32_0 : i32, i32
  }
}

</mosaic_0001>

<llo_original>
// kernel: tpu_custom_call.1
$region0: #{tpu_custom_call.1}
  #allocation0 [shape = 'u32[]', space=smem, size = 0x4, offset = 0x4, fixed_abs, tag = 'smem constant byte address 0x4 - core index']
  #allocation1 [shape = 'u32[72,128]{1,0:T(1,128)}', space=vmem, size = 0x9000, scoped, tag = 'internal scratch']
  %s0 = inlined_call_operand.vmem [shape: s32[64,1], index: 0, kind: input, shape index: {}]
  %s1 = inlined_call_operand.vmem [shape: s32[64,1], index: 1, kind: input, shape index: {}]
  %s2 = inlined_call_operand.vmem [shape: s32[1,64], index: 2, kind: input, shape index: {}]
  %s3 = inlined_call_operand.vmem [shape: f32[64,1], index: 3, kind: input, shape index: {}]
  %s4 = inlined_call_operand.vmem [shape: f32[64,9], index: 4, kind: input, shape index: {}]
  %s5 = inlined_call_operand.vmem [shape: f32[16,4], index: 5, kind: input, shape index: {}]
  %s6 = inlined_call_operand.hbm [shape: f32[4,64], index: 6, kind: input, shape index: {}]
  %s7 = inlined_call_operand.hbm [shape: f32[4,64], index: 7, kind: input, shape index: {}]
  %s8 = inlined_call_operand.hbm [shape: f32[8,64], index: 8, kind: input, shape index: {}]
  %s9 = inlined_call_operand.vmem [shape: f32[64,64], index: 9, kind: input, shape index: {}]
  %s10 = inlined_call_operand.vmem [shape: f32[64,128], index: 10, kind: input, shape index: {}]
  %s11 = inlined_call_operand.vmem [shape: f32[128,128], index: 11, kind: input, shape index: {}]
  %s12 = inlined_call_operand.vmem [shape: f32[9,128], index: 12, kind: input, shape index: {}]
  %s13 = inlined_call_operand.hbm [shape: f32[8,128], index: 13, kind: input, shape index: {}]
  %s14 = inlined_call_operand.hbm [shape: f32[64,128], index: 14, kind: output, shape index: {0}]
  %s15 = inlined_call_operand.hbm [shape: f32[64,128], index: 15, kind: output, shape index: {1}]
  %s16 = inlined_call_operand.hbm [shape: f32[64,128], index: 16, kind: output, shape index: {2}]
  %s17 = inlined_call_operand.hbm [shape: f32[16,128], index: 17, kind: output, shape index: {3}]
  %18 = xla_tuple %s14, %s15, %s16, %s17
  %s19 = sld [smem:[#allocation0]]
  $region106: #{tpu_custom_call.1} parent=0
    _
  %s21 = ssub.s32 1, %s19
  %s22 = scalar_select 0, %s21, %s19
  $region1: #{tpu_custom_call.1} parent=0
    #allocation2 [shape = 'u8[2048]{0}', space=vmem, size = 0x800, scoped, tag = 'input window, operand 6, single buffered']
    #allocation3 [shape = 's32[1]{0}', space=sflag, size = 0x4, scoped, tag = 'scoped memory for tpu_custom_call.1']
    #allocation4 [shape = 's32[1]{0}', space=sflag, size = 0x4, scoped, tag = 'scoped memory for tpu_custom_call.1']
    #allocation5 [shape = 'u8[2048]{0}', space=vmem, size = 0x800, scoped, tag = 'input window, operand 7, single buffered']
    #allocation6 [shape = 's32[1]{0}', space=sflag, size = 0x4, scoped, tag = 'scoped memory for tpu_custom_call.1']
    #allocation7 [shape = 'u8[4096]{0}', space=vmem, size = 0x1000, scoped, tag = 'input window, operand 8, single buffered']
    #allocation8 [shape = 'u8[4096]{0}', space=vmem, size = 0x1000, scoped, tag = 'input window, operand 13, single buffered']
    #allocation9 [shape = 's32[1]{0}', space=sflag, size = 0x4, scoped, tag = 'scoped memory for tpu_custom_call.1']
    #allocation10 [shape = 'u8[32768]{0}', space=vmem, size = 0x8000, scoped, tag = 'output window, operand 0, single buffered']
    #allocation11 [shape = 'u8[32768]{0}', space=vmem, size = 0x8000, scoped, tag = 'output window, operand 1, single buffered']
    #allocation12 [shape = 's32[1]{0}', space=sflag, size = 0x4, scoped, tag = 'scoped memory for tpu_custom_call.1']
    #allocation13 [shape = 'u8[32768]{0}', space=vmem, size = 0x8000, scoped, tag = 'output window, operand 2, single buffered']
    #allocation14 [shape = 'u8[8192]{0}', space=vmem, size = 0x2000, scoped, tag = 'output window, operand 3, single buffered']
    #allocation15 [shape = 's32[1]{0}', space=sflag, size = 0x4, scoped, tag = 'scoped memory for tpu_custom_call.1']
    %23 = vsyncpa [#allocation3], 0
    %24 = vsyncpa [#allocation6], 0
    %25 = vsyncpa [#allocation9], 0
    %26 = vsyncpa [#allocation4], 0
    %27 = vsyncpa [#allocation12], 0
    %28 = vsyncpa [#allocation15], 0
    // Predicated region
    $region2: #{tpu_custom_call.1} parent=1 // pred_check
      _
    $region3: #{tpu_custom_call.1} parent=1 // pred_check_branch
      %30 = sbr.rel (0) target = $region5
    $region4: #{tpu_custom_call.1} parent=1 // pred_region
      _
    $region5: #{tpu_custom_call.1} parent=1 // pred_fallthru
      _
    // Predicated region
    $region6: #{tpu_custom_call.1} parent=1 // pred_check
      _
    $region7: #{tpu_custom_call.1} parent=1 // pred_check_branch
      %32 = sbr.rel (0) target = $region9
    $region8: #{tpu_custom_call.1} parent=1 // pred_region
      _
    $region9: #{tpu_custom_call.1} parent=1 // pred_fallthru
      _
    // Predicated region
    $region10: #{tpu_custom_call.1} parent=1 // pred_check
      _
    $region11: #{tpu_custom_call.1} parent=1 // pred_check_branch
      %34 = sbr.rel (0) target = $region13
    $region12: #{tpu_custom_call.1} parent=1 // pred_region
      _
    $region13: #{tpu_custom_call.1} parent=1 // pred_fallthru
      _
    // Predicated region
    $region14: #{tpu_custom_call.1} parent=1 // pred_check
      _
    $region15: #{tpu_custom_call.1} parent=1 // pred_check_branch
      %36 = sbr.rel (0) target = $region17
    $region16: #{tpu_custom_call.1} parent=1 // pred_region
      _
    $region17: #{tpu_custom_call.1} parent=1 // pred_fallthru
      _
    // Predicated region
    $region18: #{tpu_custom_call.1} parent=1 // pred_check
      _
    $region19: #{tpu_custom_call.1} parent=1 // pred_check_branch
      %38 = sbr.rel (0) target = $region21
    $region20: #{tpu_custom_call.1} parent=1 // pred_region
      _
    $region21: #{tpu_custom_call.1} parent=1 // pred_fallthru
      _
    // Predicated region
    $region22: #{tpu_custom_call.1} parent=1 // pred_check
      _
    $region23: #{tpu_custom_call.1} parent=1 // pred_check_branch
      %40 = sbr.rel (0) target = $region25
    $region24: #{tpu_custom_call.1} parent=1 // pred_region
      _
    $region25: #{tpu_custom_call.1} parent=1 // pred_fallthru
      _
    // Predicated region
    $region26: #{tpu_custom_call.1} parent=1 // pred_check
      _
    $region27: #{tpu_custom_call.1} parent=1 // pred_check_branch
      %42 = sbr.rel (0) target = $region29
    $region28: #{tpu_custom_call.1} parent=1 // pred_region
      %44 = vsyncadd [#allocation3], 0
      %s46 = sshll.u32 %s6, 4
      %s47 = int_to_ptr.hbm [resolvable:$true] %s46
      %s48 = sshll.u32 [#allocation2], 4
      %s49 = int_to_ptr.vmem [resolvable:$true] %s48
      %51 = dma.hbm_to_vmem [thread:$0]  %s47, 64, %s49, [#allocation3]
    $region29: #{tpu_custom_call.1} parent=1 // pred_fallthru
      _
    // Predicated region
    $region30: #{tpu_custom_call.1} parent=1 // pred_check
      _
    $region31: #{tpu_custom_call.1} parent=1 // pred_check_branch
      %53 = sbr.rel (0) target = $region33
    $region32: #{tpu_custom_call.1} parent=1 // pred_region
      %55 = vsyncadd [#allocation6], 0
      %s57 = sshll.u32 %s7, 4
      %s58 = int_to_ptr.hbm [resolvable:$true] %s57
      %s59 = sshll.u32 [#allocation5], 4
      %s60 = int_to_ptr.vmem [resolvable:$true] %s59
      %62 = dma.hbm_to_vmem [thread:$0]  %s58, 64, %s60, [#allocation6]
    $region33: #{tpu_custom_call.1} parent=1 // pred_fallthru
      _
    // Predicated region
    $region34: #{tpu_custom_call.1} parent=1 // pred_check
      _
    $region35: #{tpu_custom_call.1} parent=1 // pred_check_branch
      %64 = sbr.rel (0) target = $region37
    $region36: #{tpu_custom_call.1} parent=1 // pred_region
      %66 = vsyncadd [#allocation6], 0
      %s68 = sshll.u32 %s8, 4
      %s69 = int_to_ptr.hbm [resolvable:$true] %s68
      %s70 = sshll.u32 [#allocation7], 4
      %s71 = int_to_ptr.vmem [resolvable:$true] %s70
      %73 = dma.hbm_to_vmem [thread:$0]  %s69, 128, %s71, [#allocation6]
    $region37: #{tpu_custom_call.1} parent=1 // pred_fallthru
      _
    // Predicated region
    $region38: #{tpu_custom_call.1} parent=1 // pred_check
      _
    $region39: #{tpu_custom_call.1} parent=1 // pred_check_branch
      %75 = sbr.rel (0) target = $region41
    $region40: #{tpu_custom_call.1} parent=1 // pred_region
      _
    $region41: #{tpu_custom_call.1} parent=1 // pred_fallthru
      _
    // Predicated region
    $region42: #{tpu_custom_call.1} parent=1 // pred_check
      _
    $region43: #{tpu_custom_call.1} parent=1 // pred_check_branch
      %77 = sbr.rel (0) target = $region45
    $region44: #{tpu_custom_call.1} parent=1 // pred_region
      _
    $region45: #{tpu_custom_call.1} parent=1 // pred_fallthru
      _
    // Predicated region
    $region46: #{tpu_custom_call.1} parent=1 // pred_check
      _
    $region47: #{tpu_custom_call.1} parent=1 // pred_check_branch
      %79 = sbr.rel (0) target = $region49
    $region48: #{tpu_custom_call.1} parent=1 // pred_region
      _
    $region49: #{tpu_custom_call.1} parent=1 // pred_fallthru
      _
    // Predicated region
    $region50: #{tpu_custom_call.1} parent=1 // pred_check
      _
    $region51: #{tpu_custom_call.1} parent=1 // pred_check_branch
      %81 = sbr.rel (0) target = $region53
    $region52: #{tpu_custom_call.1} parent=1 // pred_region
      _
    $region53: #{tpu_custom_call.1} parent=1 // pred_fallthru
      _
    // Predicated region
    $region54: #{tpu_custom_call.1} parent=1 // pred_check
      _
    $region55: #{tpu_custom_call.1} parent=1 // pred_check_branch
      %83 = sbr.rel (0) target = $region57
    $region56: #{tpu_custom_call.1} parent=1 // pred_region
      %85 = vsyncadd [#allocation9], 0
      %s87 = sshll.u32 %s13, 4
      %s88 = int_to_ptr.hbm [resolvable:$true] %s87
      %s89 = sshll.u32 [#allocation8], 4
      %s90 = int_to_ptr.vmem [resolvable:$true] %s89
      %92 = dma.hbm_to_vmem [thread:$0]  %s88, 128, %s90, [#allocation9]
    $region57: #{tpu_custom_call.1} parent=1 // pred_fallthru
      _
    // Predicated region
    $region58: #{tpu_custom_call.1} parent=1 // pred_check
      _
    $region59: #{tpu_custom_call.1} parent=1 // pred_check_branch
      %94 = sbr.rel (0) target = $region61
    $region60: #{tpu_custom_call.1} parent=1 // pred_region
      %96 = dma.done [#allocation3], 64
    $region61: #{tpu_custom_call.1} parent=1 // pred_fallthru
      _
    // Predicated region
    $region62: #{tpu_custom_call.1} parent=1 // pred_check
      _
    $region63: #{tpu_custom_call.1} parent=1 // pred_check_branch
      %98 = sbr.rel (0) target = $region65
    $region64: #{tpu_custom_call.1} parent=1 // pred_region
      %100 = dma.done [#allocation6], 64
    $region65: #{tpu_custom_call.1} parent=1 // pred_fallthru
      _
    // Predicated region
    $region66: #{tpu_custom_call.1} parent=1 // pred_check
      _
    $region67: #{tpu_custom_call.1} parent=1 // pred_check_branch
      %102 = sbr.rel (0) target = $region69
    $region68: #{tpu_custom_call.1} parent=1 // pred_region
      %104 = dma.done [#allocation6], 128
    $region69: #{tpu_custom_call.1} parent=1 // pred_fallthru
      _
    // Predicated region
    $region70: #{tpu_custom_call.1} parent=1 // pred_check
      _
    $region71: #{tpu_custom_call.1} parent=1 // pred_check_branch
      %106 = sbr.rel (0) target = $region73
    $region72: #{tpu_custom_call.1} parent=1 // pred_region
      %108 = dma.done [#allocation9], 128
    $region73: #{tpu_custom_call.1} parent=1 // pred_fallthru
      _
    %v109 = vld [vmem:[#allocation8] sm:$0xff]
    %v110 = vld [vmem:[%s0] sm:$0xff]
    %v111 = vld [vmem:[%s0 + $0x8] sm:$0xff]
    %v112 = vld [vmem:[%s0 + $0x10] sm:$0xff]
    %v113 = vld [vmem:[%s0 + $0x18] sm:$0xff]
    %v114 = vld [vmem:[%s0 + $0x20] sm:$0xff]
    %v115 = vld [vmem:[%s0 + $0x28] sm:$0xff]
    %v116 = vld [vmem:[%s0 + $0x30] sm:$0xff]
    %v117 = vld [vmem:[%s0 + $0x38] sm:$0xff]
    %v118 = vld [vmem:[%s1] sm:$0xff]
    %v119 = vld [vmem:[%s1 + $0x8] sm:$0xff]
    %v120 = vld [vmem:[%s1 + $0x10] sm:$0xff]
    %v121 = vld [vmem:[%s1 + $0x18] sm:$0xff]
    %v122 = vld [vmem:[%s1 + $0x20] sm:$0xff]
    %v123 = vld [vmem:[%s1 + $0x28] sm:$0xff]
    %v124 = vld [vmem:[%s1 + $0x30] sm:$0xff]
    %v125 = vld [vmem:[%s1 + $0x38] sm:$0xff]
    %v126 = vld [vmem:[%s2] sm:$0x1]
    %v127 = vlaneseq
    %v128 = vand.u32 %v127, 127
    %129 = vset.pattern.permute.xlu0 0
    %130 = vperm.xlu0 %129, %v110
    %v131 = vpop.permute.xlu0 %130
    %132 = vset.pattern.permute.xlu0 0
    %133 = vperm.xlu0 %132, %v111
    %v134 = vpop.permute.xlu0 %133
    %135 = vset.pattern.permute.xlu0 0
    %136 = vperm.xlu0 %135, %v112
    %v137 = vpop.permute.xlu0 %136
    %138 = vset.pattern.permute.xlu0 0
    %139 = vperm.xlu0 %138, %v113
    %v140 = vpop.permute.xlu0 %139
    %141 = vset.pattern.permute.xlu0 0
    %142 = vperm.xlu0 %141, %v114
    %v143 = vpop.permute.xlu0 %142
    %144 = vset.pattern.permute.xlu0 0
    %145 = vperm.xlu0 %144, %v115
    %v146 = vpop.permute.xlu0 %145
    %147 = vset.pattern.permute.xlu0 0
    %148 = vperm.xlu0 %147, %v116
    %v149 = vpop.permute.xlu0 %148
    %150 = vset.pattern.permute.xlu0 0
    %151 = vperm.xlu0 %150, %v117
    %v152 = vpop.permute.xlu0 %151
    %vm153 = vcmp.eq.s32.totalorder %v128, %v131
    %vm154 = vcmp.eq.s32.totalorder %v128, %v134
    %vm155 = vcmp.eq.s32.totalorder %v128, %v137
    %vm156 = vcmp.eq.s32.totalorder %v128, %v140
    %vm157 = vcmp.eq.s32.totalorder %v128, %v143
    %vm158 = vcmp.eq.s32.totalorder %v128, %v146
    %vm159 = vcmp.eq.s32.totalorder %v128, %v149
    %vm160 = vcmp.eq.s32.totalorder %v128, %v152
    %v161 = vsel %vm153, 1, 0
    %v162 = vsel %vm154, 1, 0
    %v163 = vsel %vm155, 1, 0
    %v164 = vsel %vm156, 1, 0
    %v165 = vsel %vm157, 1, 0
    %v166 = vsel %vm158, 1, 0
    %v167 = vsel %vm159, 1, 0
    %v168 = vsel %vm160, 1, 0
    %v169 = vcvt.s32.f32 %v161
    %v170 = vcvt.s32.f32 %v162
    %v171 = vcvt.s32.f32 %v163
    %v172 = vcvt.s32.f32 %v164
    %v173 = vcvt.s32.f32 %v165
    %v174 = vcvt.s32.f32 %v166
    %v175 = vcvt.s32.f32 %v167
    %v176 = vcvt.s32.f32 %v168
    %177 = vset.pattern.permute.xlu0 0
    %178 = vperm.xlu0 %177, %v118
    %v179 = vpop.permute.xlu0 %178
    %180 = vset.pattern.permute.xlu0 0
    %181 = vperm.xlu0 %180, %v119
    %v182 = vpop.permute.xlu0 %181
    %183 = vset.pattern.permute.xlu0 0
    %184 = vperm.xlu0 %183, %v120
    %v185 = vpop.permute.xlu0 %184
    %186 = vset.pattern.permute.xlu0 0
    %187 = vperm.xlu0 %186, %v121
    %v188 = vpop.permute.xlu0 %187
    %189 = vset.pattern.permute.xlu0 0
    %190 = vperm.xlu0 %189, %v122
    %v191 = vpop.permute.xlu0 %190
    %192 = vset.pattern.permute.xlu0 0
    %193 = vperm.xlu0 %192, %v123
    %v194 = vpop.permute.xlu0 %193
    %195 = vset.pattern.permute.xlu0 0
    %196 = vperm.xlu0 %195, %v124
    %v197 = vpop.permute.xlu0 %196
    %198 = vset.pattern.permute.xlu0 0
    %199 = vperm.xlu0 %198, %v125
    %v200 = vpop.permute.xlu0 %199
    %vm201 = vcmp.eq.s32.totalorder %v128, %v179
    %vm202 = vcmp.eq.s32.totalorder %v128, %v182
    %vm203 = vcmp.eq.s32.totalorder %v128, %v185
    %vm204 = vcmp.eq.s32.totalorder %v128, %v188
    %vm205 = vcmp.eq.s32.totalorder %v128, %v191
    %vm206 = vcmp.eq.s32.totalorder %v128, %v194
    %vm207 = vcmp.eq.s32.totalorder %v128, %v197
    %vm208 = vcmp.eq.s32.totalorder %v128, %v200
    %v209 = vsel %vm201, 1, 0
    %v210 = vsel %vm202, 1, 0
    %v211 = vsel %vm203, 1, 0
    %v212 = vsel %vm204, 1, 0
    %v213 = vsel %vm205, 1, 0
    %v214 = vsel %vm206, 1, 0
    %v215 = vsel %vm207, 1, 0
    %v216 = vsel %vm208, 1, 0
    %v217 = vcvt.s32.f32 %v209
    %v218 = vcvt.s32.f32 %v210
    %v219 = vcvt.s32.f32 %v211
    %v220 = vcvt.s32.f32 %v212
    %v221 = vcvt.s32.f32 %v213
    %v222 = vcvt.s32.f32 %v214
    %v223 = vcvt.s32.f32 %v215
    %v224 = vcvt.s32.f32 %v216
    %v225 = vlaneseq
    %v226 = vshrl.u32 %v225, 7
    %v227 = vadd.s32 %v226, 8
    %v228 = vperm.slane %v126, 0
    %vm229 = vcmp.eq.s32.totalorder %v226, %v228
    %vm230 = vcmp.eq.s32.totalorder %v227, %v228
    %v231 = vsel %vm229, 1, 0
    %v232 = vsel %vm230, 1, 0
    %v233 = vcvt.s32.f32 %v231
    %v234 = vcvt.s32.f32 %v232
    %v235 = vld [vmem:[%s3] sm:$0xff]
    %v236 = vld [vmem:[%s3 + $0x8] sm:$0xff]
    %v237 = vld [vmem:[%s3 + $0x10] sm:$0xff]
    %v238 = vld [vmem:[%s3 + $0x18] sm:$0xff]
    %v239 = vld [vmem:[%s3 + $0x20] sm:$0xff]
    %v240 = vld [vmem:[%s3 + $0x28] sm:$0xff]
    %v241 = vld [vmem:[%s3 + $0x30] sm:$0xff]
    %v242 = vld [vmem:[%s3 + $0x38] sm:$0xff]
    %v243 = vmax.f32 %v235, 1e-09
    %v244 = vmax.f32 %v236, 1e-09
    %v245 = vmax.f32 %v237, 1e-09
    %v246 = vmax.f32 %v238, 1e-09
    %v247 = vmax.f32 %v239, 1e-09
    %v248 = vmax.f32 %v240, 1e-09
    %v249 = vmax.f32 %v241, 1e-09
    %v250 = vmax.f32 %v242, 1e-09
    %v251 = vrcp.pop %v243
    %v252 = vrcp.pop %v244
    %v253 = vrcp.pop %v245
    %v254 = vrcp.pop %v246
    %v255 = vrcp.pop %v247
    %v256 = vrcp.pop %v248
    %v257 = vrcp.pop %v249
    %v258 = vrcp.pop %v250
    %260 = vset.pattern.permute.xlu0 0
    %261 = vperm.xlu0 %260, %v235
    %v262 = vpop.permute.xlu0 %261
    %265 = vset.pattern.permute.xlu0 0
    %266 = vperm.xlu0 %265, %v236
    %v267 = vpop.permute.xlu0 %266
    %270 = vset.pattern.permute.xlu0 0
    %271 = vperm.xlu0 %270, %v237
    %v272 = vpop.permute.xlu0 %271
    %275 = vset.pattern.permute.xlu0 0
    %276 = vperm.xlu0 %275, %v238
    %v277 = vpop.permute.xlu0 %276
    %280 = vset.pattern.permute.xlu0 0
    %281 = vperm.xlu0 %280, %v239
    %v282 = vpop.permute.xlu0 %281
    %285 = vset.pattern.permute.xlu0 0
    %286 = vperm.xlu0 %285, %v240
    %v287 = vpop.permute.xlu0 %286
    %290 = vset.pattern.permute.xlu0 0
    %291 = vperm.xlu0 %290, %v241
    %v292 = vpop.permute.xlu0 %291
    %295 = vset.pattern.permute.xlu0 0
    %296 = vperm.xlu0 %295, %v242
    %v297 = vpop.permute.xlu0 %296
    %v299 = vperm.slane %v109, 6
    %v300 = vmul.f32 %v262, %v299
    %v301 = vmul.f32 %v267, %v299
    %v302 = vmul.f32 %v272, %v299
    %v303 = vmul.f32 %v277, %v299
    %v304 = vmul.f32 %v282, %v299
    %v305 = vmul.f32 %v287, %v299
    %v306 = vmul.f32 %v292, %v299
    %v307 = vmul.f32 %v297, %v299
    %v308 = vand.u32 2147483647, %v300
    %vm309 = vcmp.le.f32.partialorder %v308, 0.7853982
    %vm310 = vcmp.lt.s32.totalorder %v300, 0
    %v311 = vand.u32 %v300, 2139095040
    %v312 = vshrl.u32 %v311, 23
    %v313 = vsub.s32 %v312, 127
    %v314 = vand.u32 2147483647, %v300
    %v315 = vand.u32 %v314, 8388607
    %v316 = vor.u32 %v315, 8388608
    %v317 = vsub.s32 0, %v316
    %v318 = vadd.s32 %v313, 1
    %vm319 = vcmp.gt.s32.totalorder %v318, 0
    %v320 = vsel %vm319, %v318, 0
    %v321 = vshrl.u32 %v320, 5
    %v322 = vand.u32 %v320, 31
    %v323 = vsub.s32 32, %v322
    %v324 = vshrl.u32 683565275, %v323
    %v325 = vshll.u32 683565275, %v322
    %v326 = vshrl.u32 2475754826, %v323
    %v327 = vor.u32 %v325, %v326
    %v328 = vshll.u32 2475754826, %v322
    %v329 = vshrl.u32 2131351028, %v323
    %v330 = vor.u32 %v328, %v329
    %v331 = vshll.u32 2131351028, %v322
    %v332 = vshrl.u32 2102212464, %v323
    %v333 = vor.u32 %v331, %v332
    %v334 = vshll.u32 2102212464, %v322
    %v335 = vshrl.u32 920167782, %v323
    %v336 = vor.u32 %v334, %v335
    %v337 = vshll.u32 920167782, %v322
    %v338 = vshrl.u32 1326507024, %v323
    %v339 = vor.u32 %v337, %v338
    %vm340 = vcmp.lt.s32.totalorder %v321, 1
    %vm341 = vcmp.lt.s32.totalorder %v321, 2
    %vm342 = vcmp.lt.s32.totalorder %v321, 3
    %vm343 = vcmp.lt.s32.totalorder %v321, 4
    %v344 = vsel %vm340, %v324, %v327
    %v345 = vsel %vm343, %v333, 2102212464
    %v346 = vsel %vm342, %v330, %v345
    %v347 = vsel %vm341, %v344, %v346
    %v348 = vsel %vm340, %v327, %v330
    %v349 = vsel %vm343, %v336, 920167782
    %v350 = vsel %vm342, %v333, %v349
    %v351 = vsel %vm341, %v348, %v350
    %v352 = vsel %vm340, %v330, %v333
    %v353 = vsel %vm343, %v339, 1326507024
    %v354 = vsel %vm342, %v336, %v353
    %v355 = vsel %vm341, %v352, %v354
    %v356 = vshll.u32 %v316, 8
    %v357 = vand.u32 %v356, 65535
    %v358 = vshrl.u32 %v356, 16
    %v359 = vand.u32 %v355, 65535
    %v360 = vshrl.u32 %v355, 16
    %v361 = vmul.u32 %v357, %v359
    %v362 = vmul.u32 %v357, %v360
    %v363 = vmul.u32 %v358, %v359
    %v364 = vmul.u32 %v358, %v360
    %v365 = vshll.u32 %v362, 16
    %v366 = vshrl.u32 %v362, 16
    %v367 = vshll.u32 %v363, 16
    %v368 = vshrl.u32 %v363, 16
    %vm369 = vc.u32 %v361, %v365
    %v370 = vsel %vm369, 1, 0
    %v371 = vadd.s32 %v361, %v365
    %v372 = vadd.s32 %v364, %v370
    %vm373 = vc.u32 %v371, %v367
    %v374 = vsel %vm373, 1, 0
    %v375 = vadd.s32 %v371, %v367
    %v376 = vadd.s32 %v372, %v374
    %v377 = vadd.s32 %v376, %v366
    %v378 = vadd.s32 %v377, %v368
    %v379 = vand.u32 %v356, 65535
    %v380 = vshrl.u32 %v356, 16
    %v381 = vand.u32 %v351, 65535
    %v382 = vshrl.u32 %v351, 16
    %v383 = vmul.u32 %v379, %v381
    %v384 = vmul.u32 %v379, %v382
    %v385 = vmul.u32 %v380, %v381
    %v386 = vmul.u32 %v380, %v382
    %v387 = vshll.u32 %v384, 16
    %v388 = vshrl.u32 %v384, 16
    %v389 = vshll.u32 %v385, 16
    %v390 = vshrl.u32 %v385, 16
    %vm391 = vc.u32 %v383, %v387
    %v392 = vsel %vm391, 1, 0
    %v393 = vadd.s32 %v383, %v387
    %v394 = vadd.s32 %v386, %v392
    %vm395 = vc.u32 %v393, %v389
    %v396 = vsel %vm395, 1, 0
    %v397 = vadd.s32 %v393, %v389
    %v398 = vadd.s32 %v394, %v396
    %v399 = vadd.s32 %v398, %v388
    %v400 = vadd.s32 %v399, %v390
    %v401 = vmul.u32 %v356, %v347
    %v402 = vadd.s32 %v378, %v397
    %vm403 = vc.u32 %v378, %v397
    %v404 = vadd.s32 %v400, 1
    %v405 = vsel %vm403, %v404, %v400
    %v406 = vadd.s32 %v401, %v405
    %v407 = vadd.s32 %v406, 536870912
    %v408 = vshrl.u32 %v407, 30
    %v409 = vshll.u32 %v408, 30
    %v410 = vsub.s32 %v406, %v409
    %vm411 = vcmp.lt.s32.totalorder %v410, 0
    %v412 = vsub.s32 0, %v410
    %v413 = vsel %vm411, %v412, %v410
    %v414 = vclz %v413
    %v415 = vsub.s32 %v414, 2
    %vm416 = vcmp.gt.s32.totalorder 0, %v415
    %v417 = vsel %vm416, 0, %v415
    %v418 = vsub.s32 32, %v417
    %v419 = vshll.u32 %v410, %v417
    %v420 = vshrl.u32 %v402, %v418
    %v421 = vor.u32 %v419, %v420
    %v422 = vsub.s32 4294967266, %v417
    %v423 = vadd.s32 %v422, 127
    %v424 = vshll.u32 %v423, 23
    %v425 = vor.u32 4788187, %v424
    %v426 = vand.u32 2147483647, %v425
    %v428 = vcvt.s32.f32 %v421
    %v429 = vmul.f32 %v428, %v426
    %v430 = vxor.u32 %v429, 2147483648
    %v431 = vsel %vm310, %v430, %v429
    %v432 = vsub.s32 4, %v408
    %v433 = vsel %vm310, %v432, %v408
    %v434 = vsel %vm309, %v300, %v431
    %v435 = vsel %vm309, 0, %v433
    %v436 = vmul.f32 %v434, %v434
    %v437 = vmul.f32 %v436, -0.001358992
    %v438 = vadd.f32 %v437, 0.041655596
    %v439 = vmul.f32 %v436, %v438
    %v440 = vadd.f32 %v439, -0.4999988
    %v441 = vmul.f32 %v436, %v440
    %v442 = vadd.f32 1.0, %v441
    %v443 = vmul.f32 %v434, %v434
    %v444 = vmul.f32 %v443, -0.00019511016
    %v445 = vadd.f32 %v444, 0.008332121
    %v446 = vmul.f32 %v443, %v445
    %v447 = vadd.f32 %v446, -0.16666654
    %v448 = vmul.f32 %v443, %v447
    %v449 = vadd.f32 %v448, 1.0
    %v450 = vmul.f32 %v449, %v434
    %vm451 = vweird.f32 %v300
    %v452 = vadd.s32 %v435, 3
    %v453 = vand.u32 %v452, 3
    %vm454 = vcmp.lt.s32.totalorder %v453, 2
    %vm455 = vcmp.eq.s32.totalorder %v453, 0
    %v456 = vxor.u32 %v450, 2147483648
    %v457 = vsel %vm455, %v442, %v456
    %vm458 = vcmp.eq.s32.totalorder %v453, 2
    %v459 = vxor.u32 %v442, 2147483648
    %v460 = vsel %vm458, %v459, %v450
    %v461 = vsel %vm454, %v457, %v460
    %v462 = vsel %vm451, nan, %v461
    %v463 = vand.u32 2147483647, %v301
    %vm464 = vcmp.le.f32.partialorder %v463, 0.7853982
    %vm465 = vcmp.lt.s32.totalorder %v301, 0
    %v466 = vand.u32 %v301, 2139095040
    %v467 = vshrl.u32 %v466, 23
    %v468 = vsub.s32 %v467, 127
    %v469 = vand.u32 2147483647, %v301
    %v470 = vand.u32 %v469, 8388607
    %v471 = vor.u32 %v470, 8388608
    %v472 = vsub.s32 0, %v471
    %v473 = vadd.s32 %v468, 1
    %vm474 = vcmp.gt.s32.totalorder %v473, 0
    %v475 = vsel %vm474, %v473, 0
    %v476 = vshrl.u32 %v475, 5
    %v477 = vand.u32 %v475, 31
    %v478 = vsub.s32 32, %v477
    %v479 = vshrl.u32 683565275, %v478
    %v480 = vshll.u32 683565275, %v477
    %v481 = vshrl.u32 2475754826, %v478
    %v482 = vor.u32 %v480, %v481
    %v483 = vshll.u32 2475754826, %v477
    %v484 = vshrl.u32 2131351028, %v478
    %v485 = vor.u32 %v483, %v484
    %v486 = vshll.u32 2131351028, %v477
    %v487 = vshrl.u32 2102212464, %v478
    %v488 = vor.u32 %v486, %v487
    %v489 = vshll.u32 2102212464, %v477
    %v490 = vshrl.u32 920167782, %v478
    %v491 = vor.u32 %v489, %v490
    %v492 = vshll.u32 920167782, %v477
    %v493 = vshrl.u32 1326507024, %v478
    %v494 = vor.u32 %v492, %v493
    %vm495 = vcmp.lt.s32.totalorder %v476, 1
    %vm496 = vcmp.lt.s32.totalorder %v476, 2
    %vm497 = vcmp.lt.s32.totalorder %v476, 3
    %vm498 = vcmp.lt.s32.totalorder %v476, 4
    %v499 = vsel %vm495, %v479, %v482
    %v500 = vsel %vm498, %v488, 2102212464
    %v501 = vsel %vm497, %v485, %v500
    %v502 = vsel %vm496, %v499, %v501
    %v503 = vsel %vm495, %v482, %v485
    %v504 = vsel %vm498, %v491, 920167782
    %v505 = vsel %vm497, %v488, %v504
    %v506 = vsel %vm496, %v503, %v505
    %v507 = vsel %vm495, %v485, %v488
    %v508 = vsel %vm498, %v494, 1326507024
    %v509 = vsel %vm497, %v491, %v508
    %v510 = vsel %vm496, %v507, %v509
    %v511 = vshll.u32 %v471, 8
    %v512 = vand.u32 %v511, 65535
    %v513 = vshrl.u32 %v511, 16
    %v514 = vand.u32 %v510, 65535
    %v515 = vshrl.u32 %v510, 16
    %v516 = vmul.u32 %v512, %v514
    %v517 = vmul.u32 %v512, %v515
    %v518 = vmul.u32 %v513, %v514
    %v519 = vmul.u32 %v513, %v515
    %v520 = vshll.u32 %v517, 16
    %v521 = vshrl.u32 %v517, 16
    %v522 = vshll.u32 %v518, 16
    %v523 = vshrl.u32 %v518, 16
    %vm524 = vc.u32 %v516, %v520
    %v525 = vsel %vm524, 1, 0
    %v526 = vadd.s32 %v516, %v520
    %v527 = vadd.s32 %v519, %v525
    %vm528 = vc.u32 %v526, %v522
    %v529 = vsel %vm528, 1, 0
    %v530 = vadd.s32 %v526, %v522
    %v531 = vadd.s32 %v527, %v529
    %v532 = vadd.s32 %v531, %v521
    %v533 = vadd.s32 %v532, %v523
    %v534 = vand.u32 %v511, 65535
    %v535 = vshrl.u32 %v511, 16
    %v536 = vand.u32 %v506, 65535
    %v537 = vshrl.u32 %v506, 16
    %v538 = vmul.u32 %v534, %v536
    %v539 = vmul.u32 %v534, %v537
    %v540 = vmul.u32 %v535, %v536
    %v541 = vmul.u32 %v535, %v537
    %v542 = vshll.u32 %v539, 16
    %v543 = vshrl.u32 %v539, 16
    %v544 = vshll.u32 %v540, 16
    %v545 = vshrl.u32 %v540, 16
    %vm546 = vc.u32 %v538, %v542
    %v547 = vsel %vm546, 1, 0
    %v548 = vadd.s32 %v538, %v542
    %v549 = vadd.s32 %v541, %v547
    %vm550 = vc.u32 %v548, %v544
    %v551 = vsel %vm550, 1, 0
    %v552 = vadd.s32 %v548, %v544
    %v553 = vadd.s32 %v549, %v551
    %v554 = vadd.s32 %v553, %v543
    %v555 = vadd.s32 %v554, %v545
    %v556 = vmul.u32 %v511, %v502
    %v557 = vadd.s32 %v533, %v552
    %vm558 = vc.u32 %v533, %v552
    %v559 = vadd.s32 %v555, 1
    %v560 = vsel %vm558, %v559, %v555
    %v561 = vadd.s32 %v556, %v560
    %v562 = vadd.s32 %v561, 536870912
    %v563 = vshrl.u32 %v562, 30
    %v564 = vshll.u32 %v563, 30
    %v565 = vsub.s32 %v561, %v564
    %vm566 = vcmp.lt.s32.totalorder %v565, 0
    %v567 = vsub.s32 0, %v565
    %v568 = vsel %vm566, %v567, %v565
    %v569 = vclz %v568
    %v570 = vsub.s32 %v569, 2
    %vm571 = vcmp.gt.s32.totalorder 0, %v570
    %v572 = vsel %vm571, 0, %v570
    %v573 = vsub.s32 32, %v572
    %v574 = vshll.u32 %v565, %v572
    %v575 = vshrl.u32 %v557, %v573
    %v576 = vor.u32 %v574, %v575
    %v577 = vsub.s32 4294967266, %v572
    %v578 = vadd.s32 %v577, 127
    %v579 = vshll.u32 %v578, 23
    %v580 = vor.u32 4788187, %v579
    %v581 = vand.u32 2147483647, %v580
    %v583 = vcvt.s32.f32 %v576
    %v584 = vmul.f32 %v583, %v581
    %v585 = vxor.u32 %v584, 2147483648
    %v586 = vsel %vm465, %v585, %v584
    %v587 = vsub.s32 4, %v563
    %v588 = vsel %vm465, %v587, %v563
    %v589 = vsel %vm464, %v301, %v586
    %v590 = vsel %vm464, 0, %v588
    %v591 = vmul.f32 %v589, %v589
    %v592 = vmul.f32 %v591, -0.001358992
    %v593 = vadd.f32 %v592, 0.041655596
    %v594 = vmul.f32 %v591, %v593
    %v595 = vadd.f32 %v594, -0.4999988
    %v596 = vmul.f32 %v591, %v595
    %v597 = vadd.f32 1.0, %v596
    %v598 = vmul.f32 %v589, %v589
    %v599 = vmul.f32 %v598, -0.00019511016
    %v600 = vadd.f32 %v599, 0.008332121
    %v601 = vmul.f32 %v598, %v600
    %v602 = vadd.f32 %v601, -0.16666654
    %v603 = vmul.f32 %v598, %v602
    %v604 = vadd.f32 %v603, 1.0
    %v605 = vmul.f32 %v604, %v589
    %vm606 = vweird.f32 %v301
    %v607 = vadd.s32 %v590, 3
    %v608 = vand.u32 %v607, 3
    %vm609 = vcmp.lt.s32.totalorder %v608, 2
    %vm610 = vcmp.eq.s32.totalorder %v608, 0
    %v611 = vxor.u32 %v605, 2147483648
    %v612 = vsel %vm610, %v597, %v611
    %vm613 = vcmp.eq.s32.totalorder %v608, 2
    %v614 = vxor.u32 %v597, 2147483648
    %v615 = vsel %vm613, %v614, %v605
    %v616 = vsel %vm609, %v612, %v615
    %v617 = vsel %vm606, nan, %v616
    %v618 = vand.u32 2147483647, %v302
    %vm619 = vcmp.le.f32.partialorder %v618, 0.7853982
    %vm620 = vcmp.lt.s32.totalorder %v302, 0
    %v621 = vand.u32 %v302, 2139095040
    %v622 = vshrl.u32 %v621, 23
    %v623 = vsub.s32 %v622, 127
    %v624 = vand.u32 2147483647, %v302
    %v625 = vand.u32 %v624, 8388607
    %v626 = vor.u32 %v625, 8388608
    %v627 = vsub.s32 0, %v626
    %v628 = vadd.s32 %v623, 1
    %vm629 = vcmp.gt.s32.totalorder %v628, 0
    %v630 = vsel %vm629, %v628, 0
    %v631 = vshrl.u32 %v630, 5
    %v632 = vand.u32 %v630, 31
    %v633 = vsub.s32 32, %v632
    %v634 = vshrl.u32 683565275, %v633
    %v635 = vshll.u32 683565275, %v632
    %v636 = vshrl.u32 2475754826, %v633
    %v637 = vor.u32 %v635, %v636
    %v638 = vshll.u32 2475754826, %v632
    %v639 = vshrl.u32 2131351028, %v633
    %v640 = vor.u32 %v638, %v639
    %v641 = vshll.u32 2131351028, %v632
    %v642 = vshrl.u32 2102212464, %v633
    %v643 = vor.u32 %v641, %v642
    %v644 = vshll.u32 2102212464, %v632
    %v645 = vshrl.u32 920167782, %v633
    %v646 = vor.u32 %v644, %v645
    %v647 = vshll.u32 920167782, %v632
    %v648 = vshrl.u32 1326507024, %v633
    %v649 = vor.u32 %v647, %v648
    %vm650 = vcmp.lt.s32.totalorder %v631, 1
    %vm651 = vcmp.lt.s32.totalorder %v631, 2
    %vm652 = vcmp.lt.s32.totalorder %v631, 3
    %vm653 = vcmp.lt.s32.totalorder %v631, 4
    %v654 = vsel %vm650, %v634, %v637
    %v655 = vsel %vm653, %v643, 2102212464
    %v656 = vsel %vm652, %v640, %v655
    %v657 = vsel %vm651, %v654, %v656
    %v658 = vsel %vm650, %v637, %v640
    %v659 = vsel %vm653, %v646, 920167782
    %v660 = vsel %vm652, %v643, %v659
    %v661 = vsel %vm651, %v658, %v660
    %v662 = vsel %vm650, %v640, %v643
    %v663 = vsel %vm653, %v649, 1326507024
    %v664 = vsel %vm652, %v646, %v663
    %v665 = vsel %vm651, %v662, %v664
    %v666 = vshll.u32 %v626, 8
    %v667 = vand.u32 %v666, 65535
    %v668 = vshrl.u32 %v666, 16
    %v669 = vand.u32 %v665, 65535
    %v670 = vshrl.u32 %v665, 16
    %v671 = vmul.u32 %v667, %v669
    %v672 = vmul.u32 %v667, %v670
    %v673 = vmul.u32 %v668, %v669
    %v674 = vmul.u32 %v668, %v670
    %v675 = vshll.u32 %v672, 16
    %v676 = vshrl.u32 %v672, 16
    %v677 = vshll.u32 %v673, 16
    %v678 = vshrl.u32 %v673, 16
    %vm679 = vc.u32 %v671, %v675
    %v680 = vsel %vm679, 1, 0
    %v681 = vadd.s32 %v671, %v675
    %v682 = vadd.s32 %v674, %v680
    %vm683 = vc.u32 %v681, %v677
    %v684 = vsel %vm683, 1, 0
    %v685 = vadd.s32 %v681, %v677
    %v686 = vadd.s32 %v682, %v684
    %v687 = vadd.s32 %v686, %v676
    %v688 = vadd.s32 %v687, %v678
    %v689 = vand.u32 %v666, 65535
    %v690 = vshrl.u32 %v666, 16
    %v691 = vand.u32 %v661, 65535
    %v692 = vshrl.u32 %v661, 16
    %v693 = vmul.u32 %v689, %v691
    %v694 = vmul.u32 %v689, %v692
    %v695 = vmul.u32 %v690, %v691
    %v696 = vmul.u32 %v690, %v692
    %v697 = vshll.u32 %v694, 16
    %v698 = vshrl.u32 %v694, 16
    %v699 = vshll.u32 %v695, 16
    %v700 = vshrl.u32 %v695, 16
    %vm701 = vc.u32 %v693, %v697
    %v702 = vsel %vm701, 1, 0
    %v703 = vadd.s32 %v693, %v697
    %v704 = vadd.s32 %v696, %v702
    %vm705 = vc.u32 %v703, %v699
    %v706 = vsel %vm705, 1, 0
    %v707 = vadd.s32 %v703, %v699
    %v708 = vadd.s32 %v704, %v706
    %v709 = vadd.s32 %v708, %v698
    %v710 = vadd.s32 %v709, %v700
    %v711 = vmul.u32 %v666, %v657
    %v712 = vadd.s32 %v688, %v707
    %vm713 = vc.u32 %v688, %v707
    %v714 = vadd.s32 %v710, 1
    %v715 = vsel %vm713, %v714, %v710
    %v716 = vadd.s32 %v711, %v715
    %v717 = vadd.s32 %v716, 536870912
    %v718 = vshrl.u32 %v717, 30
    %v719 = vshll.u32 %v718, 30
    %v720 = vsub.s32 %v716, %v719
    %vm721 = vcmp.lt.s32.totalorder %v720, 0
    %v722 = vsub.s32 0, %v720
    %v723 = vsel %vm721, %v722, %v720
    %v724 = vclz %v723
    %v725 = vsub.s32 %v724, 2
    %vm726 = vcmp.gt.s32.totalorder 0, %v725
    %v727 = vsel %vm726, 0, %v725
    %v728 = vsub.s32 32, %v727
    %v729 = vshll.u32 %v720, %v727
    %v730 = vshrl.u32 %v712, %v728
    %v731 = vor.u32 %v729, %v730
    %v732 = vsub.s32 4294967266, %v727
    %v733 = vadd.s32 %v732, 127
    %v734 = vshll.u32 %v733, 23
    %v735 = vor.u32 4788187, %v734
    %v736 = vand.u32 2147483647, %v735
    %v738 = vcvt.s32.f32 %v731
    %v739 = vmul.f32 %v738, %v736
    %v740 = vxor.u32 %v739, 2147483648
    %v741 = vsel %vm620, %v740, %v739
    %v742 = vsub.s32 4, %v718
    %v743 = vsel %vm620, %v742, %v718
    %v744 = vsel %vm619, %v302, %v741
    %v745 = vsel %vm619, 0, %v743
    %v746 = vmul.f32 %v744, %v744
    %v747 = vmul.f32 %v746, -0.001358992
    %v748 = vadd.f32 %v747, 0.041655596
    %v749 = vmul.f32 %v746, %v748
    %v750 = vadd.f32 %v749, -0.4999988
    %v751 = vmul.f32 %v746, %v750
    %v752 = vadd.f32 1.0, %v751
    %v753 = vmul.f32 %v744, %v744
    %v754 = vmul.f32 %v753, -0.00019511016
    %v755 = vadd.f32 %v754, 0.008332121
    %v756 = vmul.f32 %v753, %v755
    %v757 = vadd.f32 %v756, -0.16666654
    %v758 = vmul.f32 %v753, %v757
    %v759 = vadd.f32 %v758, 1.0
    %v760 = vmul.f32 %v759, %v744
    %vm761 = vweird.f32 %v302
    %v762 = vadd.s32 %v745, 3
    %v763 = vand.u32 %v762, 3
    %vm764 = vcmp.lt.s32.totalorder %v763, 2
    %vm765 = vcmp.eq.s32.totalorder %v763, 0
    %v766 = vxor.u32 %v760, 2147483648
    %v767 = vsel %vm765, %v752, %v766
    %vm768 = vcmp.eq.s32.totalorder %v763, 2
    %v769 = vxor.u32 %v752, 2147483648
    %v770 = vsel %vm768, %v769, %v760
    %v771 = vsel %vm764, %v767, %v770
    %v772 = vsel %vm761, nan, %v771
    %v773 = vand.u32 2147483647, %v303
    %vm774 = vcmp.le.f32.partialorder %v773, 0.7853982
    %vm775 = vcmp.lt.s32.totalorder %v303, 0
    %v776 = vand.u32 %v303, 2139095040
    %v777 = vshrl.u32 %v776, 23
    %v778 = vsub.s32 %v777, 127
    %v779 = vand.u32 2147483647, %v303
    %v780 = vand.u32 %v779, 8388607
    %v781 = vor.u32 %v780, 8388608
    %v782 = vsub.s32 0, %v781
    %v783 = vadd.s32 %v778, 1
    %vm784 = vcmp.gt.s32.totalorder %v783, 0
    %v785 = vsel %vm784, %v783, 0
    %v786 = vshrl.u32 %v785, 5
    %v787 = vand.u32 %v785, 31
    %v788 = vsub.s32 32, %v787
    %v789 = vshrl.u32 683565275, %v788
    %v790 = vshll.u32 683565275, %v787
    %v791 = vshrl.u32 2475754826, %v788
    %v792 = vor.u32 %v790, %v791
    %v793 = vshll.u32 2475754826, %v787
    %v794 = vshrl.u32 2131351028, %v788
    %v795 = vor.u32 %v793, %v794
    %v796 = vshll.u32 2131351028, %v787
    %v797 = vshrl.u32 2102212464, %v788
    %v798 = vor.u32 %v796, %v797
    %v799 = vshll.u32 2102212464, %v787
    %v800 = vshrl.u32 920167782, %v788
    %v801 = vor.u32 %v799, %v800
    %v802 = vshll.u32 920167782, %v787
    %v803 = vshrl.u32 1326507024, %v788
    %v804 = vor.u32 %v802, %v803
    %vm805 = vcmp.lt.s32.totalorder %v786, 1
    %vm806 = vcmp.lt.s32.totalorder %v786, 2
    %vm807 = vcmp.lt.s32.totalorder %v786, 3
    %vm808 = vcmp.lt.s32.totalorder %v786, 4
    %v809 = vsel %vm805, %v789, %v792
    %v810 = vsel %vm808, %v798, 2102212464
    %v811 = vsel %vm807, %v795, %v810
    %v812 = vsel %vm806, %v809, %v811
    %v813 = vsel %vm805, %v792, %v795
    %v814 = vsel %vm808, %v801, 920167782
    %v815 = vsel %vm807, %v798, %v814
    %v816 = vsel %vm806, %v813, %v815
    %v817 = vsel %vm805, %v795, %v798
    %v818 = vsel %vm808, %v804, 1326507024
    %v819 = vsel %vm807, %v801, %v818
    %v820 = vsel %vm806, %v817, %v819
    %v821 = vshll.u32 %v781, 8
    %v822 = vand.u32 %v821, 65535
    %v823 = vshrl.u32 %v821, 16
    %v824 = vand.u32 %v820, 65535
    %v825 = vshrl.u32 %v820, 16
    %v826 = vmul.u32 %v822, %v824
    %v827 = vmul.u32 %v822, %v825
    %v828 = vmul.u32 %v823, %v824
    %v829 = vmul.u32 %v823, %v825
    %v830 = vshll.u32 %v827, 16
    %v831 = vshrl.u32 %v827, 16
    %v832 = vshll.u32 %v828, 16
    %v833 = vshrl.u32 %v828, 16
    %vm834 = vc.u32 %v826, %v830
    %v835 = vsel %vm834, 1, 0
    %v836 = vadd.s32 %v826, %v830
    %v837 = vadd.s32 %v829, %v835
    %vm838 = vc.u32 %v836, %v832
    %v839 = vsel %vm838, 1, 0
    %v840 = vadd.s32 %v836, %v832
    %v841 = vadd.s32 %v837, %v839
    %v842 = vadd.s32 %v841, %v831
    %v843 = vadd.s32 %v842, %v833
    %v844 = vand.u32 %v821, 65535
    %v845 = vshrl.u32 %v821, 16
    %v846 = vand.u32 %v816, 65535
    %v847 = vshrl.u32 %v816, 16
    %v848 = vmul.u32 %v844, %v846
    %v849 = vmul.u32 %v844, %v847
    %v850 = vmul.u32 %v845, %v846
    %v851 = vmul.u32 %v845, %v847
    %v852 = vshll.u32 %v849, 16
    %v853 = vshrl.u32 %v849, 16
    %v854 = vshll.u32 %v850, 16
    %v855 = vshrl.u32 %v850, 16
    %vm856 = vc.u32 %v848, %v852
    %v857 = vsel %vm856, 1, 0
    %v858 = vadd.s32 %v848, %v852
    %v859 = vadd.s32 %v851, %v857
    %vm860 = vc.u32 %v858, %v854
    %v861 = vsel %vm860, 1, 0
    %v862 = vadd.s32 %v858, %v854
    %v863 = vadd.s32 %v859, %v861
    %v864 = vadd.s32 %v863, %v853
    %v865 = vadd.s32 %v864, %v855
    %v866 = vmul.u32 %v821, %v812
    %v867 = vadd.s32 %v843, %v862
    %vm868 = vc.u32 %v843, %v862
    %v869 = vadd.s32 %v865, 1
    %v870 = vsel %vm868, %v869, %v865
    %v871 = vadd.s32 %v866, %v870
    %v872 = vadd.s32 %v871, 536870912
    %v873 = vshrl.u32 %v872, 30
    %v874 = vshll.u32 %v873, 30
    %v875 = vsub.s32 %v871, %v874
    %vm876 = vcmp.lt.s32.totalorder %v875, 0
    %v877 = vsub.s32 0, %v875
    %v878 = vsel %vm876, %v877, %v875
    %v879 = vclz %v878
    %v880 = vsub.s32 %v879, 2
    %vm881 = vcmp.gt.s32.totalorder 0, %v880
    %v882 = vsel %vm881, 0, %v880
    %v883 = vsub.s32 32, %v882
    %v884 = vshll.u32 %v875, %v882
    %v885 = vshrl.u32 %v867, %v883
    %v886 = vor.u32 %v884, %v885
    %v887 = vsub.s32 4294967266, %v882
    %v888 = vadd.s32 %v887, 127
    %v889 = vshll.u32 %v888, 23
    %v890 = vor.u32 4788187, %v889
    %v891 = vand.u32 2147483647, %v890
    %v893 = vcvt.s32.f32 %v886
    %v894 = vmul.f32 %v893, %v891
    %v895 = vxor.u32 %v894, 2147483648
    %v896 = vsel %vm775, %v895, %v894
    %v897 = vsub.s32 4, %v873
    %v898 = vsel %vm775, %v897, %v873
    %v899 = vsel %vm774, %v303, %v896
    %v900 = vsel %vm774, 0, %v898
    %v901 = vmul.f32 %v899, %v899
    %v902 = vmul.f32 %v901, -0.001358992
    %v903 = vadd.f32 %v902, 0.041655596
    %v904 = vmul.f32 %v901, %v903
    %v905 = vadd.f32 %v904, -0.4999988
    %v906 = vmul.f32 %v901, %v905
    %v907 = vadd.f32 1.0, %v906
    %v908 = vmul.f32 %v899, %v899
    %v909 = vmul.f32 %v908, -0.00019511016
    %v910 = vadd.f32 %v909, 0.008332121
    %v911 = vmul.f32 %v908, %v910
    %v912 = vadd.f32 %v911, -0.16666654
    %v913 = vmul.f32 %v908, %v912
    %v914 = vadd.f32 %v913, 1.0
    %v915 = vmul.f32 %v914, %v899
    %vm916 = vweird.f32 %v303
    %v917 = vadd.s32 %v900, 3
    %v918 = vand.u32 %v917, 3
    %vm919 = vcmp.lt.s32.totalorder %v918, 2
    %vm920 = vcmp.eq.s32.totalorder %v918, 0
    %v921 = vxor.u32 %v915, 2147483648
    %v922 = vsel %vm920, %v907, %v921
    %vm923 = vcmp.eq.s32.totalorder %v918, 2
    %v924 = vxor.u32 %v907, 2147483648
    %v925 = vsel %vm923, %v924, %v915
    %v926 = vsel %vm919, %v922, %v925
    %v927 = vsel %vm916, nan, %v926
    %v928 = vand.u32 2147483647, %v304
    %vm929 = vcmp.le.f32.partialorder %v928, 0.7853982
    %vm930 = vcmp.lt.s32.totalorder %v304, 0
    %v931 = vand.u32 %v304, 2139095040
    %v932 = vshrl.u32 %v931, 23
    %v933 = vsub.s32 %v932, 127
    %v934 = vand.u32 2147483647, %v304
    %v935 = vand.u32 %v934, 8388607
    %v936 = vor.u32 %v935, 8388608
    %v937 = vsub.s32 0, %v936
    %v938 = vadd.s32 %v933, 1
    %vm939 = vcmp.gt.s32.totalorder %v938, 0
    %v940 = vsel %vm939, %v938, 0
    %v941 = vshrl.u32 %v940, 5
    %v942 = vand.u32 %v940, 31
    %v943 = vsub.s32 32, %v942
    %v944 = vshrl.u32 683565275, %v943
    %v945 = vshll.u32 683565275, %v942
    %v946 = vshrl.u32 2475754826, %v943
    %v947 = vor.u32 %v945, %v946
    %v948 = vshll.u32 2475754826, %v942
    %v949 = vshrl.u32 2131351028, %v943
    %v950 = vor.u32 %v948, %v949
    %v951 = vshll.u32 2131351028, %v942
    %v952 = vshrl.u32 2102212464, %v943
    %v953 = vor.u32 %v951, %v952
    %v954 = vshll.u32 2102212464, %v942
    %v955 = vshrl.u32 920167782, %v943
    %v956 = vor.u32 %v954, %v955
    %v957 = vshll.u32 920167782, %v942
    %v958 = vshrl.u32 1326507024, %v943
    %v959 = vor.u32 %v957, %v958
    %vm960 = vcmp.lt.s32.totalorder %v941, 1
    %vm961 = vcmp.lt.s32.totalorder %v941, 2
    %vm962 = vcmp.lt.s32.totalorder %v941, 3
    %vm963 = vcmp.lt.s32.totalorder %v941, 4
    %v964 = vsel %vm960, %v944, %v947
    %v965 = vsel %vm963, %v953, 2102212464
    %v966 = vsel %vm962, %v950, %v965
    %v967 = vsel %vm961, %v964, %v966
    %v968 = vsel %vm960, %v947, %v950
    %v969 = vsel %vm963, %v956, 920167782
    %v970 = vsel %vm962, %v953, %v969
    %v971 = vsel %vm961, %v968, %v970
    %v972 = vsel %vm960, %v950, %v953
    %v973 = vsel %vm963, %v959, 1326507024
    %v974 = vsel %vm962, %v956, %v973
    %v975 = vsel %vm961, %v972, %v974
    %v976 = vshll.u32 %v936, 8
    %v977 = vand.u32 %v976, 65535
    %v978 = vshrl.u32 %v976, 16
    %v979 = vand.u32 %v975, 65535
    %v980 = vshrl.u32 %v975, 16
    %v981 = vmul.u32 %v977, %v979
    %v982 = vmul.u32 %v977, %v980
    %v983 = vmul.u32 %v978, %v979
    %v984 = vmul.u32 %v978, %v980
    %v985 = vshll.u32 %v982, 16
    %v986 = vshrl.u32 %v982, 16
    %v987 = vshll.u32 %v983, 16
    %v988 = vshrl.u32 %v983, 16
    %vm989 = vc.u32 %v981, %v985
    %v990 = vsel %vm989, 1, 0
    %v991 = vadd.s32 %v981, %v985
    %v992 = vadd.s32 %v984, %v990
    %vm993 = vc.u32 %v991, %v987
    %v994 = vsel %vm993, 1, 0
    %v995 = vadd.s32 %v991, %v987
    %v996 = vadd.s32 %v992, %v994
    %v997 = vadd.s32 %v996, %v986
    %v998 = vadd.s32 %v997, %v988
    %v999 = vand.u32 %v976, 65535
    %v1000 = vshrl.u32 %v976, 16
    %v1001 = vand.u32 %v971, 65535
    %v1002 = vshrl.u32 %v971, 16
    %v1003 = vmul.u32 %v999, %v1001
    %v1004 = vmul.u32 %v999, %v1002
    %v1005 = vmul.u32 %v1000, %v1001
    %v1006 = vmul.u32 %v1000, %v1002
    %v1007 = vshll.u32 %v1004, 16
    %v1008 = vshrl.u32 %v1004, 16
    %v1009 = vshll.u32 %v1005, 16
    %v1010 = vshrl.u32 %v1005, 16
    %vm1011 = vc.u32 %v1003, %v1007
    %v1012 = vsel %vm1011, 1, 0
    %v1013 = vadd.s32 %v1003, %v1007
    %v1014 = vadd.s32 %v1006, %v1012
    %vm1015 = vc.u32 %v1013, %v1009
    %v1016 = vsel %vm1015, 1, 0
    %v1017 = vadd.s32 %v1013, %v1009
    %v1018 = vadd.s32 %v1014, %v1016
    %v1019 = vadd.s32 %v1018, %v1008
    %v1020 = vadd.s32 %v1019, %v1010
    %v1021 = vmul.u32 %v976, %v967
    %v1022 = vadd.s32 %v998, %v1017
    %vm1023 = vc.u32 %v998, %v1017
    %v1024 = vadd.s32 %v1020, 1
    %v1025 = vsel %vm1023, %v1024, %v1020
    %v1026 = vadd.s32 %v1021, %v1025
    %v1027 = vadd.s32 %v1026, 536870912
    %v1028 = vshrl.u32 %v1027, 30
    %v1029 = vshll.u32 %v1028, 30
    %v1030 = vsub.s32 %v1026, %v1029
    %vm1031 = vcmp.lt.s32.totalorder %v1030, 0
    %v1032 = vsub.s32 0, %v1030
    %v1033 = vsel %vm1031, %v1032, %v1030
    %v1034 = vclz %v1033
    %v1035 = vsub.s32 %v1034, 2
    %vm1036 = vcmp.gt.s32.totalorder 0, %v1035
    %v1037 = vsel %vm1036, 0, %v1035
    %v1038 = vsub.s32 32, %v1037
    %v1039 = vshll.u32 %v1030, %v1037
    %v1040 = vshrl.u32 %v1022, %v1038
    %v1041 = vor.u32 %v1039, %v1040
    %v1042 = vsub.s32 4294967266, %v1037
    %v1043 = vadd.s32 %v1042, 127
    %v1044 = vshll.u32 %v1043, 23
    %v1045 = vor.u32 4788187, %v1044
    %v1046 = vand.u32 2147483647, %v1045
    %v1048 = vcvt.s32.f32 %v1041
    %v1049 = vmul.f32 %v1048, %v1046
    %v1050 = vxor.u32 %v1049, 2147483648
    %v1051 = vsel %vm930, %v1050, %v1049
    %v1052 = vsub.s32 4, %v1028
    %v1053 = vsel %vm930, %v1052, %v1028
    %v1054 = vsel %vm929, %v304, %v1051
    %v1055 = vsel %vm929, 0, %v1053
    %v1056 = vmul.f32 %v1054, %v1054
    %v1057 = vmul.f32 %v1056, -0.001358992
    %v1058 = vadd.f32 %v1057, 0.041655596
    %v1059 = vmul.f32 %v1056, %v1058
    %v1060 = vadd.f32 %v1059, -0.4999988
    %v1061 = vmul.f32 %v1056, %v1060
    %v1062 = vadd.f32 1.0, %v1061
    %v1063 = vmul.f32 %v1054, %v1054
    %v1064 = vmul.f32 %v1063, -0.00019511016
    %v1065 = vadd.f32 %v1064, 0.008332121
    %v1066 = vmul.f32 %v1063, %v1065
    %v1067 = vadd.f32 %v1066, -0.16666654
    %v1068 = vmul.f32 %v1063, %v1067
    %v1069 = vadd.f32 %v1068, 1.0
    %v1070 = vmul.f32 %v1069, %v1054
    %vm1071 = vweird.f32 %v304
    %v1072 = vadd.s32 %v1055, 3
    %v1073 = vand.u32 %v1072, 3
    %vm1074 = vcmp.lt.s32.totalorder %v1073, 2
    %vm1075 = vcmp.eq.s32.totalorder %v1073, 0
    %v1076 = vxor.u32 %v1070, 2147483648
    %v1077 = vsel %vm1075, %v1062, %v1076
    %vm1078 = vcmp.eq.s32.totalorder %v1073, 2
    %v1079 = vxor.u32 %v1062, 2147483648
    %v1080 = vsel %vm1078, %v1079, %v1070
    %v1081 = vsel %vm1074, %v1077, %v1080
    %v1082 = vsel %vm1071, nan, %v1081
    %v1083 = vand.u32 2147483647, %v305
    %vm1084 = vcmp.le.f32.partialorder %v1083, 0.7853982
    %vm1085 = vcmp.lt.s32.totalorder %v305, 0
    %v1086 = vand.u32 %v305, 2139095040
    %v1087 = vshrl.u32 %v1086, 23
    %v1088 = vsub.s32 %v1087, 127
    %v1089 = vand.u32 2147483647, %v305
    %v1090 = vand.u32 %v1089, 8388607
    %v1091 = vor.u32 %v1090, 8388608
    %v1092 = vsub.s32 0, %v1091
    %v1093 = vadd.s32 %v1088, 1
    %vm1094 = vcmp.gt.s32.totalorder %v1093, 0
    %v1095 = vsel %vm1094, %v1093, 0
    %v1096 = vshrl.u32 %v1095, 5
    %v1097 = vand.u32 %v1095, 31
    %v1098 = vsub.s32 32, %v1097
    %v1099 = vshrl.u32 683565275, %v1098
    %v1100 = vshll.u32 683565275, %v1097
    %v1101 = vshrl.u32 2475754826, %v1098
    %v1102 = vor.u32 %v1100, %v1101
    %v1103 = vshll.u32 2475754826, %v1097
    %v1104 = vshrl.u32 2131351028, %v1098
    %v1105 = vor.u32 %v1103, %v1104
    %v1106 = vshll.u32 2131351028, %v1097
    %v1107 = vshrl.u32 2102212464, %v1098
    %v1108 = vor.u32 %v1106, %v1107
    %v1109 = vshll.u32 2102212464, %v1097
    %v1110 = vshrl.u32 920167782, %v1098
    %v1111 = vor.u32 %v1109, %v1110
    %v1112 = vshll.u32 920167782, %v1097
    %v1113 = vshrl.u32 1326507024, %v1098
    %v1114 = vor.u32 %v1112, %v1113
    %vm1115 = vcmp.lt.s32.totalorder %v1096, 1
    %vm1116 = vcmp.lt.s32.totalorder %v1096, 2
    %vm1117 = vcmp.lt.s32.totalorder %v1096, 3
    %vm1118 = vcmp.lt.s32.totalorder %v1096, 4
    %v1119 = vsel %vm1115, %v1099, %v1102
    %v1120 = vsel %vm1118, %v1108, 2102212464
    %v1121 = vsel %vm1117, %v1105, %v1120
    %v1122 = vsel %vm1116, %v1119, %v1121
    %v1123 = vsel %vm1115, %v1102, %v1105
    %v1124 = vsel %vm1118, %v1111, 920167782
    %v1125 = vsel %vm1117, %v1108, %v1124
    %v1126 = vsel %vm1116, %v1123, %v1125
    %v1127 = vsel %vm1115, %v1105, %v1108
    %v1128 = vsel %vm1118, %v1114, 1326507024
    %v1129 = vsel %vm1117, %v1111, %v1128
    %v1130 = vsel %vm1116, %v1127, %v1129
    %v1131 = vshll.u32 %v1091, 8
    %v1132 = vand.u32 %v1131, 65535
    %v1133 = vshrl.u32 %v1131, 16
    %v1134 = vand.u32 %v1130, 65535
    %v1135 = vshrl.u32 %v1130, 16
    %v1136 = vmul.u32 %v1132, %v1134
    %v1137 = vmul.u32 %v1132, %v1135
    %v1138 = vmul.u32 %v1133, %v1134
    %v1139 = vmul.u32 %v1133, %v1135
    %v1140 = vshll.u32 %v1137, 16
    %v1141 = vshrl.u32 %v1137, 16
    %v1142 = vshll.u32 %v1138, 16
    %v1143 = vshrl.u32 %v1138, 16
    %vm1144 = vc.u32 %v1136, %v1140
    %v1145 = vsel %vm1144, 1, 0
    %v1146 = vadd.s32 %v1136, %v1140
    %v1147 = vadd.s32 %v1139, %v1145
    %vm1148 = vc.u32 %v1146, %v1142
    %v1149 = vsel %vm1148, 1, 0
    %v1150 = vadd.s32 %v1146, %v1142
    %v1151 = vadd.s32 %v1147, %v1149
    %v1152 = vadd.s32 %v1151, %v1141
    %v1153 = vadd.s32 %v1152, %v1143
    %v1154 = vand.u32 %v1131, 65535
    %v1155 = vshrl.u32 %v1131, 16
    %v1156 = vand.u32 %v1126, 65535
    %v1157 = vshrl.u32 %v1126, 16
    %v1158 = vmul.u32 %v1154, %v1156
    %v1159 = vmul.u32 %v1154, %v1157
    %v1160 = vmul.u32 %v1155, %v1156
    %v1161 = vmul.u32 %v1155, %v1157
    %v1162 = vshll.u32 %v1159, 16
    %v1163 = vshrl.u32 %v1159, 16
    %v1164 = vshll.u32 %v1160, 16
    %v1165 = vshrl.u32 %v1160, 16
    %vm1166 = vc.u32 %v1158, %v1162
    %v1167 = vsel %vm1166, 1, 0
    %v1168 = vadd.s32 %v1158, %v1162
    %v1169 = vadd.s32 %v1161, %v1167
    %vm1170 = vc.u32 %v1168, %v1164
    %v1171 = vsel %vm1170, 1, 0
    %v1172 = vadd.s32 %v1168, %v1164
    %v1173 = vadd.s32 %v1169, %v1171
    %v1174 = vadd.s32 %v1173, %v1163
    %v1175 = vadd.s32 %v1174, %v1165
    %v1176 = vmul.u32 %v1131, %v1122
    %v1177 = vadd.s32 %v1153, %v1172
    %vm1178 = vc.u32 %v1153, %v1172
    %v1179 = vadd.s32 %v1175, 1
    %v1180 = vsel %vm1178, %v1179, %v1175
    %v1181 = vadd.s32 %v1176, %v1180
    %v1182 = vadd.s32 %v1181, 536870912
    %v1183 = vshrl.u32 %v1182, 30
    %v1184 = vshll.u32 %v1183, 30
    %v1185 = vsub.s32 %v1181, %v1184
    %vm1186 = vcmp.lt.s32.totalorder %v1185, 0
    %v1187 = vsub.s32 0, %v1185
    %v1188 = vsel %vm1186, %v1187, %v1185
    %v1189 = vclz %v1188
    %v1190 = vsub.s32 %v1189, 2
    %vm1191 = vcmp.gt.s32.totalorder 0, %v1190
    %v1192 = vsel %vm1191, 0, %v1190
    %v1193 = vsub.s32 32, %v1192
    %v1194 = vshll.u32 %v1185, %v1192
    %v1195 = vshrl.u32 %v1177, %v1193
    %v1196 = vor.u32 %v1194, %v1195
    %v1197 = vsub.s32 4294967266, %v1192
    %v1198 = vadd.s32 %v1197, 127
    %v1199 = vshll.u32 %v1198, 23
    %v1200 = vor.u32 4788187, %v1199
    %v1201 = vand.u32 2147483647, %v1200
    %v1203 = vcvt.s32.f32 %v1196
    %v1204 = vmul.f32 %v1203, %v1201
    %v1205 = vxor.u32 %v1204, 2147483648
    %v1206 = vsel %vm1085, %v1205, %v1204
    %v1207 = vsub.s32 4, %v1183
    %v1208 = vsel %vm1085, %v1207, %v1183
    %v1209 = vsel %vm1084, %v305, %v1206
    %v1210 = vsel %vm1084, 0, %v1208
    %v1211 = vmul.f32 %v1209, %v1209
    %v1212 = vmul.f32 %v1211, -0.001358992
    %v1213 = vadd.f32 %v1212, 0.041655596
    %v1214 = vmul.f32 %v1211, %v1213
    %v1215 = vadd.f32 %v1214, -0.4999988
    %v1216 = vmul.f32 %v1211, %v1215
    %v1217 = vadd.f32 1.0, %v1216
    %v1218 = vmul.f32 %v1209, %v1209
    %v1219 = vmul.f32 %v1218, -0.00019511016
    %v1220 = vadd.f32 %v1219, 0.008332121
    %v1221 = vmul.f32 %v1218, %v1220
    %v1222 = vadd.f32 %v1221, -0.16666654
    %v1223 = vmul.f32 %v1218, %v1222
    %v1224 = vadd.f32 %v1223, 1.0
    %v1225 = vmul.f32 %v1224, %v1209
    %vm1226 = vweird.f32 %v305
    %v1227 = vadd.s32 %v1210, 3
    %v1228 = vand.u32 %v1227, 3
    %vm1229 = vcmp.lt.s32.totalorder %v1228, 2
    %vm1230 = vcmp.eq.s32.totalorder %v1228, 0
    %v1231 = vxor.u32 %v1225, 2147483648
    %v1232 = vsel %vm1230, %v1217, %v1231
    %vm1233 = vcmp.eq.s32.totalorder %v1228, 2
    %v1234 = vxor.u32 %v1217, 2147483648
    %v1235 = vsel %vm1233, %v1234, %v1225
    %v1236 = vsel %vm1229, %v1232, %v1235
    %v1237 = vsel %vm1226, nan, %v1236
    %v1238 = vand.u32 2147483647, %v306
    %vm1239 = vcmp.le.f32.partialorder %v1238, 0.7853982
    %vm1240 = vcmp.lt.s32.totalorder %v306, 0
    %v1241 = vand.u32 %v306, 2139095040
    %v1242 = vshrl.u32 %v1241, 23
    %v1243 = vsub.s32 %v1242, 127
    %v1244 = vand.u32 2147483647, %v306
    %v1245 = vand.u32 %v1244, 8388607
    %v1246 = vor.u32 %v1245, 8388608
    %v1247 = vsub.s32 0, %v1246
    %v1248 = vadd.s32 %v1243, 1
    %vm1249 = vcmp.gt.s32.totalorder %v1248, 0
    %v1250 = vsel %vm1249, %v1248, 0
    %v1251 = vshrl.u32 %v1250, 5
    %v1252 = vand.u32 %v1250, 31
    %v1253 = vsub.s32 32, %v1252
    %v1254 = vshrl.u32 683565275, %v1253
    %v1255 = vshll.u32 683565275, %v1252
    %v1256 = vshrl.u32 2475754826, %v1253
    %v1257 = vor.u32 %v1255, %v1256
    %v1258 = vshll.u32 2475754826, %v1252
    %v1259 = vshrl.u32 2131351028, %v1253
    %v1260 = vor.u32 %v1258, %v1259
    %v1261 = vshll.u32 2131351028, %v1252
    %v1262 = vshrl.u32 2102212464, %v1253
    %v1263 = vor.u32 %v1261, %v1262
    %v1264 = vshll.u32 2102212464, %v1252
    %v1265 = vshrl.u32 920167782, %v1253
    %v1266 = vor.u32 %v1264, %v1265
    %v1267 = vshll.u32 920167782, %v1252
    %v1268 = vshrl.u32 1326507024, %v1253
    %v1269 = vor.u32 %v1267, %v1268
    %vm1270 = vcmp.lt.s32.totalorder %v1251, 1
    %vm1271 = vcmp.lt.s32.totalorder %v1251, 2
    %vm1272 = vcmp.lt.s32.totalorder %v1251, 3
    %vm1273 = vcmp.lt.s32.totalorder %v1251, 4
    %v1274 = vsel %vm1270, %v1254, %v1257
    %v1275 = vsel %vm1273, %v1263, 2102212464
    %v1276 = vsel %vm1272, %v1260, %v1275
    %v1277 = vsel %vm1271, %v1274, %v1276
    %v1278 = vsel %vm1270, %v1257, %v1260
    %v1279 = vsel %vm1273, %v1266, 920167782
    %v1280 = vsel %vm1272, %v1263, %v1279
    %v1281 = vsel %vm1271, %v1278, %v1280
    %v1282 = vsel %vm1270, %v1260, %v1263
    %v1283 = vsel %vm1273, %v1269, 1326507024
    %v1284 = vsel %vm1272, %v1266, %v1283
    %v1285 = vsel %vm1271, %v1282, %v1284
    %v1286 = vshll.u32 %v1246, 8
    %v1287 = vand.u32 %v1286, 65535
    %v1288 = vshrl.u32 %v1286, 16
    %v1289 = vand.u32 %v1285, 65535
    %v1290 = vshrl.u32 %v1285, 16
    %v1291 = vmul.u32 %v1287, %v1289
    %v1292 = vmul.u32 %v1287, %v1290
    %v1293 = vmul.u32 %v1288, %v1289
    %v1294 = vmul.u32 %v1288, %v1290
    %v1295 = vshll.u32 %v1292, 16
    %v1296 = vshrl.u32 %v1292, 16
    %v1297 = vshll.u32 %v1293, 16
    %v1298 = vshrl.u32 %v1293, 16
    %vm1299 = vc.u32 %v1291, %v1295
    %v1300 = vsel %vm1299, 1, 0
    %v1301 = vadd.s32 %v1291, %v1295
    %v1302 = vadd.s32 %v1294, %v1300
    %vm1303 = vc.u32 %v1301, %v1297
    %v1304 = vsel %vm1303, 1, 0
    %v1305 = vadd.s32 %v1301, %v1297
    %v1306 = vadd.s32 %v1302, %v1304
    %v1307 = vadd.s32 %v1306, %v1296
    %v1308 = vadd.s32 %v1307, %v1298
    %v1309 = vand.u32 %v1286, 65535
    %v1310 = vshrl.u32 %v1286, 16
    %v1311 = vand.u32 %v1281, 65535
    %v1312 = vshrl.u32 %v1281, 16
    %v1313 = vmul.u32 %v1309, %v1311
    %v1314 = vmul.u32 %v1309, %v1312
    %v1315 = vmul.u32 %v1310, %v1311
    %v1316 = vmul.u32 %v1310, %v1312
    %v1317 = vshll.u32 %v1314, 16
    %v1318 = vshrl.u32 %v1314, 16
    %v1319 = vshll.u32 %v1315, 16
    %v1320 = vshrl.u32 %v1315, 16
    %vm1321 = vc.u32 %v1313, %v1317
    %v1322 = vsel %vm1321, 1, 0
    %v1323 = vadd.s32 %v1313, %v1317
    %v1324 = vadd.s32 %v1316, %v1322
    %vm1325 = vc.u32 %v1323, %v1319
    %v1326 = vsel %vm1325, 1, 0
    %v1327 = vadd.s32 %v1323, %v1319
    %v1328 = vadd.s32 %v1324, %v1326
    %v1329 = vadd.s32 %v1328, %v1318
    %v1330 = vadd.s32 %v1329, %v1320
    %v1331 = vmul.u32 %v1286, %v1277
    %v1332 = vadd.s32 %v1308, %v1327
    %vm1333 = vc.u32 %v1308, %v1327
    %v1334 = vadd.s32 %v1330, 1
    %v1335 = vsel %vm1333, %v1334, %v1330
    %v1336 = vadd.s32 %v1331, %v1335
    %v1337 = vadd.s32 %v1336, 536870912
    %v1338 = vshrl.u32 %v1337, 30
    %v1339 = vshll.u32 %v1338, 30
    %v1340 = vsub.s32 %v1336, %v1339
    %vm1341 = vcmp.lt.s32.totalorder %v1340, 0
    %v1342 = vsub.s32 0, %v1340
    %v1343 = vsel %vm1341, %v1342, %v1340
    %v1344 = vclz %v1343
    %v1345 = vsub.s32 %v1344, 2
    %vm1346 = vcmp.gt.s32.totalorder 0, %v1345
    %v1347 = vsel %vm1346, 0, %v1345
    %v1348 = vsub.s32 32, %v1347
    %v1349 = vshll.u32 %v1340, %v1347
    %v1350 = vshrl.u32 %v1332, %v1348
    %v1351 = vor.u32 %v1349, %v1350
    %v1352 = vsub.s32 4294967266, %v1347
    %v1353 = vadd.s32 %v1352, 127
    %v1354 = vshll.u32 %v1353, 23
    %v1355 = vor.u32 4788187, %v1354
    %v1356 = vand.u32 2147483647, %v1355
    %v1358 = vcvt.s32.f32 %v1351
    %v1359 = vmul.f32 %v1358, %v1356
    %v1360 = vxor.u32 %v1359, 2147483648
    %v1361 = vsel %vm1240, %v1360, %v1359
    %v1362 = vsub.s32 4, %v1338
    %v1363 = vsel %vm1240, %v1362, %v1338
    %v1364 = vsel %vm1239, %v306, %v1361
    %v1365 = vsel %vm1239, 0, %v1363
    %v1366 = vmul.f32 %v1364, %v1364
    %v1367 = vmul.f32 %v1366, -0.001358992
    %v1368 = vadd.f32 %v1367, 0.041655596
    %v1369 = vmul.f32 %v1366, %v1368
    %v1370 = vadd.f32 %v1369, -0.4999988
    %v1371 = vmul.f32 %v1366, %v1370
    %v1372 = vadd.f32 1.0, %v1371
    %v1373 = vmul.f32 %v1364, %v1364
    %v1374 = vmul.f32 %v1373, -0.00019511016
    %v1375 = vadd.f32 %v1374, 0.008332121
    %v1376 = vmul.f32 %v1373, %v1375
    %v1377 = vadd.f32 %v1376, -0.16666654
    %v1378 = vmul.f32 %v1373, %v1377
    %v1379 = vadd.f32 %v1378, 1.0
    %v1380 = vmul.f32 %v1379, %v1364
    %vm1381 = vweird.f32 %v306
    %v1382 = vadd.s32 %v1365, 3
    %v1383 = vand.u32 %v1382, 3
    %vm1384 = vcmp.lt.s32.totalorder %v1383, 2
    %vm1385 = vcmp.eq.s32.totalorder %v1383, 0
    %v1386 = vxor.u32 %v1380, 2147483648
    %v1387 = vsel %vm1385, %v1372, %v1386
    %vm1388 = vcmp.eq.s32.totalorder %v1383, 2
    %v1389 = vxor.u32 %v1372, 2147483648
    %v1390 = vsel %vm1388, %v1389, %v1380
    %v1391 = vsel %vm1384, %v1387, %v1390
    %v1392 = vsel %vm1381, nan, %v1391
    %v1393 = vand.u32 2147483647, %v307
    %vm1394 = vcmp.le.f32.partialorder %v1393, 0.7853982
    %vm1395 = vcmp.lt.s32.totalorder %v307, 0
    %v1396 = vand.u32 %v307, 2139095040
    %v1397 = vshrl.u32 %v1396, 23
    %v1398 = vsub.s32 %v1397, 127
    %v1399 = vand.u32 2147483647, %v307
    %v1400 = vand.u32 %v1399, 8388607
    %v1401 = vor.u32 %v1400, 8388608
    %v1402 = vsub.s32 0, %v1401
    %v1403 = vadd.s32 %v1398, 1
    %vm1404 = vcmp.gt.s32.totalorder %v1403, 0
    %v1405 = vsel %vm1404, %v1403, 0
    %v1406 = vshrl.u32 %v1405, 5
    %v1407 = vand.u32 %v1405, 31
    %v1408 = vsub.s32 32, %v1407
    %v1409 = vshrl.u32 683565275, %v1408
    %v1410 = vshll.u32 683565275, %v1407
    %v1411 = vshrl.u32 2475754826, %v1408
    %v1412 = vor.u32 %v1410, %v1411
    %v1413 = vshll.u32 2475754826, %v1407
    %v1414 = vshrl.u32 2131351028, %v1408
    %v1415 = vor.u32 %v1413, %v1414
    %v1416 = vshll.u32 2131351028, %v1407
    %v1417 = vshrl.u32 2102212464, %v1408
    %v1418 = vor.u32 %v1416, %v1417
    %v1419 = vshll.u32 2102212464, %v1407
    %v1420 = vshrl.u32 920167782, %v1408
    %v1421 = vor.u32 %v1419, %v1420
    %v1422 = vshll.u32 920167782, %v1407
    %v1423 = vshrl.u32 1326507024, %v1408
    %v1424 = vor.u32 %v1422, %v1423
    %vm1425 = vcmp.lt.s32.totalorder %v1406, 1
    %vm1426 = vcmp.lt.s32.totalorder %v1406, 2
    %vm1427 = vcmp.lt.s32.totalorder %v1406, 3
    %vm1428 = vcmp.lt.s32.totalorder %v1406, 4
    %v1429 = vsel %vm1425, %v1409, %v1412
    %v1430 = vsel %vm1428, %v1418, 2102212464
    %v1431 = vsel %vm1427, %v1415, %v1430
    %v1432 = vsel %vm1426, %v1429, %v1431
    %v1433 = vsel %vm1425, %v1412, %v1415
    %v1434 = vsel %vm1428, %v1421, 920167782
    %v1435 = vsel %vm1427, %v1418, %v1434
    %v1436 = vsel %vm1426, %v1433, %v1435
    %v1437 = vsel %vm1425, %v1415, %v1418
    %v1438 = vsel %vm1428, %v1424, 1326507024
    %v1439 = vsel %vm1427, %v1421, %v1438
    %v1440 = vsel %vm1426, %v1437, %v1439
    %v1441 = vshll.u32 %v1401, 8
    %v1442 = vand.u32 %v1441, 65535
    %v1443 = vshrl.u32 %v1441, 16
    %v1444 = vand.u32 %v1440, 65535
    %v1445 = vshrl.u32 %v1440, 16
    %v1446 = vmul.u32 %v1442, %v1444
    %v1447 = vmul.u32 %v1442, %v1445
    %v1448 = vmul.u32 %v1443, %v1444
    %v1449 = vmul.u32 %v1443, %v1445
    %v1450 = vshll.u32 %v1447, 16
    %v1451 = vshrl.u32 %v1447, 16
    %v1452 = vshll.u32 %v1448, 16
    %v1453 = vshrl.u32 %v1448, 16
    %vm1454 = vc.u32 %v1446, %v1450
    %v1455 = vsel %vm1454, 1, 0
    %v1456 = vadd.s32 %v1446, %v1450
    %v1457 = vadd.s32 %v1449, %v1455
    %vm1458 = vc.u32 %v1456, %v1452
    %v1459 = vsel %vm1458, 1, 0
    %v1460 = vadd.s32 %v1456, %v1452
    %v1461 = vadd.s32 %v1457, %v1459
    %v1462 = vadd.s32 %v1461, %v1451
    %v1463 = vadd.s32 %v1462, %v1453
    %v1464 = vand.u32 %v1441, 65535
    %v1465 = vshrl.u32 %v1441, 16
    %v1466 = vand.u32 %v1436, 65535
    %v1467 = vshrl.u32 %v1436, 16
    %v1468 = vmul.u32 %v1464, %v1466
    %v1469 = vmul.u32 %v1464, %v1467
    %v1470 = vmul.u32 %v1465, %v1466
    %v1471 = vmul.u32 %v1465, %v1467
    %v1472 = vshll.u32 %v1469, 16
    %v1473 = vshrl.u32 %v1469, 16
    %v1474 = vshll.u32 %v1470, 16
    %v1475 = vshrl.u32 %v1470, 16
    %vm1476 = vc.u32 %v1468, %v1472
    %v1477 = vsel %vm1476, 1, 0
    %v1478 = vadd.s32 %v1468, %v1472
    %v1479 = vadd.s32 %v1471, %v1477
    %vm1480 = vc.u32 %v1478, %v1474
    %v1481 = vsel %vm1480, 1, 0
    %v1482 = vadd.s32 %v1478, %v1474
    %v1483 = vadd.s32 %v1479, %v1481
    %v1484 = vadd.s32 %v1483, %v1473
    %v1485 = vadd.s32 %v1484, %v1475
    %v1486 = vmul.u32 %v1441, %v1432
    %v1487 = vadd.s32 %v1463, %v1482
    %vm1488 = vc.u32 %v1463, %v1482
    %v1489 = vadd.s32 %v1485, 1
    %v1490 = vsel %vm1488, %v1489, %v1485
    %v1491 = vadd.s32 %v1486, %v1490
    %v1492 = vadd.s32 %v1491, 536870912
    %v1493 = vshrl.u32 %v1492, 30
    %v1494 = vshll.u32 %v1493, 30
    %v1495 = vsub.s32 %v1491, %v1494
    %vm1496 = vcmp.lt.s32.totalorder %v1495, 0
    %v1497 = vsub.s32 0, %v1495
    %v1498 = vsel %vm1496, %v1497, %v1495
    %v1499 = vclz %v1498
    %v1500 = vsub.s32 %v1499, 2
    %vm1501 = vcmp.gt.s32.totalorder 0, %v1500
    %v1502 = vsel %vm1501, 0, %v1500
    %v1503 = vsub.s32 32, %v1502
    %v1504 = vshll.u32 %v1495, %v1502
    %v1505 = vshrl.u32 %v1487, %v1503
    %v1506 = vor.u32 %v1504, %v1505
    %v1507 = vsub.s32 4294967266, %v1502
    %v1508 = vadd.s32 %v1507, 127
    %v1509 = vshll.u32 %v1508, 23
    %v1510 = vor.u32 4788187, %v1509
    %v1511 = vand.u32 2147483647, %v1510
    %v1513 = vcvt.s32.f32 %v1506
    %v1514 = vmul.f32 %v1513, %v1511
    %v1515 = vxor.u32 %v1514, 2147483648
    %v1516 = vsel %vm1395, %v1515, %v1514
    %v1517 = vsub.s32 4, %v1493
    %v1518 = vsel %vm1395, %v1517, %v1493
    %v1519 = vsel %vm1394, %v307, %v1516
    %v1520 = vsel %vm1394, 0, %v1518
    %v1521 = vmul.f32 %v1519, %v1519
    %v1522 = vmul.f32 %v1521, -0.001358992
    %v1523 = vadd.f32 %v1522, 0.041655596
    %v1524 = vmul.f32 %v1521, %v1523
    %v1525 = vadd.f32 %v1524, -0.4999988
    %v1526 = vmul.f32 %v1521, %v1525
    %v1527 = vadd.f32 1.0, %v1526
    %v1528 = vmul.f32 %v1519, %v1519
    %v1529 = vmul.f32 %v1528, -0.00019511016
    %v1530 = vadd.f32 %v1529, 0.008332121
    %v1531 = vmul.f32 %v1528, %v1530
    %v1532 = vadd.f32 %v1531, -0.16666654
    %v1533 = vmul.f32 %v1528, %v1532
    %v1534 = vadd.f32 %v1533, 1.0
    %v1535 = vmul.f32 %v1534, %v1519
    %vm1536 = vweird.f32 %v307
    %v1537 = vadd.s32 %v1520, 3
    %v1538 = vand.u32 %v1537, 3
    %vm1539 = vcmp.lt.s32.totalorder %v1538, 2
    %vm1540 = vcmp.eq.s32.totalorder %v1538, 0
    %v1541 = vxor.u32 %v1535, 2147483648
    %v1542 = vsel %vm1540, %v1527, %v1541
    %vm1543 = vcmp.eq.s32.totalorder %v1538, 2
    %v1544 = vxor.u32 %v1527, 2147483648
    %v1545 = vsel %vm1543, %v1544, %v1535
    %v1546 = vsel %vm1539, %v1542, %v1545
    %v1547 = vsel %vm1536, nan, %v1546
    %1549 = vset.pattern.permute.xlu0 0
    %1550 = vperm.xlu0 %1549, %v251
    %v1551 = vpop.permute.xlu0 %1550
    %1554 = vset.pattern.permute.xlu0 0
    %1555 = vperm.xlu0 %1554, %v252
    %v1556 = vpop.permute.xlu0 %1555
    %1559 = vset.pattern.permute.xlu0 0
    %1560 = vperm.xlu0 %1559, %v253
    %v1561 = vpop.permute.xlu0 %1560
    %1564 = vset.pattern.permute.xlu0 0
    %1565 = vperm.xlu0 %1564, %v254
    %v1566 = vpop.permute.xlu0 %1565
    %1569 = vset.pattern.permute.xlu0 0
    %1570 = vperm.xlu0 %1569, %v255
    %v1571 = vpop.permute.xlu0 %1570
    %1574 = vset.pattern.permute.xlu0 0
    %1575 = vperm.xlu0 %1574, %v256
    %v1576 = vpop.permute.xlu0 %1575
    %1579 = vset.pattern.permute.xlu0 0
    %1580 = vperm.xlu0 %1579, %v257
    %v1581 = vpop.permute.xlu0 %1580
    %1584 = vset.pattern.permute.xlu0 0
    %1585 = vperm.xlu0 %1584, %v258
    %v1586 = vpop.permute.xlu0 %1585
    %v1588 = vmul.f32 %v462, %v1551
    %v1589 = vmul.f32 %v617, %v1556
    %v1590 = vmul.f32 %v772, %v1561
    %v1591 = vmul.f32 %v927, %v1566
    %v1592 = vmul.f32 %v1082, %v1571
    %v1593 = vmul.f32 %v1237, %v1576
    %v1594 = vmul.f32 %v1392, %v1581
    %v1595 = vmul.f32 %v1547, %v1586
    %v1596 = vmul.f32 %v235, 0.2
    %v1597 = vmul.f32 %v236, 0.2
    %v1598 = vmul.f32 %v237, 0.2
    %v1599 = vmul.f32 %v238, 0.2
    %v1600 = vmul.f32 %v239, 0.2
    %v1601 = vmul.f32 %v240, 0.2
    %v1602 = vmul.f32 %v241, 0.2
    %v1603 = vmul.f32 %v242, 0.2
    %v1604 = vmul.f32 %v1596, %v1596
    %v1605 = vmul.f32 %v1597, %v1597
    %v1606 = vmul.f32 %v1598, %v1598
    %v1607 = vmul.f32 %v1599, %v1599
    %v1608 = vmul.f32 %v1600, %v1600
    %v1609 = vmul.f32 %v1601, %v1601
    %v1610 = vmul.f32 %v1602, %v1602
    %v1611 = vmul.f32 %v1603, %v1603
    %v1612 = vmul.f32 %v1604, %v1596
    %v1613 = vmul.f32 %v1605, %v1597
    %v1614 = vmul.f32 %v1606, %v1598
    %v1615 = vmul.f32 %v1607, %v1599
    %v1616 = vmul.f32 %v1608, %v1600
    %v1617 = vmul.f32 %v1609, %v1601
    %v1618 = vmul.f32 %v1610, %v1602
    %v1619 = vmul.f32 %v1611, %v1603
    %v1620 = vmul.f32 %v1612, %v1612
    %v1621 = vmul.f32 %v1613, %v1613
    %v1622 = vmul.f32 %v1614, %v1614
    %v1623 = vmul.f32 %v1615, %v1615
    %v1624 = vmul.f32 %v1616, %v1616
    %v1625 = vmul.f32 %v1617, %v1617
    %v1626 = vmul.f32 %v1618, %v1618
    %v1627 = vmul.f32 %v1619, %v1619
    %v1628 = vmul.f32 %v1620, %v1596
    %v1629 = vmul.f32 %v1621, %v1597
    %v1630 = vmul.f32 %v1622, %v1598
    %v1631 = vmul.f32 %v1623, %v1599
    %v1632 = vmul.f32 %v1624, %v1600
    %v1633 = vmul.f32 %v1625, %v1601
    %v1634 = vmul.f32 %v1626, %v1602
    %v1635 = vmul.f32 %v1627, %v1603
    %v1636 = vmul.f32 %v1628, %v1596
    %v1637 = vmul.f32 %v1629, %v1597
    %v1638 = vmul.f32 %v1630, %v1598
    %v1639 = vmul.f32 %v1631, %v1599
    %v1640 = vmul.f32 %v1632, %v1600
    %v1641 = vmul.f32 %v1633, %v1601
    %v1642 = vmul.f32 %v1634, %v1602
    %v1643 = vmul.f32 %v1635, %v1603
    %v1644 = vmul.f32 %v1620, 28.0
    %v1645 = vmul.f32 %v1621, 28.0
    %v1646 = vmul.f32 %v1622, 28.0
    %v1647 = vmul.f32 %v1623, 28.0
    %v1648 = vmul.f32 %v1624, 28.0
    %v1649 = vmul.f32 %v1625, 28.0
    %v1650 = vmul.f32 %v1626, 28.0
    %v1651 = vmul.f32 %v1627, 28.0
    %v1652 = vsub.f32 1.0, %v1644
    %v1653 = vsub.f32 1.0, %v1645
    %v1654 = vsub.f32 1.0, %v1646
    %v1655 = vsub.f32 1.0, %v1647
    %v1656 = vsub.f32 1.0, %v1648
    %v1657 = vsub.f32 1.0, %v1649
    %v1658 = vsub.f32 1.0, %v1650
    %v1659 = vsub.f32 1.0, %v1651
    %v1660 = vmul.f32 %v1628, 48.0
    %v1661 = vmul.f32 %v1629, 48.0
    %v1662 = vmul.f32 %v1630, 48.0
    %v1663 = vmul.f32 %v1631, 48.0
    %v1664 = vmul.f32 %v1632, 48.0
    %v1665 = vmul.f32 %v1633, 48.0
    %v1666 = vmul.f32 %v1634, 48.0
    %v1667 = vmul.f32 %v1635, 48.0
    %v1668 = vadd.f32 %v1652, %v1660
    %v1669 = vadd.f32 %v1653, %v1661
    %v1670 = vadd.f32 %v1654, %v1662
    %v1671 = vadd.f32 %v1655, %v1663
    %v1672 = vadd.f32 %v1656, %v1664
    %v1673 = vadd.f32 %v1657, %v1665
    %v1674 = vadd.f32 %v1658, %v1666
    %v1675 = vadd.f32 %v1659, %v1667
    %v1676 = vmul.f32 %v1636, 21.0
    %v1677 = vmul.f32 %v1637, 21.0
    %v1678 = vmul.f32 %v1638, 21.0
    %v1679 = vmul.f32 %v1639, 21.0
    %v1680 = vmul.f32 %v1640, 21.0
    %v1681 = vmul.f32 %v1641, 21.0
    %v1682 = vmul.f32 %v1642, 21.0
    %v1683 = vmul.f32 %v1643, 21.0
    %v1684 = vsub.f32 %v1668, %v1676
    %v1685 = vsub.f32 %v1669, %v1677
    %v1686 = vsub.f32 %v1670, %v1678
    %v1687 = vsub.f32 %v1671, %v1679
    %v1688 = vsub.f32 %v1672, %v1680
    %v1689 = vsub.f32 %v1673, %v1681
    %v1690 = vsub.f32 %v1674, %v1682
    %v1691 = vsub.f32 %v1675, %v1683
    %vm1692 = vcmp.lt.f32.partialorder %v1596, 1.0
    %vm1693 = vcmp.lt.f32.partialorder %v1597, 1.0
    %vm1694 = vcmp.lt.f32.partialorder %v1598, 1.0
    %vm1695 = vcmp.lt.f32.partialorder %v1599, 1.0
    %vm1696 = vcmp.lt.f32.partialorder %v1600, 1.0
    %vm1697 = vcmp.lt.f32.partialorder %v1601, 1.0
    %vm1698 = vcmp.lt.f32.partialorder %v1602, 1.0
    %vm1699 = vcmp.lt.f32.partialorder %v1603, 1.0
    %v1700 = vsel %vm1692, 1, 0
    %v1701 = vsel %vm1693, 1, 0
    %v1702 = vsel %vm1694, 1, 0
    %v1703 = vsel %vm1695, 1, 0
    %v1704 = vsel %vm1696, 1, 0
    %v1705 = vsel %vm1697, 1, 0
    %v1706 = vsel %vm1698, 1, 0
    %v1707 = vsel %vm1699, 1, 0
    %v1708 = vcvt.s32.f32 %v1700
    %v1709 = vcvt.s32.f32 %v1701
    %v1710 = vcvt.s32.f32 %v1702
    %v1711 = vcvt.s32.f32 %v1703
    %v1712 = vcvt.s32.f32 %v1704
    %v1713 = vcvt.s32.f32 %v1705
    %v1714 = vcvt.s32.f32 %v1706
    %v1715 = vcvt.s32.f32 %v1707
    %v1716 = vmul.f32 %v1684, %v1708
    %v1717 = vmul.f32 %v1685, %v1709
    %v1718 = vmul.f32 %v1686, %v1710
    %v1719 = vmul.f32 %v1687, %v1711
    %v1720 = vmul.f32 %v1688, %v1712
    %v1721 = vmul.f32 %v1689, %v1713
    %v1722 = vmul.f32 %v1690, %v1714
    %v1723 = vmul.f32 %v1691, %v1715
    %vm1724 = vcmp.gt.f32.partialorder %v1716, 0.0
    %vm1725 = vcmp.gt.f32.partialorder %v1717, 0.0
    %vm1726 = vcmp.gt.f32.partialorder %v1718, 0.0
    %vm1727 = vcmp.gt.f32.partialorder %v1719, 0.0
    %vm1728 = vcmp.gt.f32.partialorder %v1720, 0.0
    %vm1729 = vcmp.gt.f32.partialorder %v1721, 0.0
    %vm1730 = vcmp.gt.f32.partialorder %v1722, 0.0
    %vm1731 = vcmp.gt.f32.partialorder %v1723, 0.0
    %v1732 = vsel %vm1724, 1, 0
    %v1733 = vsel %vm1725, 1, 0
    %v1734 = vsel %vm1726, 1, 0
    %v1735 = vsel %vm1727, 1, 0
    %v1736 = vsel %vm1728, 1, 0
    %v1737 = vsel %vm1729, 1, 0
    %v1738 = vsel %vm1730, 1, 0
    %v1739 = vsel %vm1731, 1, 0
    %v1740 = vcvt.s32.f32 %v1732
    %v1741 = vcvt.s32.f32 %v1733
    %v1742 = vcvt.s32.f32 %v1734
    %v1743 = vcvt.s32.f32 %v1735
    %v1744 = vcvt.s32.f32 %v1736
    %v1745 = vcvt.s32.f32 %v1737
    %v1746 = vcvt.s32.f32 %v1738
    %v1747 = vcvt.s32.f32 %v1739
    %v1748 = vld [vmem:[%s5] sm:$0xff]
    %v1749 = vld [vmem:[%s5 + $0x8] sm:$0xff]
    %v1750 = vld [vmem:[#allocation2] sm:$0xf]
    %vm1751 = vcmask 31744
    %v1753 = vsel %vm1751, %v1748, 0
    %v1756 = vsel %vm1751, %v1749, 0
    %vm1758 = vcmask 1043456
    %v1760 = vsel %vm1758, %v1750, 0
    %1762 = vmatpush.msra.mxu0 0.0
    %1763 = vmatpush.msra.mxu0 0.0
    %1764 = vmatpush.msra.mxu0 0.0
    %1765 = vmatpush.msra.mxu0 0.0
    %1766 = vmatpush.msra.mxu0 0.0
    %1767 = vmatpush.msra.mxu0 0.0
    %1768 = vmatpush.msra.mxu0 0.0
    %1769 = vmatpush.msra.mxu0 0.0
    %1770 = vmatpush.msra.mxu0 0.0
    %1771 = vmatpush.msra.mxu0 0.0
    %1772 = vmatpush.msra.mxu0 0.0
    %1773 = vmatpush.msra.mxu0 0.0
    %1774 = vmatpush.msra.mxu0 0.0
    %1775 = vmatpush.msra.mxu0 0.0
    %1776 = vmatpush.msra.mxu0 0.0
    %1777 = vmatpush.msra.mxu0 %v1760
    %1778 = vmatmul.f32.gmra.mxu0 %v1753
    %v1779 = vpop.f32.mrf.mxu0
    %v1780 = vadd.f32 0.0, %v1779
    %1781 = vmatmul.f32.gmra.mxu0 %v1756
    %v1782 = vpop.f32.mrf.mxu0
    %v1783 = vadd.f32 0.0, %v1782
    %1784 = vdwg.mxu0
    %v1785 = vld [vmem:[#allocation5] sm:$0xf]
    %v1787 = vsel %vm1758, %v1785, 0
    %1789 = vmatpush.msra.mxu0 0.0
    %1790 = vmatpush.msra.mxu0 0.0
    %1791 = vmatpush.msra.mxu0 0.0
    %1792 = vmatpush.msra.mxu0 0.0
    %1793 = vmatpush.msra.mxu0 0.0
    %1794 = vmatpush.msra.mxu0 0.0
    %1795 = vmatpush.msra.mxu0 0.0
    %1796 = vmatpush.msra.mxu0 0.0
    %1797 = vmatpush.msra.mxu0 0.0
    %1798 = vmatpush.msra.mxu0 0.0
    %1799 = vmatpush.msra.mxu0 0.0
    %1800 = vmatpush.msra.mxu0 0.0
    %1801 = vmatpush.msra.mxu0 0.0
    %1802 = vmatpush.msra.mxu0 0.0
    %1803 = vmatpush.msra.mxu0 0.0
    %1804 = vmatpush.msra.mxu0 %v1787
    %1805 = vmatmul.f32.gmra.mxu0 %v1753
    %v1806 = vpop.f32.mrf.mxu0
    %v1807 = vadd.f32 0.0, %v1806
    %1808 = vmatmul.f32.gmra.mxu0 %v1756
    %v1809 = vpop.f32.mrf.mxu0
    %v1810 = vadd.f32 0.0, %v1809
    %1811 = vdwg.mxu0
    %vm1812 = vcmask 130048
    %v1814 = vsel %vm1812, %v217, 0
    %v1817 = vsel %vm1812, %v218, 0
    %v1820 = vsel %vm1812, %v219, 0
    %v1823 = vsel %vm1812, %v220, 0
    %v1826 = vsel %vm1812, %v221, 0
    %v1829 = vsel %vm1812, %v222, 0
    %v1832 = vsel %vm1812, %v223, 0
    %v1835 = vsel %vm1812, %v224, 0
    %1837 = vmatpush.msra.mxu0 0.0
    %1838 = vmatpush.msra.mxu0 0.0
    %1839 = vmatpush.msra.mxu0 0.0
    %1840 = vmatpush.msra.mxu0 0.0
    %1841 = vmatpush.msra.mxu0 0.0
    %1842 = vmatpush.msra.mxu0 0.0
    %1843 = vmatpush.msra.mxu0 0.0
    %1844 = vmatpush.msra.mxu0 0.0
    %1845 = vmatpush.msra.mxu0 0.0
    %1846 = vmatpush.msra.mxu0 0.0
    %1847 = vmatpush.msra.mxu0 0.0
    %1848 = vmatpush.msra.mxu0 0.0
    %1849 = vmatpush.msra.mxu0 0.0
    %1850 = vmatpush.msra.mxu0 0.0
    %1851 = vmatpush.msra.mxu0 %v1810
    %1852 = vmatpush.msra.mxu0 %v1807
    %1853 = vmatmul.f32.gmra.mxu0 %v1814
    %v1854 = vpop.f32.mrf.mxu0
    %v1855 = vadd.f32 0.0, %v1854
    %1856 = vmatmul.f32.gmra.mxu0 %v1817
    %v1857 = vpop.f32.mrf.mxu0
    %v1858 = vadd.f32 0.0, %v1857
    %1859 = vmatmul.f32.gmra.mxu0 %v1820
    %v1860 = vpop.f32.mrf.mxu0
    %v1861 = vadd.f32 0.0, %v1860
    %1862 = vmatmul.f32.gmra.mxu0 %v1823
    %v1863 = vpop.f32.mrf.mxu0
    %v1864 = vadd.f32 0.0, %v1863
    %1865 = vmatmul.f32.gmra.mxu0 %v1826
    %v1866 = vpop.f32.mrf.mxu0
    %v1867 = vadd.f32 0.0, %v1866
    %1868 = vmatmul.f32.gmra.mxu0 %v1829
    %v1869 = vpop.f32.mrf.mxu0
    %v1870 = vadd.f32 0.0, %v1869
    %1871 = vmatmul.f32.gmra.mxu0 %v1832
    %v1872 = vpop.f32.mrf.mxu0
    %v1873 = vadd.f32 0.0, %v1872
    %1874 = vmatmul.f32.gmra.mxu0 %v1835
    %v1875 = vpop.f32.mrf.mxu0
    %v1876 = vadd.f32 0.0, %v1875
    %1877 = vdwg.mxu0
    %v1879 = vsel %vm1812, %v169, 0
    %v1882 = vsel %vm1812, %v170, 0
    %v1885 = vsel %vm1812, %v171, 0
    %v1888 = vsel %vm1812, %v172, 0
    %v1891 = vsel %vm1812, %v173, 0
    %v1894 = vsel %vm1812, %v174, 0
    %v1897 = vsel %vm1812, %v175, 0
    %v1900 = vsel %vm1812, %v176, 0
    %1902 = vmatpush.msra.mxu0 0.0
    %1903 = vmatpush.msra.mxu0 0.0
    %1904 = vmatpush.msra.mxu0 0.0
    %1905 = vmatpush.msra.mxu0 0.0
    %1906 = vmatpush.msra.mxu0 0.0
    %1907 = vmatpush.msra.mxu0 0.0
    %1908 = vmatpush.msra.mxu0 0.0
    %1909 = vmatpush.msra.mxu0 0.0
    %1910 = vmatpush.msra.mxu0 0.0
    %1911 = vmatpush.msra.mxu0 0.0
    %1912 = vmatpush.msra.mxu0 0.0
    %1913 = vmatpush.msra.mxu0 0.0
    %1914 = vmatpush.msra.mxu0 0.0
    %1915 = vmatpush.msra.mxu0 0.0
    %1916 = vmatpush.msra.mxu0 %v1783
    %1917 = vmatpush.msra.mxu0 %v1780
    %1918 = vmatmul.f32.gmra.mxu0 %v1879
    %v1919 = vpop.f32.mrf.mxu0
    %v1920 = vadd.f32 %v1855, %v1919
    %1921 = vmatmul.f32.gmra.mxu0 %v1882
    %v1922 = vpop.f32.mrf.mxu0
    %v1923 = vadd.f32 %v1858, %v1922
    %1924 = vmatmul.f32.gmra.mxu0 %v1885
    %v1925 = vpop.f32.mrf.mxu0
    %v1926 = vadd.f32 %v1861, %v1925
    %1927 = vmatmul.f32.gmra.mxu0 %v1888
    %v1928 = vpop.f32.mrf.mxu0
    %v1929 = vadd.f32 %v1864, %v1928
    %1930 = vmatmul.f32.gmra.mxu0 %v1891
    %v1931 = vpop.f32.mrf.mxu0
    %v1932 = vadd.f32 %v1867, %v1931
    %1933 = vmatmul.f32.gmra.mxu0 %v1894
    %v1934 = vpop.f32.mrf.mxu0
    %v1935 = vadd.f32 %v1870, %v1934
    %1936 = vmatmul.f32.gmra.mxu0 %v1897
    %v1937 = vpop.f32.mrf.mxu0
    %v1938 = vadd.f32 %v1873, %v1937
    %1939 = vmatmul.f32.gmra.mxu0 %v1900
    %v1940 = vpop.f32.mrf.mxu0
    %v1941 = vadd.f32 %v1876, %v1940
    %1942 = vdwg.mxu0
    %v1943 = vld [vmem:[#allocation7] sm:$0xff]
    %vm1944 = vcmask 64512
    %v1946 = vsel %vm1944, %v1588, 0
    %v1949 = vsel %vm1944, %v1589, 0
    %v1952 = vsel %vm1944, %v1590, 0
    %v1955 = vsel %vm1944, %v1591, 0
    %v1958 = vsel %vm1944, %v1592, 0
    %v1961 = vsel %vm1944, %v1593, 0
    %v1964 = vsel %vm1944, %v1594, 0
    %v1967 = vsel %vm1944, %v1595, 0
    %1969 = vmatpush.msra.mxu0 0.0
    %1970 = vmatpush.msra.mxu0 0.0
    %1971 = vmatpush.msra.mxu0 0.0
    %1972 = vmatpush.msra.mxu0 0.0
    %1973 = vmatpush.msra.mxu0 0.0
    %1974 = vmatpush.msra.mxu0 0.0
    %1975 = vmatpush.msra.mxu0 0.0
    %1976 = vmatpush.msra.mxu0 0.0
    %1977 = vmatpush.msra.mxu0 0.0
    %1978 = vmatpush.msra.mxu0 0.0
    %1979 = vmatpush.msra.mxu0 0.0
    %1980 = vmatpush.msra.mxu0 0.0
    %1981 = vmatpush.msra.mxu0 0.0
    %1982 = vmatpush.msra.mxu0 0.0
    %1983 = vmatpush.msra.mxu0 0.0
    %1984 = vmatpush.msra.mxu0 %v1943
    %1985 = vmatmul.f32.gmra.mxu0 %v1946
    %v1986 = vpop.f32.mrf.mxu0
    %v1987 = vadd.f32 0.0, %v1986
    %1988 = vmatmul.f32.gmra.mxu0 %v1949
    %v1989 = vpop.f32.mrf.mxu0
    %v1990 = vadd.f32 0.0, %v1989
    %1991 = vmatmul.f32.gmra.mxu0 %v1952
    %v1992 = vpop.f32.mrf.mxu0
    %v1993 = vadd.f32 0.0, %v1992
    %1994 = vmatmul.f32.gmra.mxu0 %v1955
    %v1995 = vpop.f32.mrf.mxu0
    %v1996 = vadd.f32 0.0, %v1995
    %1997 = vmatmul.f32.gmra.mxu0 %v1958
    %v1998 = vpop.f32.mrf.mxu0
    %v1999 = vadd.f32 0.0, %v1998
    %2000 = vmatmul.f32.gmra.mxu0 %v1961
    %v2001 = vpop.f32.mrf.mxu0
    %v2002 = vadd.f32 0.0, %v2001
    %2003 = vmatmul.f32.gmra.mxu0 %v1964
    %v2004 = vpop.f32.mrf.mxu0
    %v2005 = vadd.f32 0.0, %v2004
    %2006 = vmatmul.f32.gmra.mxu0 %v1967
    %v2007 = vpop.f32.mrf.mxu0
    %v2008 = vadd.f32 0.0, %v2007
    %2009 = vdwg.mxu0
    %v2010 = vadd.f32 %v1920, %v1987
    %v2011 = vadd.f32 %v1923, %v1990
    %v2012 = vadd.f32 %v1926, %v1993
    %v2013 = vadd.f32 %v1929, %v1996
    %v2014 = vadd.f32 %v1932, %v1999
    %v2015 = vadd.f32 %v1935, %v2002
    %v2016 = vadd.f32 %v1938, %v2005
    %v2017 = vadd.f32 %v1941, %v2008
    %v2018 = vxor.u32 %v2010, 2147483648
    %v2019 = vxor.u32 %v2011, 2147483648
    %v2020 = vxor.u32 %v2012, 2147483648
    %v2021 = vxor.u32 %v2013, 2147483648
    %v2022 = vxor.u32 %v2014, 2147483648
    %v2023 = vxor.u32 %v2015, 2147483648
    %v2024 = vxor.u32 %v2016, 2147483648
    %v2025 = vxor.u32 %v2017, 2147483648
    %v2026 = vmul.f32 %v2018, 1.442695
    %v2027 = vpow.pop %v2026
    %v2028 = vmul.f32 %v2019, 1.442695
    %v2029 = vpow.pop %v2028
    %v2030 = vmul.f32 %v2020, 1.442695
    %v2031 = vpow.pop %v2030
    %v2032 = vmul.f32 %v2021, 1.442695
    %v2033 = vpow.pop %v2032
    %v2034 = vmul.f32 %v2022, 1.442695
    %v2035 = vpow.pop %v2034
    %v2036 = vmul.f32 %v2023, 1.442695
    %v2037 = vpow.pop %v2036
    %v2038 = vmul.f32 %v2024, 1.442695
    %v2039 = vpow.pop %v2038
    %v2040 = vmul.f32 %v2025, 1.442695
    %v2041 = vpow.pop %v2040
    %v2042 = vadd.f32 %v2027, 1.0
    %v2043 = vadd.f32 %v2029, 1.0
    %v2044 = vadd.f32 %v2031, 1.0
    %v2045 = vadd.f32 %v2033, 1.0
    %v2046 = vadd.f32 %v2035, 1.0
    %v2047 = vadd.f32 %v2037, 1.0
    %v2048 = vadd.f32 %v2039, 1.0
    %v2049 = vadd.f32 %v2041, 1.0
    %v2050 = vrcp.pop %v2042
    %v2051 = vmul.f32 %v2042, %v2050
    %v2052 = vsub.f32 1.0, %v2051
    %v2053 = vmul.f32 %v2050, %v2052
    %v2054 = vadd.f32 %v2050, %v2053
    %vm2055 = vweird.f32 %v2042
    %vm2056 = vweird.f32 %v2050
    %vm2057 = vmor %vm2055, %vm2056
    %v2058 = vsel %vm2057, %v2050, %v2054
    %v2059 = vand.u32 2147483647, %v2042
    %vm2060 = vcmp.eq.f32.partialorder %v2059, 8.507059e+37
    %v2061 = vand.u32 %v2042, 2147483648
    %v2062 = vor.u32 1.1754944e-38, %v2061
    %v2063 = vsel %vm2060, %v2062, %v2058
    %v2064 = vmul.f32 1.0, %v2063
    %v2065 = vrcp.pop %v2043
    %v2066 = vmul.f32 %v2043, %v2065
    %v2067 = vsub.f32 1.0, %v2066
    %v2068 = vmul.f32 %v2065, %v2067
    %v2069 = vadd.f32 %v2065, %v2068
    %vm2070 = vweird.f32 %v2043
    %vm2071 = vweird.f32 %v2065
    %vm2072 = vmor %vm2070, %vm2071
    %v2073 = vsel %vm2072, %v2065, %v2069
    %v2074 = vand.u32 2147483647, %v2043
    %vm2075 = vcmp.eq.f32.partialorder %v2074, 8.507059e+37
    %v2076 = vand.u32 %v2043, 2147483648
    %v2077 = vor.u32 1.1754944e-38, %v2076
    %v2078 = vsel %vm2075, %v2077, %v2073
    %v2079 = vmul.f32 1.0, %v2078
    %v2080 = vrcp.pop %v2044
    %v2081 = vmul.f32 %v2044, %v2080
    %v2082 = vsub.f32 1.0, %v2081
    %v2083 = vmul.f32 %v2080, %v2082
    %v2084 = vadd.f32 %v2080, %v2083
    %vm2085 = vweird.f32 %v2044
    %vm2086 = vweird.f32 %v2080
    %vm2087 = vmor %vm2085, %vm2086
    %v2088 = vsel %vm2087, %v2080, %v2084
    %v2089 = vand.u32 2147483647, %v2044
    %vm2090 = vcmp.eq.f32.partialorder %v2089, 8.507059e+37
    %v2091 = vand.u32 %v2044, 2147483648
    %v2092 = vor.u32 1.1754944e-38, %v2091
    %v2093 = vsel %vm2090, %v2092, %v2088
    %v2094 = vmul.f32 1.0, %v2093
    %v2095 = vrcp.pop %v2045
    %v2096 = vmul.f32 %v2045, %v2095
    %v2097 = vsub.f32 1.0, %v2096
    %v2098 = vmul.f32 %v2095, %v2097
    %v2099 = vadd.f32 %v2095, %v2098
    %vm2100 = vweird.f32 %v2045
    %vm2101 = vweird.f32 %v2095
    %vm2102 = vmor %vm2100, %vm2101
    %v2103 = vsel %vm2102, %v2095, %v2099
    %v2104 = vand.u32 2147483647, %v2045
    %vm2105 = vcmp.eq.f32.partialorder %v2104, 8.507059e+37
    %v2106 = vand.u32 %v2045, 2147483648
    %v2107 = vor.u32 1.1754944e-38, %v2106
    %v2108 = vsel %vm2105, %v2107, %v2103
    %v2109 = vmul.f32 1.0, %v2108
    %v2110 = vrcp.pop %v2046
    %v2111 = vmul.f32 %v2046, %v2110
    %v2112 = vsub.f32 1.0, %v2111
    %v2113 = vmul.f32 %v2110, %v2112
    %v2114 = vadd.f32 %v2110, %v2113
    %vm2115 = vweird.f32 %v2046
    %vm2116 = vweird.f32 %v2110
    %vm2117 = vmor %vm2115, %vm2116
    %v2118 = vsel %vm2117, %v2110, %v2114
    %v2119 = vand.u32 2147483647, %v2046
    %vm2120 = vcmp.eq.f32.partialorder %v2119, 8.507059e+37
    %v2121 = vand.u32 %v2046, 2147483648
    %v2122 = vor.u32 1.1754944e-38, %v2121
    %v2123 = vsel %vm2120, %v2122, %v2118
    %v2124 = vmul.f32 1.0, %v2123
    %v2125 = vrcp.pop %v2047
    %v2126 = vmul.f32 %v2047, %v2125
    %v2127 = vsub.f32 1.0, %v2126
    %v2128 = vmul.f32 %v2125, %v2127
    %v2129 = vadd.f32 %v2125, %v2128
    %vm2130 = vweird.f32 %v2047
    %vm2131 = vweird.f32 %v2125
    %vm2132 = vmor %vm2130, %vm2131
    %v2133 = vsel %vm2132, %v2125, %v2129
    %v2134 = vand.u32 2147483647, %v2047
    %vm2135 = vcmp.eq.f32.partialorder %v2134, 8.507059e+37
    %v2136 = vand.u32 %v2047, 2147483648
    %v2137 = vor.u32 1.1754944e-38, %v2136
    %v2138 = vsel %vm2135, %v2137, %v2133
    %v2139 = vmul.f32 1.0, %v2138
    %v2140 = vrcp.pop %v2048
    %v2141 = vmul.f32 %v2048, %v2140
    %v2142 = vsub.f32 1.0, %v2141
    %v2143 = vmul.f32 %v2140, %v2142
    %v2144 = vadd.f32 %v2140, %v2143
    %vm2145 = vweird.f32 %v2048
    %vm2146 = vweird.f32 %v2140
    %vm2147 = vmor %vm2145, %vm2146
    %v2148 = vsel %vm2147, %v2140, %v2144
    %v2149 = vand.u32 2147483647, %v2048
    %vm2150 = vcmp.eq.f32.partialorder %v2149, 8.507059e+37
    %v2151 = vand.u32 %v2048, 2147483648
    %v2152 = vor.u32 1.1754944e-38, %v2151
    %v2153 = vsel %vm2150, %v2152, %v2148
    %v2154 = vmul.f32 1.0, %v2153
    %v2155 = vrcp.pop %v2049
    %v2156 = vmul.f32 %v2049, %v2155
    %v2157 = vsub.f32 1.0, %v2156
    %v2158 = vmul.f32 %v2155, %v2157
    %v2159 = vadd.f32 %v2155, %v2158
    %vm2160 = vweird.f32 %v2049
    %vm2161 = vweird.f32 %v2155
    %vm2162 = vmor %vm2160, %vm2161
    %v2163 = vsel %vm2162, %v2155, %v2159
    %v2164 = vand.u32 2147483647, %v2049
    %vm2165 = vcmp.eq.f32.partialorder %v2164, 8.507059e+37
    %v2166 = vand.u32 %v2049, 2147483648
    %v2167 = vor.u32 1.1754944e-38, %v2166
    %v2168 = vsel %vm2165, %v2167, %v2163
    %v2169 = vmul.f32 1.0, %v2168
    %v2170 = vmul.f32 %v2010, %v2064
    %v2171 = vmul.f32 %v2011, %v2079
    %v2172 = vmul.f32 %v2012, %v2094
    %v2173 = vmul.f32 %v2013, %v2109
    %v2174 = vmul.f32 %v2014, %v2124
    %v2175 = vmul.f32 %v2015, %v2139
    %v2176 = vmul.f32 %v2016, %v2154
    %v2177 = vmul.f32 %v2017, %v2169
    %v2178 = vld [vmem:[%s9] sm:$0xff]
    %v2179 = vld [vmem:[%s9 + $0x8] sm:$0xff]
    %v2180 = vld [vmem:[%s9 + $0x10] sm:$0xff]
    %v2181 = vld [vmem:[%s9 + $0x18] sm:$0xff]
    %v2182 = vld [vmem:[%s9 + $0x20] sm:$0xff]
    %v2183 = vld [vmem:[%s9 + $0x28] sm:$0xff]
    %v2184 = vld [vmem:[%s9 + $0x30] sm:$0xff]
    %v2185 = vld [vmem:[%s9 + $0x38] sm:$0xff]
    %vm2186 = vcmask 523264
    %v2188 = vsel %vm2186, %v2170, 0
    %v2191 = vsel %vm2186, %v2171, 0
    %v2194 = vsel %vm2186, %v2172, 0
    %v2197 = vsel %vm2186, %v2173, 0
    %v2200 = vsel %vm2186, %v2174, 0
    %v2203 = vsel %vm2186, %v2175, 0
    %v2206 = vsel %vm2186, %v2176, 0
    %v2209 = vsel %vm2186, %v2177, 0
    %2211 = vmatpush.msra.mxu0 0.0
    %2212 = vmatpush.msra.mxu0 0.0
    %2213 = vmatpush.msra.mxu0 0.0
    %2214 = vmatpush.msra.mxu0 0.0
    %2215 = vmatpush.msra.mxu0 0.0
    %2216 = vmatpush.msra.mxu0 0.0
    %2217 = vmatpush.msra.mxu0 0.0
    %2218 = vmatpush.msra.mxu0 0.0
    %2219 = vmatpush.msra.mxu0 %v2185
    %2220 = vmatpush.msra.mxu0 %v2184
    %2221 = vmatpush.msra.mxu0 %v2183
    %2222 = vmatpush.msra.mxu0 %v2182
    %2223 = vmatpush.msra.mxu0 %v2181
    %2224 = vmatpush.msra.mxu0 %v2180
    %2225 = vmatpush.msra.mxu0 %v2179
    %2226 = vmatpush.msra.mxu0 %v2178
    %2227 = vmatmul.f32.gmra.mxu0 %v2188
    %v2228 = vpop.f32.mrf.mxu0
    %v2229 = vadd.f32 0.0, %v2228
    %2230 = vmatmul.f32.gmra.mxu0 %v2191
    %v2231 = vpop.f32.mrf.mxu0
    %v2232 = vadd.f32 0.0, %v2231
    %2233 = vmatmul.f32.gmra.mxu0 %v2194
    %v2234 = vpop.f32.mrf.mxu0
    %v2235 = vadd.f32 0.0, %v2234
    %2236 = vmatmul.f32.gmra.mxu0 %v2197
    %v2237 = vpop.f32.mrf.mxu0
    %v2238 = vadd.f32 0.0, %v2237
    %2239 = vmatmul.f32.gmra.mxu0 %v2200
    %v2240 = vpop.f32.mrf.mxu0
    %v2241 = vadd.f32 0.0, %v2240
    %2242 = vmatmul.f32.gmra.mxu0 %v2203
    %v2243 = vpop.f32.mrf.mxu0
    %v2244 = vadd.f32 0.0, %v2243
    %2245 = vmatmul.f32.gmra.mxu0 %v2206
    %v2246 = vpop.f32.mrf.mxu0
    %v2247 = vadd.f32 0.0, %v2246
    %2248 = vmatmul.f32.gmra.mxu0 %v2209
    %v2249 = vpop.f32.mrf.mxu0
    %v2250 = vadd.f32 0.0, %v2249
    %2251 = vdwg.mxu0
    %v2252 = vxor.u32 %v2229, 2147483648
    %v2253 = vxor.u32 %v2232, 2147483648
    %v2254 = vxor.u32 %v2235, 2147483648
    %v2255 = vxor.u32 %v2238, 2147483648
    %v2256 = vxor.u32 %v2241, 2147483648
    %v2257 = vxor.u32 %v2244, 2147483648
    %v2258 = vxor.u32 %v2247, 2147483648
    %v2259 = vxor.u32 %v2250, 2147483648
    %v2260 = vmul.f32 %v2252, 1.442695
    %v2261 = vpow.pop %v2260
    %v2262 = vmul.f32 %v2253, 1.442695
    %v2263 = vpow.pop %v2262
    %v2264 = vmul.f32 %v2254, 1.442695
    %v2265 = vpow.pop %v2264
    %v2266 = vmul.f32 %v2255, 1.442695
    %v2267 = vpow.pop %v2266
    %v2268 = vmul.f32 %v2256, 1.442695
    %v2269 = vpow.pop %v2268
    %v2270 = vmul.f32 %v2257, 1.442695
    %v2271 = vpow.pop %v2270
    %v2272 = vmul.f32 %v2258, 1.442695
    %v2273 = vpow.pop %v2272
    %v2274 = vmul.f32 %v2259, 1.442695
    %v2275 = vpow.pop %v2274
    %v2276 = vadd.f32 %v2261, 1.0
    %v2277 = vadd.f32 %v2263, 1.0
    %v2278 = vadd.f32 %v2265, 1.0
    %v2279 = vadd.f32 %v2267, 1.0
    %v2280 = vadd.f32 %v2269, 1.0
    %v2281 = vadd.f32 %v2271, 1.0
    %v2282 = vadd.f32 %v2273, 1.0
    %v2283 = vadd.f32 %v2275, 1.0
    %v2284 = vrcp.pop %v2276
    %v2285 = vmul.f32 %v2276, %v2284
    %v2286 = vsub.f32 1.0, %v2285
    %v2287 = vmul.f32 %v2284, %v2286
    %v2288 = vadd.f32 %v2284, %v2287
    %vm2289 = vweird.f32 %v2276
    %vm2290 = vweird.f32 %v2284
    %vm2291 = vmor %vm2289, %vm2290
    %v2292 = vsel %vm2291, %v2284, %v2288
    %v2293 = vand.u32 2147483647, %v2276
    %vm2294 = vcmp.eq.f32.partialorder %v2293, 8.507059e+37
    %v2295 = vand.u32 %v2276, 2147483648
    %v2296 = vor.u32 1.1754944e-38, %v2295
    %v2297 = vsel %vm2294, %v2296, %v2292
    %v2298 = vmul.f32 1.0, %v2297
    %v2299 = vrcp.pop %v2277
    %v2300 = vmul.f32 %v2277, %v2299
    %v2301 = vsub.f32 1.0, %v2300
    %v2302 = vmul.f32 %v2299, %v2301
    %v2303 = vadd.f32 %v2299, %v2302
    %vm2304 = vweird.f32 %v2277
    %vm2305 = vweird.f32 %v2299
    %vm2306 = vmor %vm2304, %vm2305
    %v2307 = vsel %vm2306, %v2299, %v2303
    %v2308 = vand.u32 2147483647, %v2277
    %vm2309 = vcmp.eq.f32.partialorder %v2308, 8.507059e+37
    %v2310 = vand.u32 %v2277, 2147483648
    %v2311 = vor.u32 1.1754944e-38, %v2310
    %v2312 = vsel %vm2309, %v2311, %v2307
    %v2313 = vmul.f32 1.0, %v2312
    %v2314 = vrcp.pop %v2278
    %v2315 = vmul.f32 %v2278, %v2314
    %v2316 = vsub.f32 1.0, %v2315
    %v2317 = vmul.f32 %v2314, %v2316
    %v2318 = vadd.f32 %v2314, %v2317
    %vm2319 = vweird.f32 %v2278
    %vm2320 = vweird.f32 %v2314
    %vm2321 = vmor %vm2319, %vm2320
    %v2322 = vsel %vm2321, %v2314, %v2318
    %v2323 = vand.u32 2147483647, %v2278
    %vm2324 = vcmp.eq.f32.partialorder %v2323, 8.507059e+37
    %v2325 = vand.u32 %v2278, 2147483648
    %v2326 = vor.u32 1.1754944e-38, %v2325
    %v2327 = vsel %vm2324, %v2326, %v2322
    %v2328 = vmul.f32 1.0, %v2327
    %v2329 = vrcp.pop %v2279
    %v2330 = vmul.f32 %v2279, %v2329
    %v2331 = vsub.f32 1.0, %v2330
    %v2332 = vmul.f32 %v2329, %v2331
    %v2333 = vadd.f32 %v2329, %v2332
    %vm2334 = vweird.f32 %v2279
    %vm2335 = vweird.f32 %v2329
    %vm2336 = vmor %vm2334, %vm2335
    %v2337 = vsel %vm2336, %v2329, %v2333
    %v2338 = vand.u32 2147483647, %v2279
    %vm2339 = vcmp.eq.f32.partialorder %v2338, 8.507059e+37
    %v2340 = vand.u32 %v2279, 2147483648
    %v2341 = vor.u32 1.1754944e-38, %v2340
    %v2342 = vsel %vm2339, %v2341, %v2337
    %v2343 = vmul.f32 1.0, %v2342
    %v2344 = vrcp.pop %v2280
    %v2345 = vmul.f32 %v2280, %v2344
    %v2346 = vsub.f32 1.0, %v2345
    %v2347 = vmul.f32 %v2344, %v2346
    %v2348 = vadd.f32 %v2344, %v2347
    %vm2349 = vweird.f32 %v2280
    %vm2350 = vweird.f32 %v2344
    %vm2351 = vmor %vm2349, %vm2350
    %v2352 = vsel %vm2351, %v2344, %v2348
    %v2353 = vand.u32 2147483647, %v2280
    %vm2354 = vcmp.eq.f32.partialorder %v2353, 8.507059e+37
    %v2355 = vand.u32 %v2280, 2147483648
    %v2356 = vor.u32 1.1754944e-38, %v2355
    %v2357 = vsel %vm2354, %v2356, %v2352
    %v2358 = vmul.f32 1.0, %v2357
    %v2359 = vrcp.pop %v2281
    %v2360 = vmul.f32 %v2281, %v2359
    %v2361 = vsub.f32 1.0, %v2360
    %v2362 = vmul.f32 %v2359, %v2361
    %v2363 = vadd.f32 %v2359, %v2362
    %vm2364 = vweird.f32 %v2281
    %vm2365 = vweird.f32 %v2359
    %vm2366 = vmor %vm2364, %vm2365
    %v2367 = vsel %vm2366, %v2359, %v2363
    %v2368 = vand.u32 2147483647, %v2281
    %vm2369 = vcmp.eq.f32.partialorder %v2368, 8.507059e+37
    %v2370 = vand.u32 %v2281, 2147483648
    %v2371 = vor.u32 1.1754944e-38, %v2370
    %v2372 = vsel %vm2369, %v2371, %v2367
    %v2373 = vmul.f32 1.0, %v2372
    %v2374 = vrcp.pop %v2282
    %v2375 = vmul.f32 %v2282, %v2374
    %v2376 = vsub.f32 1.0, %v2375
    %v2377 = vmul.f32 %v2374, %v2376
    %v2378 = vadd.f32 %v2374, %v2377
    %vm2379 = vweird.f32 %v2282
    %vm2380 = vweird.f32 %v2374
    %vm2381 = vmor %vm2379, %vm2380
    %v2382 = vsel %vm2381, %v2374, %v2378
    %v2383 = vand.u32 2147483647, %v2282
    %vm2384 = vcmp.eq.f32.partialorder %v2383, 8.507059e+37
    %v2385 = vand.u32 %v2282, 2147483648
    %v2386 = vor.u32 1.1754944e-38, %v2385
    %v2387 = vsel %vm2384, %v2386, %v2382
    %v2388 = vmul.f32 1.0, %v2387
    %v2389 = vrcp.pop %v2283
    %v2390 = vmul.f32 %v2283, %v2389
    %v2391 = vsub.f32 1.0, %v2390
    %v2392 = vmul.f32 %v2389, %v2391
    %v2393 = vadd.f32 %v2389, %v2392
    %vm2394 = vweird.f32 %v2283
    %vm2395 = vweird.f32 %v2389
    %vm2396 = vmor %vm2394, %vm2395
    %v2397 = vsel %vm2396, %v2389, %v2393
    %v2398 = vand.u32 2147483647, %v2283
    %vm2399 = vcmp.eq.f32.partialorder %v2398, 8.507059e+37
    %v2400 = vand.u32 %v2283, 2147483648
    %v2401 = vor.u32 1.1754944e-38, %v2400
    %v2402 = vsel %vm2399, %v2401, %v2397
    %v2403 = vmul.f32 1.0, %v2402
    %v2404 = vmul.f32 %v2229, %v2298
    %v2405 = vmul.f32 %v2232, %v2313
    %v2406 = vmul.f32 %v2235, %v2328
    %v2407 = vmul.f32 %v2238, %v2343
    %v2408 = vmul.f32 %v2241, %v2358
    %v2409 = vmul.f32 %v2244, %v2373
    %v2410 = vmul.f32 %v2247, %v2388
    %v2411 = vmul.f32 %v2250, %v2403
    %v2412 = vld [vmem:[%s10] sm:$0xff]
    %v2413 = vld [vmem:[%s10 + $0x8] sm:$0xff]
    %v2414 = vld [vmem:[%s10 + $0x10] sm:$0xff]
    %v2415 = vld [vmem:[%s10 + $0x18] sm:$0xff]
    %v2416 = vld [vmem:[%s10 + $0x20] sm:$0xff]
    %v2417 = vld [vmem:[%s10 + $0x28] sm:$0xff]
    %v2418 = vld [vmem:[%s10 + $0x30] sm:$0xff]
    %v2419 = vld [vmem:[%s10 + $0x38] sm:$0xff]
    %v2421 = vsel %vm2186, %v2404, 0
    %v2424 = vsel %vm2186, %v2405, 0
    %v2427 = vsel %vm2186, %v2406, 0
    %v2430 = vsel %vm2186, %v2407, 0
    %v2433 = vsel %vm2186, %v2408, 0
    %v2436 = vsel %vm2186, %v2409, 0
    %v2439 = vsel %vm2186, %v2410, 0
    %v2442 = vsel %vm2186, %v2411, 0
    %2444 = vmatpush.msra.mxu0 0.0
    %2445 = vmatpush.msra.mxu0 0.0
    %2446 = vmatpush.msra.mxu0 0.0
    %2447 = vmatpush.msra.mxu0 0.0
    %2448 = vmatpush.msra.mxu0 0.0
    %2449 = vmatpush.msra.mxu0 0.0
    %2450 = vmatpush.msra.mxu0 0.0
    %2451 = vmatpush.msra.mxu0 0.0
    %2452 = vmatpush.msra.mxu0 %v2419
    %2453 = vmatpush.msra.mxu0 %v2418
    %2454 = vmatpush.msra.mxu0 %v2417
    %2455 = vmatpush.msra.mxu0 %v2416
    %2456 = vmatpush.msra.mxu0 %v2415
    %2457 = vmatpush.msra.mxu0 %v2414
    %2458 = vmatpush.msra.mxu0 %v2413
    %2459 = vmatpush.msra.mxu0 %v2412
    %2460 = vmatmul.f32.gmra.mxu0 %v2421
    %v2461 = vpop.f32.mrf.mxu0
    %v2462 = vadd.f32 0.0, %v2461
    %2463 = vmatmul.f32.gmra.mxu0 %v2424
    %v2464 = vpop.f32.mrf.mxu0
    %v2465 = vadd.f32 0.0, %v2464
    %2466 = vmatmul.f32.gmra.mxu0 %v2427
    %v2467 = vpop.f32.mrf.mxu0
    %v2468 = vadd.f32 0.0, %v2467
    %2469 = vmatmul.f32.gmra.mxu0 %v2430
    %v2470 = vpop.f32.mrf.mxu0
    %v2471 = vadd.f32 0.0, %v2470
    %2472 = vmatmul.f32.gmra.mxu0 %v2433
    %v2473 = vpop.f32.mrf.mxu0
    %v2474 = vadd.f32 0.0, %v2473
    %2475 = vmatmul.f32.gmra.mxu0 %v2436
    %v2476 = vpop.f32.mrf.mxu0
    %v2477 = vadd.f32 0.0, %v2476
    %2478 = vmatmul.f32.gmra.mxu0 %v2439
    %v2479 = vpop.f32.mrf.mxu0
    %v2480 = vadd.f32 0.0, %v2479
    %2481 = vmatmul.f32.gmra.mxu0 %v2442
    %v2482 = vpop.f32.mrf.mxu0
    %v2483 = vadd.f32 0.0, %v2482
    %2484 = vdwg.mxu0
    %v2485 = vperm.slane %v109, 7
    %v2486 = vadd.f32 %v2462, %v2485
    %v2487 = vadd.f32 %v2465, %v2485
    %v2488 = vadd.f32 %v2468, %v2485
    %v2489 = vadd.f32 %v2471, %v2485
    %v2490 = vadd.f32 %v2474, %v2485
    %v2491 = vadd.f32 %v2477, %v2485
    %v2492 = vadd.f32 %v2480, %v2485
    %v2493 = vadd.f32 %v2483, %v2485
    %2495 = vset.pattern.permute.xlu0 0
    %2496 = vperm.xlu0 %2495, %v1716
    %v2497 = vpop.permute.xlu0 %2496
    %2500 = vset.pattern.permute.xlu0 0
    %2501 = vperm.xlu0 %2500, %v1717
    %v2502 = vpop.permute.xlu0 %2501
    %2505 = vset.pattern.permute.xlu0 0
    %2506 = vperm.xlu0 %2505, %v1718
    %v2507 = vpop.permute.xlu0 %2506
    %2510 = vset.pattern.permute.xlu0 0
    %2511 = vperm.xlu0 %2510, %v1719
    %v2512 = vpop.permute.xlu0 %2511
    %2515 = vset.pattern.permute.xlu0 0
    %2516 = vperm.xlu0 %2515, %v1720
    %v2517 = vpop.permute.xlu0 %2516
    %2520 = vset.pattern.permute.xlu0 0
    %2521 = vperm.xlu0 %2520, %v1721
    %v2522 = vpop.permute.xlu0 %2521
    %2525 = vset.pattern.permute.xlu0 0
    %2526 = vperm.xlu0 %2525, %v1722
    %v2527 = vpop.permute.xlu0 %2526
    %2530 = vset.pattern.permute.xlu0 0
    %2531 = vperm.xlu0 %2530, %v1723
    %v2532 = vpop.permute.xlu0 %2531
    %v2534 = vmul.f32 %v2497, %v2486
    %v2535 = vmul.f32 %v2502, %v2487
    %v2536 = vmul.f32 %v2507, %v2488
    %v2537 = vmul.f32 %v2512, %v2489
    %v2538 = vmul.f32 %v2517, %v2490
    %v2539 = vmul.f32 %v2522, %v2491
    %v2540 = vmul.f32 %v2527, %v2492
    %v2541 = vmul.f32 %v2532, %v2493
    %2542 = vst [vmem:[#allocation10] sm:$0xff] %v2534
    %2543 = vst [vmem:[#allocation10 + $0x8] sm:$0xff] %v2535
    %2544 = vst [vmem:[#allocation10 + $0x10] sm:$0xff] %v2536
    %2545 = vst [vmem:[#allocation10 + $0x18] sm:$0xff] %v2537
    %2546 = vst [vmem:[#allocation10 + $0x20] sm:$0xff] %v2538
    %2547 = vst [vmem:[#allocation10 + $0x28] sm:$0xff] %v2539
    %2548 = vst [vmem:[#allocation10 + $0x30] sm:$0xff] %v2540
    %2549 = vst [vmem:[#allocation10 + $0x38] sm:$0xff] %v2541
    %v2550 = vld [vmem:[%s4] sm:$0xff]
    %v2551 = vld [vmem:[%s4 + $0x8] sm:$0xff]
    %v2552 = vld [vmem:[%s4 + $0x10] sm:$0xff]
    %v2553 = vld [vmem:[%s4 + $0x18] sm:$0xff]
    %v2554 = vld [vmem:[%s4 + $0x20] sm:$0xff]
    %v2555 = vld [vmem:[%s4 + $0x28] sm:$0xff]
    %v2556 = vld [vmem:[%s4 + $0x30] sm:$0xff]
    %v2557 = vld [vmem:[%s4 + $0x38] sm:$0xff]
    %v2558 = vld [vmem:[%s12] sm:$0xff]
    %v2559 = vld [vmem:[%s12 + $0x8] sm:$0x1]
    %vm2560 = vcmask 72704
    %v2562 = vsel %vm2560, %v2550, 0
    %v2565 = vsel %vm2560, %v2551, 0
    %v2568 = vsel %vm2560, %v2552, 0
    %v2571 = vsel %vm2560, %v2553, 0
    %v2574 = vsel %vm2560, %v2554, 0
    %v2577 = vsel %vm2560, %v2555, 0
    %v2580 = vsel %vm2560, %v2556, 0
    %v2583 = vsel %vm2560, %v2557, 0
    %vm2585 = vcmask 1040384
    %v2587 = vsel %vm2585, %v2559, 0
    %2589 = vmatpush.msra.mxu0 0.0
    %2590 = vmatpush.msra.mxu0 0.0
    %2591 = vmatpush.msra.mxu0 0.0
    %2592 = vmatpush.msra.mxu0 0.0
    %2593 = vmatpush.msra.mxu0 0.0
    %2594 = vmatpush.msra.mxu0 0.0
    %2595 = vmatpush.msra.mxu0 0.0
    %2596 = vmatpush.msra.mxu0 0.0
    %2597 = vmatpush.msra.mxu0 0.0
    %2598 = vmatpush.msra.mxu0 0.0
    %2599 = vmatpush.msra.mxu0 0.0
    %2600 = vmatpush.msra.mxu0 0.0
    %2601 = vmatpush.msra.mxu0 0.0
    %2602 = vmatpush.msra.mxu0 0.0
    %2603 = vmatpush.msra.mxu0 %v2587
    %2604 = vmatpush.msra.mxu0 %v2558
    %2605 = vmatmul.f32.gmra.mxu0 %v2562
    %v2606 = vpop.f32.mrf.mxu0
    %v2607 = vadd.f32 0.0, %v2606
    %2608 = vmatmul.f32.gmra.mxu0 %v2565
    %v2609 = vpop.f32.mrf.mxu0
    %v2610 = vadd.f32 0.0, %v2609
    %2611 = vmatmul.f32.gmra.mxu0 %v2568
    %v2612 = vpop.f32.mrf.mxu0
    %v2613 = vadd.f32 0.0, %v2612
    %2614 = vmatmul.f32.gmra.mxu0 %v2571
    %v2615 = vpop.f32.mrf.mxu0
    %v2616 = vadd.f32 0.0, %v2615
    %2617 = vmatmul.f32.gmra.mxu0 %v2574
    %v2618 = vpop.f32.mrf.mxu0
    %v2619 = vadd.f32 0.0, %v2618
    %2620 = vmatmul.f32.gmra.mxu0 %v2577
    %v2621 = vpop.f32.mrf.mxu0
    %v2622 = vadd.f32 0.0, %v2621
    %2623 = vmatmul.f32.gmra.mxu0 %v2580
    %v2624 = vpop.f32.mrf.mxu0
    %v2625 = vadd.f32 0.0, %v2624
    %2626 = vmatmul.f32.gmra.mxu0 %v2583
    %v2627 = vpop.f32.mrf.mxu0
    %v2628 = vadd.f32 0.0, %v2627
    %2629 = vdwg.mxu0
    %v2630 = vld [vmem:[%s11] sm:$0xff]
    %v2631 = vld [vmem:[%s11 + $0x8] sm:$0xff]
    %v2632 = vld [vmem:[%s11 + $0x10] sm:$0xff]
    %v2633 = vld [vmem:[%s11 + $0x18] sm:$0xff]
    %v2634 = vld [vmem:[%s11 + $0x20] sm:$0xff]
    %v2635 = vld [vmem:[%s11 + $0x28] sm:$0xff]
    %v2636 = vld [vmem:[%s11 + $0x30] sm:$0xff]
    %v2637 = vld [vmem:[%s11 + $0x38] sm:$0xff]
    %v2638 = vld [vmem:[%s11 + $0x40] sm:$0xff]
    %v2639 = vld [vmem:[%s11 + $0x48] sm:$0xff]
    %v2640 = vld [vmem:[%s11 + $0x50] sm:$0xff]
    %v2641 = vld [vmem:[%s11 + $0x58] sm:$0xff]
    %v2642 = vld [vmem:[%s11 + $0x60] sm:$0xff]
    %v2643 = vld [vmem:[%s11 + $0x68] sm:$0xff]
    %v2644 = vld [vmem:[%s11 + $0x70] sm:$0xff]
    %v2645 = vld [vmem:[%s11 + $0x78] sm:$0xff]
    %2646 = vmatpush.msra.mxu0 %v2645
    %2647 = vmatpush.msra.mxu0 %v2644
    %2648 = vmatpush.msra.mxu0 %v2643
    %2649 = vmatpush.msra.mxu0 %v2642
    %2650 = vmatpush.msra.mxu0 %v2641
    %2651 = vmatpush.msra.mxu0 %v2640
    %2652 = vmatpush.msra.mxu0 %v2639
    %2653 = vmatpush.msra.mxu0 %v2638
    %2654 = vmatpush.msra.mxu0 %v2637
    %2655 = vmatpush.msra.mxu0 %v2636
    %2656 = vmatpush.msra.mxu0 %v2635
    %2657 = vmatpush.msra.mxu0 %v2634
    %2658 = vmatpush.msra.mxu0 %v2633
    %2659 = vmatpush.msra.mxu0 %v2632
    %2660 = vmatpush.msra.mxu0 %v2631
    %2661 = vmatpush.msra.mxu0 %v2630
    %2662 = vmatmul.f32.gmra.mxu0 %v2462
    %v2663 = vpop.f32.mrf.mxu0
    %v2664 = vadd.f32 0.0, %v2663
    %2665 = vmatmul.f32.gmra.mxu0 %v2465
    %v2666 = vpop.f32.mrf.mxu0
    %v2667 = vadd.f32 0.0, %v2666
    %2668 = vmatmul.f32.gmra.mxu0 %v2468
    %v2669 = vpop.f32.mrf.mxu0
    %v2670 = vadd.f32 0.0, %v2669
    %2671 = vmatmul.f32.gmra.mxu0 %v2471
    %v2672 = vpop.f32.mrf.mxu0
    %v2673 = vadd.f32 0.0, %v2672
    %2674 = vmatmul.f32.gmra.mxu0 %v2474
    %v2675 = vpop.f32.mrf.mxu0
    %v2676 = vadd.f32 0.0, %v2675
    %2677 = vmatmul.f32.gmra.mxu0 %v2477
    %v2678 = vpop.f32.mrf.mxu0
    %v2679 = vadd.f32 0.0, %v2678
    %2680 = vmatmul.f32.gmra.mxu0 %v2480
    %v2681 = vpop.f32.mrf.mxu0
    %v2682 = vadd.f32 0.0, %v2681
    %2683 = vmatmul.f32.gmra.mxu0 %v2483
    %v2684 = vpop.f32.mrf.mxu0
    %v2685 = vadd.f32 0.0, %v2684
    %2686 = vdwg.mxu0
    %v2687 = vmul.f32 %v2664, %v2607
    %v2688 = vmul.f32 %v2667, %v2610
    %v2689 = vmul.f32 %v2670, %v2613
    %v2690 = vmul.f32 %v2673, %v2616
    %v2691 = vmul.f32 %v2676, %v2619
    %v2692 = vmul.f32 %v2679, %v2622
    %v2693 = vmul.f32 %v2682, %v2625
    %v2694 = vmul.f32 %v2685, %v2628
    %v2695 = vmul.f32 %v2497, %v2687
    %v2696 = vmul.f32 %v2502, %v2688
    %v2697 = vmul.f32 %v2507, %v2689
    %v2698 = vmul.f32 %v2512, %v2690
    %v2699 = vmul.f32 %v2517, %v2691
    %v2700 = vmul.f32 %v2522, %v2692
    %v2701 = vmul.f32 %v2527, %v2693
    %v2702 = vmul.f32 %v2532, %v2694
    %2703 = vst [vmem:[#allocation11] sm:$0xff] %v2695
    %2704 = vst [vmem:[#allocation11 + $0x8] sm:$0xff] %v2696
    %2705 = vst [vmem:[#allocation11 + $0x10] sm:$0xff] %v2697
    %2706 = vst [vmem:[#allocation11 + $0x18] sm:$0xff] %v2698
    %2707 = vst [vmem:[#allocation11 + $0x20] sm:$0xff] %v2699
    %2708 = vst [vmem:[#allocation11 + $0x28] sm:$0xff] %v2700
    %2709 = vst [vmem:[#allocation11 + $0x30] sm:$0xff] %v2701
    %2710 = vst [vmem:[#allocation11 + $0x38] sm:$0xff] %v2702
    %v2711 = vperm.slane %v109, 5
    %v2712 = vmul.f32 %v2687, %v2711
    %v2713 = vmul.f32 %v2688, %v2711
    %v2714 = vmul.f32 %v2689, %v2711
    %v2715 = vmul.f32 %v2690, %v2711
    %v2716 = vmul.f32 %v2691, %v2711
    %v2717 = vmul.f32 %v2692, %v2711
    %v2718 = vmul.f32 %v2693, %v2711
    %v2719 = vmul.f32 %v2694, %v2711
    %2720 = vadd.xlane.f32.xlu0 %v2712
    %v2721 = vpop.xlane.xlu0 %2720
    %2722 = vadd.xlane.f32.xlu0 %v2713
    %v2723 = vpop.xlane.xlu0 %2722
    %2724 = vadd.xlane.f32.xlu0 %v2714
    %v2725 = vpop.xlane.xlu0 %2724
    %2726 = vadd.xlane.f32.xlu0 %v2715
    %v2727 = vpop.xlane.xlu0 %2726
    %2728 = vadd.xlane.f32.xlu0 %v2716
    %v2729 = vpop.xlane.xlu0 %2728
    %2730 = vadd.xlane.f32.xlu0 %v2717
    %v2731 = vpop.xlane.xlu0 %2730
    %2732 = vadd.xlane.f32.xlu0 %v2718
    %v2733 = vpop.xlane.xlu0 %2732
    %2734 = vadd.xlane.f32.xlu0 %v2719
    %v2735 = vpop.xlane.xlu0 %2734
    %v2736 = vmul.f32 %v2721, 0.125
    %v2737 = vmul.f32 %v2723, 0.125
    %v2738 = vmul.f32 %v2725, 0.125
    %v2739 = vmul.f32 %v2727, 0.125
    %v2740 = vmul.f32 %v2729, 0.125
    %v2741 = vmul.f32 %v2731, 0.125
    %v2742 = vmul.f32 %v2733, 0.125
    %v2743 = vmul.f32 %v2735, 0.125
    %v2744 = vmul.f32 %v2736, %v2711
    %v2745 = vmul.f32 %v2737, %v2711
    %v2746 = vmul.f32 %v2738, %v2711
    %v2747 = vmul.f32 %v2739, %v2711
    %v2748 = vmul.f32 %v2740, %v2711
    %v2749 = vmul.f32 %v2741, %v2711
    %v2750 = vmul.f32 %v2742, %v2711
    %v2751 = vmul.f32 %v2743, %v2711
    %v2752 = vsub.f32 %v2687, %v2744
    %v2753 = vsub.f32 %v2688, %v2745
    %v2754 = vsub.f32 %v2689, %v2746
    %v2755 = vsub.f32 %v2690, %v2747
    %v2756 = vsub.f32 %v2691, %v2748
    %v2757 = vsub.f32 %v2692, %v2749
    %v2758 = vsub.f32 %v2693, %v2750
    %v2759 = vsub.f32 %v2694, %v2751
    %v2760 = vmul.f32 %v2752, %v2752
    %v2761 = vmul.f32 %v2753, %v2753
    %v2762 = vmul.f32 %v2754, %v2754
    %v2763 = vmul.f32 %v2755, %v2755
    %v2764 = vmul.f32 %v2756, %v2756
    %v2765 = vmul.f32 %v2757, %v2757
    %v2766 = vmul.f32 %v2758, %v2758
    %v2767 = vmul.f32 %v2759, %v2759
    %v2768 = vperm.slane %v109, 4
    %v2769 = vmul.f32 %v2760, %v2768
    %v2770 = vmul.f32 %v2761, %v2768
    %v2771 = vmul.f32 %v2762, %v2768
    %v2772 = vmul.f32 %v2763, %v2768
    %v2773 = vmul.f32 %v2764, %v2768
    %v2774 = vmul.f32 %v2765, %v2768
    %v2775 = vmul.f32 %v2766, %v2768
    %v2776 = vmul.f32 %v2767, %v2768
    %2777 = vadd.xlane.f32.xlu0 %v2769
    %v2778 = vpop.xlane.xlu0 %2777
    %2779 = vadd.xlane.f32.xlu0 %v2770
    %v2780 = vpop.xlane.xlu0 %2779
    %2781 = vadd.xlane.f32.xlu0 %v2771
    %v2782 = vpop.xlane.xlu0 %2781
    %2783 = vadd.xlane.f32.xlu0 %v2772
    %v2784 = vpop.xlane.xlu0 %2783
    %2785 = vadd.xlane.f32.xlu0 %v2773
    %v2786 = vpop.xlane.xlu0 %2785
    %2787 = vadd.xlane.f32.xlu0 %v2774
    %v2788 = vpop.xlane.xlu0 %2787
    %2789 = vadd.xlane.f32.xlu0 %v2775
    %v2790 = vpop.xlane.xlu0 %2789
    %2791 = vadd.xlane.f32.xlu0 %v2776
    %v2792 = vpop.xlane.xlu0 %2791
    %v2793 = vadd.f32 %v2778, 1e-05
    %v2794 = vadd.f32 %v2780, 1e-05
    %v2795 = vadd.f32 %v2782, 1e-05
    %v2796 = vadd.f32 %v2784, 1e-05
    %v2797 = vadd.f32 %v2786, 1e-05
    %v2798 = vadd.f32 %v2788, 1e-05
    %v2799 = vadd.f32 %v2790, 1e-05
    %v2800 = vadd.f32 %v2792, 1e-05
    %v2801 = vrsqrt.pop %v2793
    %v2802 = vmul.f32 %v2801, %v2793
    %v2803 = vmul.f32 %v2802, %v2801
    %v2804 = vmul.f32 0.5, %v2803
    %v2805 = vsub.f32 1.5, %v2804
    %v2806 = vmul.f32 %v2801, %v2805
    %vm2807 = vweird.f32 %v2793
    %vm2808 = vweird.f32 %v2801
    %vm2809 = vmor %vm2807, %vm2808
    %v2810 = vsel %vm2809, %v2801, %v2806
    %v2811 = vrsqrt.pop %v2794
    %v2812 = vmul.f32 %v2811, %v2794
    %v2813 = vmul.f32 %v2812, %v2811
    %v2814 = vmul.f32 0.5, %v2813
    %v2815 = vsub.f32 1.5, %v2814
    %v2816 = vmul.f32 %v2811, %v2815
    %vm2817 = vweird.f32 %v2794
    %vm2818 = vweird.f32 %v2811
    %vm2819 = vmor %vm2817, %vm2818
    %v2820 = vsel %vm2819, %v2811, %v2816
    %v2821 = vrsqrt.pop %v2795
    %v2822 = vmul.f32 %v2821, %v2795
    %v2823 = vmul.f32 %v2822, %v2821
    %v2824 = vmul.f32 0.5, %v2823
    %v2825 = vsub.f32 1.5, %v2824
    %v2826 = vmul.f32 %v2821, %v2825
    %vm2827 = vweird.f32 %v2795
    %vm2828 = vweird.f32 %v2821
    %vm2829 = vmor %vm2827, %vm2828
    %v2830 = vsel %vm2829, %v2821, %v2826
    %v2831 = vrsqrt.pop %v2796
    %v2832 = vmul.f32 %v2831, %v2796
    %v2833 = vmul.f32 %v2832, %v2831
    %v2834 = vmul.f32 0.5, %v2833
    %v2835 = vsub.f32 1.5, %v2834
    %v2836 = vmul.f32 %v2831, %v2835
    %vm2837 = vweird.f32 %v2796
    %vm2838 = vweird.f32 %v2831
    %vm2839 = vmor %vm2837, %vm2838
    %v2840 = vsel %vm2839, %v2831, %v2836
    %v2841 = vrsqrt.pop %v2797
    %v2842 = vmul.f32 %v2841, %v2797
    %v2843 = vmul.f32 %v2842, %v2841
    %v2844 = vmul.f32 0.5, %v2843
    %v2845 = vsub.f32 1.5, %v2844
    %v2846 = vmul.f32 %v2841, %v2845
    %vm2847 = vweird.f32 %v2797
    %vm2848 = vweird.f32 %v2841
    %vm2849 = vmor %vm2847, %vm2848
    %v2850 = vsel %vm2849, %v2841, %v2846
    %v2851 = vrsqrt.pop %v2798
    %v2852 = vmul.f32 %v2851, %v2798
    %v2853 = vmul.f32 %v2852, %v2851
    %v2854 = vmul.f32 0.5, %v2853
    %v2855 = vsub.f32 1.5, %v2854
    %v2856 = vmul.f32 %v2851, %v2855
    %vm2857 = vweird.f32 %v2798
    %vm2858 = vweird.f32 %v2851
    %vm2859 = vmor %vm2857, %vm2858
    %v2860 = vsel %vm2859, %v2851, %v2856
    %v2861 = vrsqrt.pop %v2799
    %v2862 = vmul.f32 %v2861, %v2799
    %v2863 = vmul.f32 %v2862, %v2861
    %v2864 = vmul.f32 0.5, %v2863
    %v2865 = vsub.f32 1.5, %v2864
    %v2866 = vmul.f32 %v2861, %v2865
    %vm2867 = vweird.f32 %v2799
    %vm2868 = vweird.f32 %v2861
    %vm2869 = vmor %vm2867, %vm2868
    %v2870 = vsel %vm2869, %v2861, %v2866
    %v2871 = vrsqrt.pop %v2800
    %v2872 = vmul.f32 %v2871, %v2800
    %v2873 = vmul.f32 %v2872, %v2871
    %v2874 = vmul.f32 0.5, %v2873
    %v2875 = vsub.f32 1.5, %v2874
    %v2876 = vmul.f32 %v2871, %v2875
    %vm2877 = vweird.f32 %v2800
    %vm2878 = vweird.f32 %v2871
    %vm2879 = vmor %vm2877, %vm2878
    %v2880 = vsel %vm2879, %v2871, %v2876
    %v2881 = vmul.f32 %v2752, %v2810
    %v2882 = vmul.f32 %v2753, %v2820
    %v2883 = vmul.f32 %v2754, %v2830
    %v2884 = vmul.f32 %v2755, %v2840
    %v2885 = vmul.f32 %v2756, %v2850
    %v2886 = vmul.f32 %v2757, %v2860
    %v2887 = vmul.f32 %v2758, %v2870
    %v2888 = vmul.f32 %v2759, %v2880
    %v2889 = vperm.slane %v109, 0
    %v2890 = vmul.f32 %v2881, %v2889
    %v2891 = vmul.f32 %v2882, %v2889
    %v2892 = vmul.f32 %v2883, %v2889
    %v2893 = vmul.f32 %v2884, %v2889
    %v2894 = vmul.f32 %v2885, %v2889
    %v2895 = vmul.f32 %v2886, %v2889
    %v2896 = vmul.f32 %v2887, %v2889
    %v2897 = vmul.f32 %v2888, %v2889
    %v2898 = vperm.slane %v109, 1
    %v2899 = vadd.f32 %v2890, %v2898
    %v2900 = vadd.f32 %v2891, %v2898
    %v2901 = vadd.f32 %v2892, %v2898
    %v2902 = vadd.f32 %v2893, %v2898
    %v2903 = vadd.f32 %v2894, %v2898
    %v2904 = vadd.f32 %v2895, %v2898
    %v2905 = vadd.f32 %v2896, %v2898
    %v2906 = vadd.f32 %v2897, %v2898
    %2908 = vset.pattern.permute.xlu0 0
    %2909 = vperm.xlu0 %2908, %v1740
    %v2910 = vpop.permute.xlu0 %2909
    %2913 = vset.pattern.permute.xlu0 0
    %2914 = vperm.xlu0 %2913, %v1741
    %v2915 = vpop.permute.xlu0 %2914
    %2918 = vset.pattern.permute.xlu0 0
    %2919 = vperm.xlu0 %2918, %v1742
    %v2920 = vpop.permute.xlu0 %2919
    %2923 = vset.pattern.permute.xlu0 0
    %2924 = vperm.xlu0 %2923, %v1743
    %v2925 = vpop.permute.xlu0 %2924
    %2928 = vset.pattern.permute.xlu0 0
    %2929 = vperm.xlu0 %2928, %v1744
    %v2930 = vpop.permute.xlu0 %2929
    %2933 = vset.pattern.permute.xlu0 0
    %2934 = vperm.xlu0 %2933, %v1745
    %v2935 = vpop.permute.xlu0 %2934
    %2938 = vset.pattern.permute.xlu0 0
    %2939 = vperm.xlu0 %2938, %v1746
    %v2940 = vpop.permute.xlu0 %2939
    %2943 = vset.pattern.permute.xlu0 0
    %2944 = vperm.xlu0 %2943, %v1747
    %v2945 = vpop.permute.xlu0 %2944
    %v2947 = vmul.f32 %v2899, %v2910
    %v2948 = vmul.f32 %v2900, %v2915
    %v2949 = vmul.f32 %v2901, %v2920
    %v2950 = vmul.f32 %v2902, %v2925
    %v2951 = vmul.f32 %v2903, %v2930
    %v2952 = vmul.f32 %v2904, %v2935
    %v2953 = vmul.f32 %v2905, %v2940
    %v2954 = vmul.f32 %v2906, %v2945
    %2955 = vst [vmem:[#allocation13] sm:$0xff] %v2947
    %2956 = vst [vmem:[#allocation13 + $0x8] sm:$0xff] %v2948
    %2957 = vst [vmem:[#allocation13 + $0x10] sm:$0xff] %v2949
    %2958 = vst [vmem:[#allocation13 + $0x18] sm:$0xff] %v2950
    %2959 = vst [vmem:[#allocation13 + $0x20] sm:$0xff] %v2951
    %2960 = vst [vmem:[#allocation13 + $0x28] sm:$0xff] %v2952
    %2961 = vst [vmem:[#allocation13 + $0x30] sm:$0xff] %v2953
    %2962 = vst [vmem:[#allocation13 + $0x38] sm:$0xff] %v2954
    %v2964 = vsel %vm2186, %v233, 0
    %v2967 = vsel %vm2186, %v234, 0
    %2969 = vmatpush.msra.mxu0 0.0
    %2970 = vmatpush.msra.mxu0 0.0
    %2971 = vmatpush.msra.mxu0 0.0
    %2972 = vmatpush.msra.mxu0 0.0
    %2973 = vmatpush.msra.mxu0 0.0
    %2974 = vmatpush.msra.mxu0 0.0
    %2975 = vmatpush.msra.mxu0 0.0
    %2976 = vmatpush.msra.mxu0 0.0
    %2977 = vmatpush.msra.mxu0 %v2702
    %2978 = vmatpush.msra.mxu0 %v2701
    %2979 = vmatpush.msra.mxu0 %v2700
    %2980 = vmatpush.msra.mxu0 %v2699
    %2981 = vmatpush.msra.mxu0 %v2698
    %2982 = vmatpush.msra.mxu0 %v2697
    %2983 = vmatpush.msra.mxu0 %v2696
    %2984 = vmatpush.msra.mxu0 %v2695
    %2985 = vmatmul.f32.gmra.mxu0 %v2964
    %v2986 = vpop.f32.mrf.mxu0
    %v2987 = vadd.f32 0.0, %v2986
    %2988 = vmatmul.f32.gmra.mxu0 %v2967
    %v2989 = vpop.f32.mrf.mxu0
    %v2990 = vadd.f32 0.0, %v2989
    %2991 = vdwg.mxu0
    %v2992 = vmul.f32 %v2987, 0.31622776
    %v2993 = vmul.f32 %v2990, 0.31622776
    %v2994 = vmul.f32 %v2992, %v2711
    %v2995 = vmul.f32 %v2993, %v2711
    %2996 = vadd.xlane.f32.xlu0 %v2994
    %v2997 = vpop.xlane.xlu0 %2996
    %2998 = vadd.xlane.f32.xlu0 %v2995
    %v2999 = vpop.xlane.xlu0 %2998
    %v3000 = vmul.f32 %v2997, 0.125
    %v3001 = vmul.f32 %v2999, 0.125
    %v3002 = vmul.f32 %v3000, %v2711
    %v3003 = vmul.f32 %v3001, %v2711
    %v3004 = vsub.f32 %v2992, %v3002
    %v3005 = vsub.f32 %v2993, %v3003
    %v3006 = vmul.f32 %v3004, %v3004
    %v3007 = vmul.f32 %v3005, %v3005
    %v3008 = vmul.f32 %v3006, %v2768
    %v3009 = vmul.f32 %v3007, %v2768
    %3010 = vadd.xlane.f32.xlu0 %v3008
    %v3011 = vpop.xlane.xlu0 %3010
    %3012 = vadd.xlane.f32.xlu0 %v3009
    %v3013 = vpop.xlane.xlu0 %3012
    %v3014 = vadd.f32 %v3011, 1e-05
    %v3015 = vadd.f32 %v3013, 1e-05
    %v3016 = vrsqrt.pop %v3014
    %v3017 = vmul.f32 %v3016, %v3014
    %v3018 = vmul.f32 %v3017, %v3016
    %v3019 = vmul.f32 0.5, %v3018
    %v3020 = vsub.f32 1.5, %v3019
    %v3021 = vmul.f32 %v3016, %v3020
    %vm3022 = vweird.f32 %v3014
    %vm3023 = vweird.f32 %v3016
    %vm3024 = vmor %vm3022, %vm3023
    %v3025 = vsel %vm3024, %v3016, %v3021
    %v3026 = vrsqrt.pop %v3015
    %v3027 = vmul.f32 %v3026, %v3015
    %v3028 = vmul.f32 %v3027, %v3026
    %v3029 = vmul.f32 0.5, %v3028
    %v3030 = vsub.f32 1.5, %v3029
    %v3031 = vmul.f32 %v3026, %v3030
    %vm3032 = vweird.f32 %v3015
    %vm3033 = vweird.f32 %v3026
    %vm3034 = vmor %vm3032, %vm3033
    %v3035 = vsel %vm3034, %v3026, %v3031
    %v3036 = vmul.f32 %v3004, %v3025
    %v3037 = vmul.f32 %v3005, %v3035
    %v3038 = vperm.slane %v109, 2
    %v3039 = vmul.f32 %v3036, %v3038
    %v3040 = vmul.f32 %v3037, %v3038
    %v3041 = vperm.slane %v109, 3
    %v3042 = vadd.f32 %v3039, %v3041
    %v3043 = vadd.f32 %v3040, %v3041
    %3044 = vst [vmem:[#allocation14] sm:$0xff] %v3042
    %3045 = vst [vmem:[#allocation14 + $0x8] sm:$0xff] %v3043
    // Predicated region
    $region74: #{tpu_custom_call.1} parent=1 // pred_check
      _
    $region75: #{tpu_custom_call.1} parent=1 // pred_check_branch
      %3047 = sbr.rel (0) target = $region77
    $region76: #{tpu_custom_call.1} parent=1 // pred_region
      %3049 = vsyncadd [#allocation4], 0
      %s3050 = sshll.u32 [#allocation10], 4
      %s3051 = int_to_ptr.vmem [resolvable:$true] %s3050
      %s3052 = sshll.u32 %s14, 4
      %s3053 = int_to_ptr.hbm [resolvable:$true] %s3052
      %3058 = dma.vmem_to_hbm [thread:$0]  %s3051, 1024, %s3053, [#allocation4], 128, 128, 8
    $region77: #{tpu_custom_call.1} parent=1 // pred_fallthru
      _
    // Predicated region
    $region78: #{tpu_custom_call.1} parent=1 // pred_check
      _
    $region79: #{tpu_custom_call.1} parent=1 // pred_check_branch
      %3060 = sbr.rel (0) target = $region81
    $region80: #{tpu_custom_call.1} parent=1 // pred_region
      %3062 = vsyncadd [#allocation12], 0
      %s3063 = sshll.u32 [#allocation11], 4
      %s3064 = int_to_ptr.vmem [resolvable:$true] %s3063
      %s3065 = sshll.u32 %s15, 4
      %s3066 = int_to_ptr.hbm [resolvable:$true] %s3065
      %3071 = dma.vmem_to_hbm [thread:$0]  %s3064, 1024, %s3066, [#allocation12], 128, 128, 8
    $region81: #{tpu_custom_call.1} parent=1 // pred_fallthru
      _
    // Predicated region
    $region82: #{tpu_custom_call.1} parent=1 // pred_check
      _
    $region83: #{tpu_custom_call.1} parent=1 // pred_check_branch
      %3073 = sbr.rel (0) target = $region85
    $region84: #{tpu_custom_call.1} parent=1 // pred_region
      %3075 = vsyncadd [#allocation12], 0
      %s3076 = sshll.u32 [#allocation13], 4
      %s3077 = int_to_ptr.vmem [resolvable:$true] %s3076
      %s3078 = sshll.u32 %s16, 4
      %s3079 = int_to_ptr.hbm [resolvable:$true] %s3078
      %3084 = dma.vmem_to_hbm [thread:$0]  %s3077, 1024, %s3079, [#allocation12], 128, 128, 8
    $region85: #{tpu_custom_call.1} parent=1 // pred_fallthru
      _
    // Predicated region
    $region86: #{tpu_custom_call.1} parent=1 // pred_check
      _
    $region87: #{tpu_custom_call.1} parent=1 // pred_check_branch
      %3086 = sbr.rel (0) target = $region89
    $region88: #{tpu_custom_call.1} parent=1 // pred_region
      %3088 = vsyncadd [#allocation15], 0
      %s3089 = sshll.u32 [#allocation14], 4
      %s3090 = int_to_ptr.vmem [resolvable:$true] %s3089
      %s3091 = sshll.u32 %s17, 4
      %s3092 = int_to_ptr.hbm [resolvable:$true] %s3091
      %3097 = dma.vmem_to_hbm [thread:$0]  %s3090, 256, %s3092, [#allocation15], 128, 128, 8
    $region89: #{tpu_custom_call.1} parent=1 // pred_fallthru
      _
    // Predicated region
    $region90: #{tpu_custom_call.1} parent=1 // pred_check
      _
    $region91: #{tpu_custom_call.1} parent=1 // pred_check_branch
      %3099 = sbr.rel (0) target = $region93
    $region92: #{tpu_custom_call.1} parent=1 // pred_region
      %3101 = dma.done [#allocation4], 1024
    $region93: #{tpu_custom_call.1} parent=1 // pred_fallthru
      _
    // Predicated region
    $region94: #{tpu_custom_call.1} parent=1 // pred_check
      _
    $region95: #{tpu_custom_call.1} parent=1 // pred_check_branch
      %3103 = sbr.rel (0) target = $region97
    $region96: #{tpu_custom_call.1} parent=1 // pred_region
      %3105 = dma.done [#allocation12], 1024
    $region97: #{tpu_custom_call.1} parent=1 // pred_fallthru
      _
    // Predicated region
    $region98: #{tpu_custom_call.1} parent=1 // pred_check
      _
    $region99: #{tpu_custom_call.1} parent=1 // pred_check_branch
      %3107 = sbr.rel (0) target = $region101
    $region100: #{tpu_custom_call.1} parent=1 // pred_region
      %3109 = dma.done [#allocation12], 1024
    $region101: #{tpu_custom_call.1} parent=1 // pred_fallthru
      _
    // Predicated region
    $region102: #{tpu_custom_call.1} parent=1 // pred_check
      _
    $region103: #{tpu_custom_call.1} parent=1 // pred_check_branch
      %3111 = sbr.rel (0) target = $region105
    $region104: #{tpu_custom_call.1} parent=1 // pred_region
      %3113 = dma.done [#allocation15], 256
    $region105: #{tpu_custom_call.1} parent=1 // pred_fallthru
      _
    %3114 = vsyncpa [#allocation3], 1
    %3115 = vsyncpa [#allocation6], 1
    %3116 = vsyncpa [#allocation9], 1
    %3117 = vsyncpa [#allocation4], 1
    %3118 = vsyncpa [#allocation12], 1
    %3119 = vsyncpa [#allocation15], 1

</llo_original>
